<compile_context>
chip_gen: v6e
topology: v6e:2x2x1
jax: 0.10.0
libtpu: 0.0.40
codegen_flags: <defaults>
</compile_context>

<pallas_src>
import functools

import jax
import jax.numpy as jnp
from jax.experimental import pallas as pl
from jax.experimental.pallas import tpu as pltpu


LANE = 128


# ----------------------------------------------------------------------------
# Helpers
# ----------------------------------------------------------------------------
def _round_up(x, m):
    return ((x + m - 1) // m) * m


def choose_tiles(num_nodes):
    """Pick (padded N, aggregation row tile tm, contraction tile tk).

    tk is always a multiple of tm, so n_pad % tk == 0 implies n_pad % tm == 0
    and the row-tile count n_pad/tm = (n_pad/tk)*(tk/tm) is always even
    (keeps both v7x TensorCores busy under the "parallel" axis).
    """
    if num_nodes <= 2048:
        tm, tk = 256, 512          # small graphs: still >= 2 row tiles
    elif num_nodes <= 8192:
        tm, tk = 512, 2048         # ~2 MiB bf16 A tiles
    else:
        tm, tk = 512, 4096         # ~4 MiB bf16 A tiles; safe on v7x 64 MiB VMEM
    n_pad = _round_up(max(num_nodes, tk), tk)
    return n_pad, tm, tk


# 48 MiB scoped VMEM: max safe on v7x (64 MiB physical), generous on v5e/v6e.
_CP_2D = pltpu.CompilerParams(
    dimension_semantics=("parallel", "arbitrary"),
    vmem_limit_bytes=48 << 20,
)
_CP_1D = pltpu.CompilerParams(
    dimension_semantics=("parallel",),
    vmem_limit_bytes=48 << 20,
)


# ----------------------------------------------------------------------------
# Pallas kernels
# ----------------------------------------------------------------------------
def xw_kernel(x_ref, w_ref, o_ref):
    """Per-row-tile feature transform: O = X @ W (bf16 out, f32 accumulate)."""
    o_ref[...] = jnp.dot(
        x_ref[...], w_ref[...], preferred_element_type=jnp.float32
    ).astype(o_ref.dtype)


def agg1_fused_kernel(a_ref, xw1_ref, b1_ref, w2_ref, o_ref, acc_ref, *, tk):
    """Fused layer-1 aggregation + relu + layer-2 feature transform.

    acc += A_tile @ XW1[k*tk : (k+1)*tk]   (XW1 is a resident VMEM block)
    at last k:  o = (relu(acc + b1)) @ W2
    """
    k = pl.program_id(1)

    @pl.when(k == 0)
    def _():
        acc_ref[...] = jnp.zeros_like(acc_ref)

    row = pl.multiple_of(k * tk, tk)
    acc_ref[...] += jnp.dot(
        a_ref[...], xw1_ref[pl.ds(row, tk), :],
        preferred_element_type=jnp.float32,
    )

    @pl.when(k == pl.num_programs(1) - 1)
    def _():
        h = jnp.maximum(acc_ref[...] + b1_ref[...], 0.0).astype(jnp.bfloat16)
        o_ref[...] = jnp.dot(
            h, w2_ref[...], preferred_element_type=jnp.float32
        ).astype(o_ref.dtype)


def agg2_vs_kernel(a_ref, xw2_ref, b2_ref, temp_ref, vsb_ref, o_ref, acc_ref, *, tk):
    """Fused layer-2 aggregation + vector-scaling epilogue.

    acc += A_tile @ XW2[k*tk : (k+1)*tk]   (XW2 resident in VMEM)
    at last k:  out = (acc + b2) * temperature + vs_bias
    """
    k = pl.program_id(1)

    @pl.when(k == 0)
    def _():
        acc_ref[...] = jnp.zeros_like(acc_ref)

    row = pl.multiple_of(k * tk, tk)
    acc_ref[...] += jnp.dot(
        a_ref[...], xw2_ref[pl.ds(row, tk), :],
        preferred_element_type=jnp.float32,
    )

    @pl.when(k == pl.num_programs(1) - 1)
    def _():
        logits = acc_ref[...] + b2_ref[...]
        o_ref[...] = logits * temp_ref[...] + vsb_ref[...]


# ----------------------------------------------------------------------------
# pallas_call wrappers
# ----------------------------------------------------------------------------
def feature_transform(x, w, *, tm):
    """XW = X @ W, tiled over (fat) row tiles. x: [N, Fin] bf16, w: [Fin, Fout] bf16."""
    n, fin = x.shape
    fout = w.shape[1]
    return pl.pallas_call(
        xw_kernel,
        out_shape=jax.ShapeDtypeStruct((n, fout), jnp.bfloat16),
        grid=(n // tm,),
        in_specs=[
            pl.BlockSpec((tm, fin), lambda i: (i, 0)),
            pl.BlockSpec((fin, fout), lambda i: (0, 0)),
        ],
        out_specs=pl.BlockSpec((tm, fout), lambda i: (i, 0)),
        compiler_params=_CP_1D,
    )(x, w)


def gcn_layer1_fused(a_hat, xw1, b1, w2, *, tm, tk):
    """XW2 = relu(A_hat @ XW1 + b1) @ W2, grid over (row tiles, contraction tiles)."""
    n = a_hat.shape[0]
    h_pad = xw1.shape[1]
    c_pad = w2.shape[1]
    kernel = functools.partial(agg1_fused_kernel, tk=tk)
    return pl.pallas_call(
        kernel,
        out_shape=jax.ShapeDtypeStruct((n, c_pad), jnp.bfloat16),
        grid=(n // tm, n // tk),
        in_specs=[
            pl.BlockSpec((tm, tk), lambda i, k: (i, k)),       # streamed A_hat
            pl.BlockSpec((n, h_pad), lambda i, k: (0, 0)),     # resident XW1
            pl.BlockSpec((1, h_pad), lambda i, k: (0, 0)),     # b1
            pl.BlockSpec((h_pad, c_pad), lambda i, k: (0, 0)), # W2 (resident)
        ],
        out_specs=pl.BlockSpec((tm, c_pad), lambda i, k: (i, 0)),
        scratch_shapes=[pltpu.VMEM((tm, h_pad), jnp.float32)],
        compiler_params=_CP_2D,
    )(a_hat, xw1, b1.reshape(1, h_pad), w2)


def gcn_layer2_vs(a_hat, xw2, b2, temperature, vs_bias, *, tm, tk):
    """out = (A_hat @ XW2 + b2) * temperature + vs_bias (lane-dense padded classes)."""
    n = a_hat.shape[0]
    c_pad = xw2.shape[1]
    kernel = functools.partial(agg2_vs_kernel, tk=tk)
    return pl.pallas_call(
        kernel,
        out_shape=jax.ShapeDtypeStruct((n, c_pad), jnp.float32),
        grid=(n // tm, n // tk),
        in_specs=[
            pl.BlockSpec((tm, tk), lambda i, k: (i, k)),       # streamed A_hat
            pl.BlockSpec((n, c_pad), lambda i, k: (0, 0)),     # resident XW2
            pl.BlockSpec((1, c_pad), lambda i, k: (0, 0)),     # b2
            pl.BlockSpec((1, c_pad), lambda i, k: (0, 0)),     # temperature
            pl.BlockSpec((1, c_pad), lambda i, k: (0, 0)),     # vs bias
        ],
        out_specs=pl.BlockSpec((tm, c_pad), lambda i, k: (i, 0)),
        scratch_shapes=[pltpu.VMEM((tm, c_pad), jnp.float32)],
        compiler_params=_CP_2D,
    )(
        a_hat,
        xw2,
        b2.reshape(1, c_pad),
        temperature.reshape(1, c_pad),
        vs_bias.reshape(1, c_pad),
    )


# ----------------------------------------------------------------------------
# Graph / parameter setup (plain-JAX glue; A_hat built & padded once)
# ----------------------------------------------------------------------------
def normalized_adjacency(edge_index, num_nodes):
    """A_hat = D^{-1/2} (A + I) D^{-1/2}  (standard GCNConv normalization)."""
    src, dst = edge_index[0], edge_index[1]
    a = jnp.zeros((num_nodes, num_nodes), jnp.float32).at[src, dst].set(1.0)
    a = a + jnp.eye(num_nodes, dtype=jnp.float32)
    deg = a.sum(axis=1)
    d_inv_sqrt = jnp.where(deg > 0, 1.0 / jnp.sqrt(deg), 0.0)
    return d_inv_sqrt[:, None] * a * d_inv_sqrt[None, :]


def prepare_graph(x, edge_index, num_nodes, n_pad):
    """Build A_hat once, pad to tile multiples, cast the streamed arrays to bf16."""
    # TODO(synk): build A_hat directly in bf16 / block-CSR for very large graphs.
    a_hat = normalized_adjacency(edge_index, num_nodes).astype(jnp.bfloat16)
    pad_n = n_pad - num_nodes
    a_hat = jnp.pad(a_hat, ((0, pad_n), (0, pad_n)))
    x_pad = jnp.pad(x, ((0, pad_n), (0, 0))).astype(jnp.bfloat16)
    return a_hat, x_pad


def glorot(key, fan_in, fan_out):
    lim = jnp.sqrt(6.0 / (fan_in + fan_out))
    return jax.random.uniform(key, (fan_in, fan_out), jnp.float32, -lim, lim)


def init_backbone(key, in_feat, hidden, num_class):
    k1, k2 = jax.random.split(key)
    return {
        "w1": glorot(k1, in_feat, hidden),
        "b1": jnp.zeros((hidden,), jnp.float32),
        "w2": glorot(k2, hidden, num_class),
        "b2": jnp.zeros((num_class,), jnp.float32),
    }


def prepare_params(params, temperature, vs_bias, hidden_pad, class_pad):
    """Pad hidden/class dims to 128 lanes (padded cols stay exactly zero)."""
    hidden = params["w1"].shape[1]
    num_class = params["w2"].shape[1]
    ph = hidden_pad - hidden
    pc = class_pad - num_class
    return {
        "w1": jnp.pad(params["w1"], ((0, 0), (0, ph))).astype(jnp.bfloat16),
        "b1": jnp.pad(params["b1"], (0, ph)).astype(jnp.float32),
        "w2": jnp.pad(params["w2"], ((0, ph), (0, pc))).astype(jnp.bfloat16),
        "b2": jnp.pad(params["b2"], (0, pc)).astype(jnp.float32),
        "temp": jnp.pad(temperature, (0, pc)).astype(jnp.float32),
        "vsb": jnp.pad(vs_bias, (0, pc)).astype(jnp.float32),
    }


# ----------------------------------------------------------------------------
# VS forward:  out = backbone_GCN(x, A_hat) * temperature + bias
# ----------------------------------------------------------------------------
@functools.partial(
    jax.jit, static_argnames=("tm", "tk", "tm_ft", "num_nodes", "num_class")
)
def vs_forward(p, a_hat, x_pad, *, tm, tk, tm_ft, num_nodes, num_class):
    # backbone layer 1 feature transform: XW1 = X @ W1 (few fat row tiles)
    xw1 = feature_transform(x_pad, p["w1"], tm=tm_ft)

    # fused layer-1 aggregation + relu + layer-2 transform:
    #   XW2 = relu(A_hat @ XW1 + b1) @ W2
    xw2 = gcn_layer1_fused(a_hat, xw1, p["b1"], p["w2"], tm=tm, tk=tk)

    # fused layer-2 aggregation + VS epilogue:
    #   out = (A_hat @ XW2 + b2) * temperature + vs_bias
    out = gcn_layer2_vs(a_hat, xw2, p["b2"], p["temp"], p["vsb"], tm=tm, tk=tk)
    return out[:num_nodes, :num_class]


# ----------------------------------------------------------------------------
if __name__ == "__main__":
    NUM_NODES = 512
    IN_FEAT = 64
    HIDDEN = 64
    NUM_CLASS = 8

    key = jax.random.PRNGKey(0)
    k_x, k_p = jax.random.split(key)

    # node features
    x = jax.random.normal(k_x, (NUM_NODES, IN_FEAT), jnp.float32)

    # ring graph, edges in both directions: edge_index [2, 2*N]
    src = jnp.arange(NUM_NODES, dtype=jnp.int32)
    dst = (src + 1) % NUM_NODES
    edge_index = jnp.concatenate(
        [jnp.stack([src, dst], axis=0), jnp.stack([dst, src], axis=0)], axis=1
    )

    # backbone GCN parameters + VS calibrator parameters (torch.ones init)
    params = init_backbone(k_p, IN_FEAT, HIDDEN, NUM_CLASS)
    temperature = jnp.ones((NUM_CLASS,), jnp.float32)  # nn.Parameter(torch.ones(C))
    vs_bias = jnp.ones((NUM_CLASS,), jnp.float32)      # nn.Parameter(torch.ones(C))

    # static graph: tiles, padding, bf16 casts — all done once outside jit
    n_pad, tm, tk = choose_tiles(NUM_NODES)
    tm_ft = min(n_pad, 2048)
    hidden_pad = _round_up(HIDDEN, LANE)
    class_pad = _round_up(NUM_CLASS, LANE)

    a_hat, x_pad = prepare_graph(x, edge_index, NUM_NODES, n_pad)
    p = prepare_params(params, temperature, vs_bias, hidden_pad, class_pad)

    out = vs_forward(
        p, a_hat, x_pad,
        tm=tm, tk=tk, tm_ft=tm_ft, num_nodes=NUM_NODES, num_class=NUM_CLASS,
    )
    out = jax.block_until_ready(out)
    assert out.shape == (NUM_NODES, NUM_CLASS)
    assert bool(jnp.all(jnp.isfinite(out)))

    # pure-JAX f32 reference (bf16 streams in the kernel -> loose tolerance)
    a_ref = normalized_adjacency(edge_index, NUM_NODES)
    h_ref = jnp.maximum(a_ref @ (x @ params["w1"]) + params["b1"], 0.0)
    logits_ref = a_ref @ (h_ref @ params["w2"]) + params["b2"]
    ref = logits_ref * temperature + vs_bias
    max_err = float(jnp.max(jnp.abs(out - ref)))
    assert max_err < 2e-1, f"max_err={max_err}"

    print("KERNEL_OK")
</pallas_src>

<mosaic_0001>
module attributes {stable_mosaic.version = 11 : i64} {
  func.func @agg2_vs_kernel(%arg0: i32, %arg1: i32, %arg2: memref<256x512xbf16, #tpu.memory_space<vmem>>, %arg3: memref<512x128xbf16, #tpu.memory_space<vmem>>, %arg4: memref<1x128xf32, #tpu.memory_space<vmem>>, %arg5: memref<1x128xf32, #tpu.memory_space<vmem>>, %arg6: memref<1x128xf32, #tpu.memory_space<vmem>>, %arg7: memref<256x128xf32, #tpu.memory_space<vmem>>, %arg8: memref<256x128xf32, #tpu.memory_space<vmem>>) attributes {dimension_semantics = [#tpu.dimension_semantics<parallel>, #tpu.dimension_semantics<arbitrary>], iteration_bounds = array<i64: 2, 1>, scalar_prefetch = 0 : i64, scratch_operands = 1 : i64, tpu.core_type = #tpu.core_type<tc>, window_params = [{transform_indices = @transform_0, window_bounds = array<i64: 256, 512>}, {pipeline_mode = #tpu.pipeline_mode<synchronous>, transform_indices = @transform_1, window_bounds = array<i64: 512, 128>}, {pipeline_mode = #tpu.pipeline_mode<synchronous>, transform_indices = @transform_2, window_bounds = array<i64: 1, 128>}, {pipeline_mode = #tpu.pipeline_mode<synchronous>, transform_indices = @transform_3, window_bounds = array<i64: 1, 128>}, {pipeline_mode = #tpu.pipeline_mode<synchronous>, transform_indices = @transform_4, window_bounds = array<i64: 1, 128>}, {transform_indices = @transform_5, window_bounds = array<i64: 256, 128>}]} {
    %c0_i32 = arith.constant 0 : i32
    %0 = arith.cmpi eq, %arg1, %c0_i32 : i32
    %1 = arith.extui %0 : i1 to i32
    %c0_i32_0 = arith.constant 0 : i32
    %2 = arith.cmpi ne, %1, %c0_i32_0 : i32
    scf.if %2 {
      %cst_9 = arith.constant 0.000000e+00 : f32
      %15 = vector.broadcast %cst_9 : f32 to vector<256x128xf32>
      %c0_10 = arith.constant 0 : index
      %c0_11 = arith.constant 0 : index
      %16 = vector.load %arg8[%c0_10, %c0_11] : memref<256x128xf32, #tpu.memory_space<vmem>>, vector<256x128xf32>
      tpu.vector_store %arg8[%c0_10, %c0_11], %15 {strides = array<i32>} : memref<256x128xf32, #tpu.memory_space<vmem>>, vector<256x128xf32>,
    } else {
    }
    %c512_i32 = arith.constant 512 : i32
    %3 = arith.muli %arg1, %c512_i32 : i32
    %4 = tpu.assume_multiple %3, 512 : i32
    %c0 = arith.constant 0 : index
    %c0_1 = arith.constant 0 : index
    %5 = vector.load %arg8[%c0, %c0_1] : memref<256x128xf32, #tpu.memory_space<vmem>>, vector<256x128xf32>
    %c0_2 = arith.constant 0 : index
    %c0_3 = arith.constant 0 : index
    %6 = vector.load %arg2[%c0_2, %c0_3] : memref<256x512xbf16, #tpu.memory_space<vmem>>, vector<256x512xbf16>
    %7 = arith.index_cast %4 : i32 to index
    %c0_4 = arith.constant 0 : index
    %8 = vector.load %arg3[%7, %c0_4] : memref<512x128xbf16, #tpu.memory_space<vmem>>, vector<512x128xbf16>
    %cst = arith.constant dense<0.000000e+00> : vector<256x128xf32>
    %9 = tpu.matmul %6, %8, %cst {dimension_numbers = #tpu.dot_dimension_numbers<[1], [0], [0], [1], [0, 0, 1, 1], [], []>} : vector<256x512xbf16>, vector<512x128xbf16>, vector<256x128xf32> -> vector<256x128xf32>
    %10 = arith.addf %5, %9 : vector<256x128xf32>
    %c0_5 = arith.constant 0 : index
    %c0_6 = arith.constant 0 : index
    %11 = vector.load %arg8[%c0_5, %c0_6] : memref<256x128xf32, #tpu.memory_space<vmem>>, vector<256x128xf32>
    tpu.vector_store %arg8[%c0_5, %c0_6], %10 {strides = array<i32>} : memref<256x128xf32, #tpu.memory_space<vmem>>, vector<256x128xf32>,
    %c0_i32_7 = arith.constant 0 : i32
    %12 = arith.cmpi eq, %arg1, %c0_i32_7 : i32
    %13 = arith.extui %12 : i1 to i32
    %c0_i32_8 = arith.constant 0 : i32
    %14 = arith.cmpi ne, %13, %c0_i32_8 : i32
    scf.if %14 {
      %c0_9 = arith.constant 0 : index
      %c0_10 = arith.constant 0 : index
      %15 = vector.load %arg8[%c0_9, %c0_10] : memref<256x128xf32, #tpu.memory_space<vmem>>, vector<256x128xf32>
      %c0_11 = arith.constant 0 : index
      %c0_12 = arith.constant 0 : index
      %16 = vector.load %arg4[%c0_11, %c0_12] : memref<1x128xf32, #tpu.memory_space<vmem>>, vector<1x128xf32>
      %17 = vector.broadcast %16 : vector<1x128xf32> to vector<256x128xf32>
      %18 = arith.addf %15, %17 : vector<256x128xf32>
      %c0_13 = arith.constant 0 : index
      %c0_14 = arith.constant 0 : index
      %19 = vector.load %arg5[%c0_13, %c0_14] : memref<1x128xf32, #tpu.memory_space<vmem>>, vector<1x128xf32>
      %20 = vector.broadcast %19 : vector<1x128xf32> to vector<256x128xf32>
      %21 = arith.mulf %18, %20 : vector<256x128xf32>
      %c0_15 = arith.constant 0 : index
      %c0_16 = arith.constant 0 : index
      %22 = vector.load %arg6[%c0_15, %c0_16] : memref<1x128xf32, #tpu.memory_space<vmem>>, vector<1x128xf32>
      %23 = vector.broadcast %22 : vector<1x128xf32> to vector<256x128xf32>
      %24 = arith.addf %21, %23 : vector<256x128xf32>
      %c0_17 = arith.constant 0 : index
      %c0_18 = arith.constant 0 : index
      %25 = vector.load %arg7[%c0_17, %c0_18] : memref<256x128xf32, #tpu.memory_space<vmem>>, vector<256x128xf32>
      tpu.vector_store %arg7[%c0_17, %c0_18], %24 {strides = array<i32>} : memref<256x128xf32, #tpu.memory_space<vmem>>, vector<256x128xf32>,
    } else {
    }
    return
  }
  func.func @transform_0(%arg0: i32, %arg1: i32) -> (i32, i32) {
    %c0_i32 = arith.constant 0 : i32
    return %arg0, %arg1 : i32, i32
  }
  func.func @transform_1(%arg0: i32, %arg1: i32) -> (i32, i32) {
    %c0_i32 = arith.constant 0 : i32
    %c0_i32_0 = arith.constant 0 : i32
    %c0_i32_1 = arith.constant 0 : i32
    return %c0_i32, %c0_i32_0 : i32, i32
  }
  func.func @transform_2(%arg0: i32, %arg1: i32) -> (i32, i32) {
    %c0_i32 = arith.constant 0 : i32
    %c0_i32_0 = arith.constant 0 : i32
    %c0_i32_1 = arith.constant 0 : i32
    return %c0_i32, %c0_i32_0 : i32, i32
  }
  func.func @transform_3(%arg0: i32, %arg1: i32) -> (i32, i32) {
    %c0_i32 = arith.constant 0 : i32
    %c0_i32_0 = arith.constant 0 : i32
    %c0_i32_1 = arith.constant 0 : i32
    return %c0_i32, %c0_i32_0 : i32, i32
  }
  func.func @transform_4(%arg0: i32, %arg1: i32) -> (i32, i32) {
    %c0_i32 = arith.constant 0 : i32
    %c0_i32_0 = arith.constant 0 : i32
    %c0_i32_1 = arith.constant 0 : i32
    return %c0_i32, %c0_i32_0 : i32, i32
  }
  func.func @transform_5(%arg0: i32, %arg1: i32) -> (i32, i32) {
    %c0_i32 = arith.constant 0 : i32
    %c0_i32_0 = arith.constant 0 : i32
    return %arg0, %c0_i32 : i32, i32
  }
}

module attributes {stable_mosaic.version = 11 : i64} {
  func.func @xw_kernel(%arg0: i32, %arg1: memref<512x64xbf16, #tpu.memory_space<vmem>>, %arg2: memref<64x128xbf16, #tpu.memory_space<vmem>>, %arg3: memref<512x128xbf16, #tpu.memory_space<vmem>>) attributes {dimension_semantics = [#tpu.dimension_semantics<parallel>], iteration_bounds = array<i64: 1>, scalar_prefetch = 0 : i64, scratch_operands = 0 : i64, tpu.core_type = #tpu.core_type<tc>, window_params = [{transform_indices = @transform_0, window_bounds = array<i64: 512, 64>}, {pipeline_mode = #tpu.pipeline_mode<synchronous>, transform_indices = @transform_1, window_bounds = array<i64: 64, 128>}, {transform_indices = @transform_2, window_bounds = array<i64: 512, 128>}]} {
    %c0 = arith.constant 0 : index
    %c0_0 = arith.constant 0 : index
    %0 = vector.load %arg1[%c0, %c0_0] : memref<512x64xbf16, #tpu.memory_space<vmem>>, vector<512x64xbf16>
    %c0_1 = arith.constant 0 : index
    %c0_2 = arith.constant 0 : index
    %1 = vector.load %arg2[%c0_1, %c0_2] : memref<64x128xbf16, #tpu.memory_space<vmem>>, vector<64x128xbf16>
    %cst = arith.constant dense<0.000000e+00> : vector<512x128xf32>
    %2 = tpu.matmul %0, %1, %cst {dimension_numbers = #tpu.dot_dimension_numbers<[1], [0], [0], [1], [0, 0, 1, 1], [], []>} : vector<512x64xbf16>, vector<64x128xbf16>, vector<512x128xf32> -> vector<512x128xf32>
    %3 = arith.truncf %2 : vector<512x128xf32> to vector<512x128xbf16>
    %c0_3 = arith.constant 0 : index
    %c0_4 = arith.constant 0 : index
    %4 = vector.load %arg3[%c0_3, %c0_4] : memref<512x128xbf16, #tpu.memory_space<vmem>>, vector<512x128xbf16>
    tpu.vector_store %arg3[%c0_3, %c0_4], %3 {strides = array<i32>} : memref<512x128xbf16, #tpu.memory_space<vmem>>, vector<512x128xbf16>,
    return
  }
  func.func @transform_0(%arg0: i32) -> (i32, i32) {
    %c0_i32 = arith.constant 0 : i32
    %c0_i32_0 = arith.constant 0 : i32
    return %arg0, %c0_i32 : i32, i32
  }
  func.func @transform_1(%arg0: i32) -> (i32, i32) {
    %c0_i32 = arith.constant 0 : i32
    %c0_i32_0 = arith.constant 0 : i32
    %c0_i32_1 = arith.constant 0 : i32
    return %c0_i32, %c0_i32_0 : i32, i32
  }
  func.func @transform_2(%arg0: i32) -> (i32, i32) {
    %c0_i32 = arith.constant 0 : i32
    %c0_i32_0 = arith.constant 0 : i32
    return %arg0, %c0_i32 : i32, i32
  }
}

module attributes {stable_mosaic.version = 11 : i64} {
  func.func @agg1_fused_kernel(%arg0: i32, %arg1: i32, %arg2: memref<256x512xbf16, #tpu.memory_space<vmem>>, %arg3: memref<512x128xbf16, #tpu.memory_space<vmem>>, %arg4: memref<1x128xf32, #tpu.memory_space<vmem>>, %arg5: memref<128x128xbf16, #tpu.memory_space<vmem>>, %arg6: memref<256x128xbf16, #tpu.memory_space<vmem>>, %arg7: memref<256x128xf32, #tpu.memory_space<vmem>>) attributes {dimension_semantics = [#tpu.dimension_semantics<parallel>, #tpu.dimension_semantics<arbitrary>], iteration_bounds = array<i64: 2, 1>, scalar_prefetch = 0 : i64, scratch_operands = 1 : i64, tpu.core_type = #tpu.core_type<tc>, window_params = [{transform_indices = @transform_0, window_bounds = array<i64: 256, 512>}, {pipeline_mode = #tpu.pipeline_mode<synchronous>, transform_indices = @transform_1, window_bounds = array<i64: 512, 128>}, {pipeline_mode = #tpu.pipeline_mode<synchronous>, transform_indices = @transform_2, window_bounds = array<i64: 1, 128>}, {pipeline_mode = #tpu.pipeline_mode<synchronous>, transform_indices = @transform_3, window_bounds = array<i64: 128, 128>}, {transform_indices = @transform_4, window_bounds = array<i64: 256, 128>}]} {
    %c0_i32 = arith.constant 0 : i32
    %0 = arith.cmpi eq, %arg1, %c0_i32 : i32
    %1 = arith.extui %0 : i1 to i32
    %c0_i32_0 = arith.constant 0 : i32
    %2 = arith.cmpi ne, %1, %c0_i32_0 : i32
    scf.if %2 {
      %cst_9 = arith.constant 0.000000e+00 : f32
      %15 = vector.broadcast %cst_9 : f32 to vector<256x128xf32>
      %c0_10 = arith.constant 0 : index
      %c0_11 = arith.constant 0 : index
      %16 = vector.load %arg7[%c0_10, %c0_11] : memref<256x128xf32, #tpu.memory_space<vmem>>, vector<256x128xf32>
      tpu.vector_store %arg7[%c0_10, %c0_11], %15 {strides = array<i32>} : memref<256x128xf32, #tpu.memory_space<vmem>>, vector<256x128xf32>,
    } else {
    }
    %c512_i32 = arith.constant 512 : i32
    %3 = arith.muli %arg1, %c512_i32 : i32
    %4 = tpu.assume_multiple %3, 512 : i32
    %c0 = arith.constant 0 : index
    %c0_1 = arith.constant 0 : index
    %5 = vector.load %arg7[%c0, %c0_1] : memref<256x128xf32, #tpu.memory_space<vmem>>, vector<256x128xf32>
    %c0_2 = arith.constant 0 : index
    %c0_3 = arith.constant 0 : index
    %6 = vector.load %arg2[%c0_2, %c0_3] : memref<256x512xbf16, #tpu.memory_space<vmem>>, vector<256x512xbf16>
    %7 = arith.index_cast %4 : i32 to index
    %c0_4 = arith.constant 0 : index
    %8 = vector.load %arg3[%7, %c0_4] : memref<512x128xbf16, #tpu.memory_space<vmem>>, vector<512x128xbf16>
    %cst = arith.constant dense<0.000000e+00> : vector<256x128xf32>
    %9 = tpu.matmul %6, %8, %cst {dimension_numbers = #tpu.dot_dimension_numbers<[1], [0], [0], [1], [0, 0, 1, 1], [], []>} : vector<256x512xbf16>, vector<512x128xbf16>, vector<256x128xf32> -> vector<256x128xf32>
    %10 = arith.addf %5, %9 : vector<256x128xf32>
    %c0_5 = arith.constant 0 : index
    %c0_6 = arith.constant 0 : index
    %11 = vector.load %arg7[%c0_5, %c0_6] : memref<256x128xf32, #tpu.memory_space<vmem>>, vector<256x128xf32>
    tpu.vector_store %arg7[%c0_5, %c0_6], %10 {strides = array<i32>} : memref<256x128xf32, #tpu.memory_space<vmem>>, vector<256x128xf32>,
    %c0_i32_7 = arith.constant 0 : i32
    %12 = arith.cmpi eq, %arg1, %c0_i32_7 : i32
    %13 = arith.extui %12 : i1 to i32
    %c0_i32_8 = arith.constant 0 : i32
    %14 = arith.cmpi ne, %13, %c0_i32_8 : i32
    scf.if %14 {
      %c0_9 = arith.constant 0 : index
      %c0_10 = arith.constant 0 : index
      %15 = vector.load %arg7[%c0_9, %c0_10] : memref<256x128xf32, #tpu.memory_space<vmem>>, vector<256x128xf32>
      %c0_11 = arith.constant 0 : index
      %c0_12 = arith.constant 0 : index
      %16 = vector.load %arg4[%c0_11, %c0_12] : memref<1x128xf32, #tpu.memory_space<vmem>>, vector<1x128xf32>
      %17 = vector.broadcast %16 : vector<1x128xf32> to vector<256x128xf32>
      %18 = arith.addf %15, %17 : vector<256x128xf32>
      %cst_13 = arith.constant 0.000000e+00 : f32
      %19 = vector.broadcast %cst_13 : f32 to vector<256x128xf32>
      %20 = arith.maximumf %18, %19 : vector<256x128xf32>
      %21 = arith.truncf %20 : vector<256x128xf32> to vector<256x128xbf16>
      %c0_14 = arith.constant 0 : index
      %c0_15 = arith.constant 0 : index
      %22 = vector.load %arg5[%c0_14, %c0_15] : memref<128x128xbf16, #tpu.memory_space<vmem>>, vector<128x128xbf16>
      %cst_16 = arith.constant dense<0.000000e+00> : vector<256x128xf32>
      %23 = tpu.matmul %21, %22, %cst_16 {dimension_numbers = #tpu.dot_dimension_numbers<[1], [0], [0], [1], [0, 0, 1, 1], [], []>} : vector<256x128xbf16>, vector<128x128xbf16>, vector<256x128xf32> -> vector<256x128xf32>
      %24 = arith.truncf %23 : vector<256x128xf32> to vector<256x128xbf16>
      %c0_17 = arith.constant 0 : index
      %c0_18 = arith.constant 0 : index
      %25 = vector.load %arg6[%c0_17, %c0_18] : memref<256x128xbf16, #tpu.memory_space<vmem>>, vector<256x128xbf16>
      tpu.vector_store %arg6[%c0_17, %c0_18], %24 {strides = array<i32>} : memref<256x128xbf16, #tpu.memory_space<vmem>>, vector<256x128xbf16>,
    } else {
    }
    return
  }
  func.func @transform_0(%arg0: i32, %arg1: i32) -> (i32, i32) {
    %c0_i32 = arith.constant 0 : i32
    return %arg0, %arg1 : i32, i32
  }
  func.func @transform_1(%arg0: i32, %arg1: i32) -> (i32, i32) {
    %c0_i32 = arith.constant 0 : i32
    %c0_i32_0 = arith.constant 0 : i32
    %c0_i32_1 = arith.constant 0 : i32
    return %c0_i32, %c0_i32_0 : i32, i32
  }
  func.func @transform_2(%arg0: i32, %arg1: i32) -> (i32, i32) {
    %c0_i32 = arith.constant 0 : i32
    %c0_i32_0 = arith.constant 0 : i32
    %c0_i32_1 = arith.constant 0 : i32
    return %c0_i32, %c0_i32_0 : i32, i32
  }
  func.func @transform_3(%arg0: i32, %arg1: i32) -> (i32, i32) {
    %c0_i32 = arith.constant 0 : i32
    %c0_i32_0 = arith.constant 0 : i32
    %c0_i32_1 = arith.constant 0 : i32
    return %c0_i32, %c0_i32_0 : i32, i32
  }
  func.func @transform_4(%arg0: i32, %arg1: i32) -> (i32, i32) {
    %c0_i32 = arith.constant 0 : i32
    %c0_i32_0 = arith.constant 0 : i32
    return %arg0, %c0_i32 : i32, i32
  }
}

</mosaic_0001>

<llo_original>
// kernel: vs_forward.3
$region0: #{vs_forward.3}
  #allocation0 [shape = 'u32[]', space=smem, size = 0x4, offset = 0x4, fixed_abs, tag = 'smem constant byte address 0x4 - core index']
  #allocation1 [shape = 'u32[144,128]{1,0:T(1,128)}', space=vmem, size = 0x12000, scoped, tag = 'internal scratch']
  %s0 = inlined_call_operand.vmem [shape: bf16[512,64], index: 0, kind: input, shape index: {}]
  %s1 = inlined_call_operand.vmem [shape: bf16[64,128], index: 1, kind: input, shape index: {}]
  %s2 = inlined_call_operand.vmem [shape: bf16[512,128], index: 2, kind: output, shape index: {}]
  %s3 = sld [smem:[#allocation0]]
  $region18: #{vs_forward.3} parent=0
    _
  %s5 = ssub.s32 1, %s3
  %s6 = scalar_select 0, %s5, %s3
  // Predicated region
  $region2: #{vs_forward.3} parent=0 // pred_check
    _
  $region3: #{vs_forward.3} parent=0 // pred_check_branch
    %8 = sbr.rel (0) target = $region5
  $region4: #{vs_forward.3} parent=0 // pred_region
    _
  $region5: #{vs_forward.3} parent=0 // pred_fallthru
    _
  // Predicated region
  $region6: #{vs_forward.3} parent=0 // pred_check
    _
  $region7: #{vs_forward.3} parent=0 // pred_check_branch
    %10 = sbr.rel (0) target = $region9
  $region8: #{vs_forward.3} parent=0 // pred_region
    _
  $region9: #{vs_forward.3} parent=0 // pred_fallthru
    _
  %v12 = vld [vmem:[%s0] sm:$0xf]
  %v13 = vld [vmem:[%s0 + $0x4] sm:$0xf]
  %v14 = vld [vmem:[%s0 + $0x8] sm:$0xf]
  %v15 = vld [vmem:[%s0 + $0xc] sm:$0xf]
  %v16 = vld [vmem:[%s0 + $0x10] sm:$0xf]
  %v17 = vld [vmem:[%s0 + $0x14] sm:$0xf]
  %v18 = vld [vmem:[%s0 + $0x18] sm:$0xf]
  %v19 = vld [vmem:[%s0 + $0x1c] sm:$0xf]
  %v20 = vld [vmem:[%s0 + $0x20] sm:$0xf]
  %v21 = vld [vmem:[%s0 + $0x24] sm:$0xf]
  %v22 = vld [vmem:[%s0 + $0x28] sm:$0xf]
  %v23 = vld [vmem:[%s0 + $0x2c] sm:$0xf]
  %v24 = vld [vmem:[%s0 + $0x30] sm:$0xf]
  %v25 = vld [vmem:[%s0 + $0x34] sm:$0xf]
  %v26 = vld [vmem:[%s0 + $0x38] sm:$0xf]
  %v27 = vld [vmem:[%s0 + $0x3c] sm:$0xf]
  %v28 = vld [vmem:[%s0 + $0x40] sm:$0xf]
  %v29 = vld [vmem:[%s0 + $0x44] sm:$0xf]
  %v30 = vld [vmem:[%s0 + $0x48] sm:$0xf]
  %v31 = vld [vmem:[%s0 + $0x4c] sm:$0xf]
  %v32 = vld [vmem:[%s0 + $0x50] sm:$0xf]
  %v33 = vld [vmem:[%s0 + $0x54] sm:$0xf]
  %v34 = vld [vmem:[%s0 + $0x58] sm:$0xf]
  %v35 = vld [vmem:[%s0 + $0x5c] sm:$0xf]
  %v36 = vld [vmem:[%s0 + $0x60] sm:$0xf]
  %v37 = vld [vmem:[%s0 + $0x64] sm:$0xf]
  %v38 = vld [vmem:[%s0 + $0x68] sm:$0xf]
  %v39 = vld [vmem:[%s0 + $0x6c] sm:$0xf]
  %v40 = vld [vmem:[%s0 + $0x70] sm:$0xf]
  %v41 = vld [vmem:[%s0 + $0x74] sm:$0xf]
  %v42 = vld [vmem:[%s0 + $0x78] sm:$0xf]
  %v43 = vld [vmem:[%s0 + $0x7c] sm:$0xf]
  %v44 = vld [vmem:[%s0 + $0x80] sm:$0xf]
  %v45 = vld [vmem:[%s0 + $0x84] sm:$0xf]
  %v46 = vld [vmem:[%s0 + $0x88] sm:$0xf]
  %v47 = vld [vmem:[%s0 + $0x8c] sm:$0xf]
  %v48 = vld [vmem:[%s0 + $0x90] sm:$0xf]
  %v49 = vld [vmem:[%s0 + $0x94] sm:$0xf]
  %v50 = vld [vmem:[%s0 + $0x98] sm:$0xf]
  %v51 = vld [vmem:[%s0 + $0x9c] sm:$0xf]
  %v52 = vld [vmem:[%s0 + $0xa0] sm:$0xf]
  %v53 = vld [vmem:[%s0 + $0xa4] sm:$0xf]
  %v54 = vld [vmem:[%s0 + $0xa8] sm:$0xf]
  %v55 = vld [vmem:[%s0 + $0xac] sm:$0xf]
  %v56 = vld [vmem:[%s0 + $0xb0] sm:$0xf]
  %v57 = vld [vmem:[%s0 + $0xb4] sm:$0xf]
  %v58 = vld [vmem:[%s0 + $0xb8] sm:$0xf]
  %v59 = vld [vmem:[%s0 + $0xbc] sm:$0xf]
  %v60 = vld [vmem:[%s0 + $0xc0] sm:$0xf]
  %v61 = vld [vmem:[%s0 + $0xc4] sm:$0xf]
  %v62 = vld [vmem:[%s0 + $0xc8] sm:$0xf]
  %v63 = vld [vmem:[%s0 + $0xcc] sm:$0xf]
  %v64 = vld [vmem:[%s0 + $0xd0] sm:$0xf]
  %v65 = vld [vmem:[%s0 + $0xd4] sm:$0xf]
  %v66 = vld [vmem:[%s0 + $0xd8] sm:$0xf]
  %v67 = vld [vmem:[%s0 + $0xdc] sm:$0xf]
  %v68 = vld [vmem:[%s0 + $0xe0] sm:$0xf]
  %v69 = vld [vmem:[%s0 + $0xe4] sm:$0xf]
  %v70 = vld [vmem:[%s0 + $0xe8] sm:$0xf]
  %v71 = vld [vmem:[%s0 + $0xec] sm:$0xf]
  %v72 = vld [vmem:[%s0 + $0xf0] sm:$0xf]
  %v73 = vld [vmem:[%s0 + $0xf4] sm:$0xf]
  %v74 = vld [vmem:[%s0 + $0xf8] sm:$0xf]
  %v75 = vld [vmem:[%s0 + $0xfc] sm:$0xf]
  %v76 = vld [vmem:[%s1] sm:$0xf]
  %v77 = vld [vmem:[%s1 + $0x4] sm:$0xf]
  %v78 = vld [vmem:[%s1 + $0x8] sm:$0xf]
  %v79 = vld [vmem:[%s1 + $0xc] sm:$0xf]
  %v80 = vld [vmem:[%s1 + $0x10] sm:$0xf]
  %v81 = vld [vmem:[%s1 + $0x14] sm:$0xf]
  %v82 = vld [vmem:[%s1 + $0x18] sm:$0xf]
  %v83 = vld [vmem:[%s1 + $0x1c] sm:$0xf]
  %v148 = vunpack.c.l.b16 %v12
  %v149 = vunpack.c.l.b16 %v13
  %v150 = vunpack.c.l.b16 %v14
  %v151 = vunpack.c.l.b16 %v15
  %v152 = vunpack.c.l.b16 %v16
  %v153 = vunpack.c.l.b16 %v17
  %v154 = vunpack.c.l.b16 %v18
  %v155 = vunpack.c.l.b16 %v19
  %v156 = vunpack.c.l.b16 %v20
  %v157 = vunpack.c.l.b16 %v21
  %v158 = vunpack.c.l.b16 %v22
  %v159 = vunpack.c.l.b16 %v23
  %v160 = vunpack.c.l.b16 %v24
  %v161 = vunpack.c.l.b16 %v25
  %v162 = vunpack.c.l.b16 %v26
  %v163 = vunpack.c.l.b16 %v27
  %v164 = vunpack.c.l.b16 %v28
  %v165 = vunpack.c.l.b16 %v29
  %v166 = vunpack.c.l.b16 %v30
  %v167 = vunpack.c.l.b16 %v31
  %v168 = vunpack.c.l.b16 %v32
  %v169 = vunpack.c.l.b16 %v33
  %v170 = vunpack.c.l.b16 %v34
  %v171 = vunpack.c.l.b16 %v35
  %v172 = vunpack.c.l.b16 %v36
  %v173 = vunpack.c.l.b16 %v37
  %v174 = vunpack.c.l.b16 %v38
  %v175 = vunpack.c.l.b16 %v39
  %v176 = vunpack.c.l.b16 %v40
  %v177 = vunpack.c.l.b16 %v41
  %v178 = vunpack.c.l.b16 %v42
  %v179 = vunpack.c.l.b16 %v43
  %v180 = vunpack.c.l.b16 %v44
  %v181 = vunpack.c.l.b16 %v45
  %v182 = vunpack.c.l.b16 %v46
  %v183 = vunpack.c.l.b16 %v47
  %v184 = vunpack.c.l.b16 %v48
  %v185 = vunpack.c.l.b16 %v49
  %v186 = vunpack.c.l.b16 %v50
  %v187 = vunpack.c.l.b16 %v51
  %v188 = vunpack.c.l.b16 %v52
  %v189 = vunpack.c.l.b16 %v53
  %v190 = vunpack.c.l.b16 %v54
  %v191 = vunpack.c.l.b16 %v55
  %v192 = vunpack.c.l.b16 %v56
  %v193 = vunpack.c.l.b16 %v57
  %v194 = vunpack.c.l.b16 %v58
  %v195 = vunpack.c.l.b16 %v59
  %v196 = vunpack.c.l.b16 %v60
  %v197 = vunpack.c.l.b16 %v61
  %v198 = vunpack.c.l.b16 %v62
  %v199 = vunpack.c.l.b16 %v63
  %v200 = vunpack.c.l.b16 %v64
  %v201 = vunpack.c.l.b16 %v65
  %v202 = vunpack.c.l.b16 %v66
  %v203 = vunpack.c.l.b16 %v67
  %v204 = vunpack.c.l.b16 %v68
  %v205 = vunpack.c.l.b16 %v69
  %v206 = vunpack.c.l.b16 %v70
  %v207 = vunpack.c.l.b16 %v71
  %v208 = vunpack.c.l.b16 %v72
  %v209 = vunpack.c.l.b16 %v73
  %v210 = vunpack.c.l.b16 %v74
  %v211 = vunpack.c.l.b16 %v75
  %v212 = vpack.c.b16 %v149, %v148
  %v213 = vpack.c.b16 %v151, %v150
  %v214 = vpack.c.b16 %v153, %v152
  %v215 = vpack.c.b16 %v155, %v154
  %v216 = vpack.c.b16 %v157, %v156
  %v217 = vpack.c.b16 %v159, %v158
  %v218 = vpack.c.b16 %v161, %v160
  %v219 = vpack.c.b16 %v163, %v162
  %v220 = vpack.c.b16 %v165, %v164
  %v221 = vpack.c.b16 %v167, %v166
  %v222 = vpack.c.b16 %v169, %v168
  %v223 = vpack.c.b16 %v171, %v170
  %v224 = vpack.c.b16 %v173, %v172
  %v225 = vpack.c.b16 %v175, %v174
  %v226 = vpack.c.b16 %v177, %v176
  %v227 = vpack.c.b16 %v179, %v178
  %v228 = vpack.c.b16 %v181, %v180
  %v229 = vpack.c.b16 %v183, %v182
  %v230 = vpack.c.b16 %v185, %v184
  %v231 = vpack.c.b16 %v187, %v186
  %v232 = vpack.c.b16 %v189, %v188
  %v233 = vpack.c.b16 %v191, %v190
  %v234 = vpack.c.b16 %v193, %v192
  %v235 = vpack.c.b16 %v195, %v194
  %v236 = vpack.c.b16 %v197, %v196
  %v237 = vpack.c.b16 %v199, %v198
  %v238 = vpack.c.b16 %v201, %v200
  %v239 = vpack.c.b16 %v203, %v202
  %v240 = vpack.c.b16 %v205, %v204
  %v241 = vpack.c.b16 %v207, %v206
  %v242 = vpack.c.b16 %v209, %v208
  %v243 = vpack.c.b16 %v211, %v210
  %v252 = vunpack.c.l.b16 %v76
  %v253 = vunpack.c.l.b16 %v77
  %v254 = vunpack.c.l.b16 %v78
  %v255 = vunpack.c.l.b16 %v79
  %v256 = vunpack.c.l.b16 %v80
  %v257 = vunpack.c.l.b16 %v81
  %v258 = vunpack.c.l.b16 %v82
  %v259 = vunpack.c.l.b16 %v83
  %v260 = vpack.c.b16 %v253, %v252
  %v261 = vpack.c.b16 %v255, %v254
  %v262 = vpack.c.b16 %v257, %v256
  %v263 = vpack.c.b16 %v259, %v258
  %vm268 = vcmask 523264
  %v270 = vsel %vm268, %v212, 0
  %v273 = vsel %vm268, %v213, 0
  %v276 = vsel %vm268, %v214, 0
  %v279 = vsel %vm268, %v215, 0
  %v282 = vsel %vm268, %v216, 0
  %v285 = vsel %vm268, %v217, 0
  %v288 = vsel %vm268, %v218, 0
  %v291 = vsel %vm268, %v219, 0
  %v294 = vsel %vm268, %v220, 0
  %v297 = vsel %vm268, %v221, 0
  %v300 = vsel %vm268, %v222, 0
  %v303 = vsel %vm268, %v223, 0
  %v306 = vsel %vm268, %v224, 0
  %v309 = vsel %vm268, %v225, 0
  %v312 = vsel %vm268, %v226, 0
  %v315 = vsel %vm268, %v227, 0
  %v318 = vsel %vm268, %v228, 0
  %v321 = vsel %vm268, %v229, 0
  %v324 = vsel %vm268, %v230, 0
  %v327 = vsel %vm268, %v231, 0
  %v330 = vsel %vm268, %v232, 0
  %v333 = vsel %vm268, %v233, 0
  %v336 = vsel %vm268, %v234, 0
  %v339 = vsel %vm268, %v235, 0
  %v342 = vsel %vm268, %v236, 0
  %v345 = vsel %vm268, %v237, 0
  %v348 = vsel %vm268, %v238, 0
  %v351 = vsel %vm268, %v239, 0
  %v354 = vsel %vm268, %v240, 0
  %v357 = vsel %vm268, %v241, 0
  %v360 = vsel %vm268, %v242, 0
  %v363 = vsel %vm268, %v243, 0
  %365 = vmatprep.subr.bf16.mxu0 0
  %366 = vmatpush1.bf16.msra.mxu0 0
  %367 = vmatprep.subr.bf16.mxu0 0
  %368 = vmatpush1.bf16.msra.mxu0 0
  %369 = vmatprep.subr.bf16.mxu0 0
  %370 = vmatpush1.bf16.msra.mxu0 0
  %371 = vmatprep.subr.bf16.mxu0 0
  %372 = vmatpush1.bf16.msra.mxu0 0
  %373 = vmatprep.subr.bf16.mxu0 0
  %374 = vmatpush1.bf16.msra.mxu0 %v263
  %375 = vmatprep.subr.bf16.mxu0 0
  %376 = vmatpush1.bf16.msra.mxu0 %v262
  %377 = vmatprep.subr.bf16.mxu0 0
  %378 = vmatpush1.bf16.msra.mxu0 %v261
  %379 = vmatprep.subr.bf16.mxu0 0
  %380 = vmatpush1.bf16.msra.mxu0 %v260
  %381 = vmatprep.subr.bf16.mxu0 0
  %382 = vmatpush2.bf16.msra.mxu0 0
  %383 = vmatprep.subr.bf16.mxu0 0
  %384 = vmatpush2.bf16.msra.mxu0 0
  %385 = vmatprep.subr.bf16.mxu0 0
  %386 = vmatpush2.bf16.msra.mxu0 0
  %387 = vmatprep.subr.bf16.mxu0 0
  %388 = vmatpush2.bf16.msra.mxu0 0
  %389 = vmatprep.subr.bf16.mxu0 0
  %390 = vmatpush2.bf16.msra.mxu0 0
  %391 = vmatprep.subr.bf16.mxu0 0
  %392 = vmatpush2.bf16.msra.mxu0 0
  %393 = vmatprep.subr.bf16.mxu0 0
  %394 = vmatpush2.bf16.msra.mxu0 0
  %395 = vmatprep.subr.bf16.mxu0 0
  %396 = vmatpush2.bf16.msra.mxu0 0
  %397 = vmatprep.mubr.bf16.mxu0 0
  %398 = vmatmul.mubr.bf16.gmra.mxu0 %v270
  %v399 = vpop.f32.mrf.mxu0
  %v400 = vadd.f32 0.0, %v399
  %v401 = vpop.f32.mrf.mxu0
  %v402 = vpop.f32.mrf.mxu0
  %v403 = vadd.f32 0.0, %v402
  %v404 = vpop.f32.mrf.mxu0
  %405 = vmatprep.mubr.bf16.mxu0 0
  %406 = vmatmul.mubr.bf16.gmra.mxu0 %v273
  %v407 = vpop.f32.mrf.mxu0
  %v408 = vadd.f32 0.0, %v407
  %v409 = vpop.f32.mrf.mxu0
  %v410 = vpop.f32.mrf.mxu0
  %v411 = vadd.f32 0.0, %v410
  %v412 = vpop.f32.mrf.mxu0
  %413 = vmatprep.mubr.bf16.mxu0 0
  %414 = vmatmul.mubr.bf16.gmra.mxu0 %v276
  %v415 = vpop.f32.mrf.mxu0
  %v416 = vadd.f32 0.0, %v415
  %v417 = vpop.f32.mrf.mxu0
  %v418 = vpop.f32.mrf.mxu0
  %v419 = vadd.f32 0.0, %v418
  %v420 = vpop.f32.mrf.mxu0
  %421 = vmatprep.mubr.bf16.mxu0 0
  %422 = vmatmul.mubr.bf16.gmra.mxu0 %v279
  %v423 = vpop.f32.mrf.mxu0
  %v424 = vadd.f32 0.0, %v423
  %v425 = vpop.f32.mrf.mxu0
  %v426 = vpop.f32.mrf.mxu0
  %v427 = vadd.f32 0.0, %v426
  %v428 = vpop.f32.mrf.mxu0
  %429 = vmatprep.mubr.bf16.mxu0 0
  %430 = vmatmul.mubr.bf16.gmra.mxu0 %v282
  %v431 = vpop.f32.mrf.mxu0
  %v432 = vadd.f32 0.0, %v431
  %v433 = vpop.f32.mrf.mxu0
  %v434 = vpop.f32.mrf.mxu0
  %v435 = vadd.f32 0.0, %v434
  %v436 = vpop.f32.mrf.mxu0
  %437 = vmatprep.mubr.bf16.mxu0 0
  %438 = vmatmul.mubr.bf16.gmra.mxu0 %v285
  %v439 = vpop.f32.mrf.mxu0
  %v440 = vadd.f32 0.0, %v439
  %v441 = vpop.f32.mrf.mxu0
  %v442 = vpop.f32.mrf.mxu0
  %v443 = vadd.f32 0.0, %v442
  %v444 = vpop.f32.mrf.mxu0
  %445 = vmatprep.mubr.bf16.mxu0 0
  %446 = vmatmul.mubr.bf16.gmra.mxu0 %v288
  %v447 = vpop.f32.mrf.mxu0
  %v448 = vadd.f32 0.0, %v447
  %v449 = vpop.f32.mrf.mxu0
  %v450 = vpop.f32.mrf.mxu0
  %v451 = vadd.f32 0.0, %v450
  %v452 = vpop.f32.mrf.mxu0
  %453 = vmatprep.mubr.bf16.mxu0 0
  %454 = vmatmul.mubr.bf16.gmra.mxu0 %v291
  %v455 = vpop.f32.mrf.mxu0
  %v456 = vadd.f32 0.0, %v455
  %v457 = vpop.f32.mrf.mxu0
  %v458 = vpop.f32.mrf.mxu0
  %v459 = vadd.f32 0.0, %v458
  %v460 = vpop.f32.mrf.mxu0
  %461 = vmatprep.mubr.bf16.mxu0 0
  %462 = vmatmul.mubr.bf16.gmra.mxu0 %v294
  %v463 = vpop.f32.mrf.mxu0
  %v464 = vadd.f32 0.0, %v463
  %v465 = vpop.f32.mrf.mxu0
  %v466 = vpop.f32.mrf.mxu0
  %v467 = vadd.f32 0.0, %v466
  %v468 = vpop.f32.mrf.mxu0
  %469 = vmatprep.mubr.bf16.mxu0 0
  %470 = vmatmul.mubr.bf16.gmra.mxu0 %v297
  %v471 = vpop.f32.mrf.mxu0
  %v472 = vadd.f32 0.0, %v471
  %v473 = vpop.f32.mrf.mxu0
  %v474 = vpop.f32.mrf.mxu0
  %v475 = vadd.f32 0.0, %v474
  %v476 = vpop.f32.mrf.mxu0
  %477 = vmatprep.mubr.bf16.mxu0 0
  %478 = vmatmul.mubr.bf16.gmra.mxu0 %v300
  %v479 = vpop.f32.mrf.mxu0
  %v480 = vadd.f32 0.0, %v479
  %v481 = vpop.f32.mrf.mxu0
  %v482 = vpop.f32.mrf.mxu0
  %v483 = vadd.f32 0.0, %v482
  %v484 = vpop.f32.mrf.mxu0
  %485 = vmatprep.mubr.bf16.mxu0 0
  %486 = vmatmul.mubr.bf16.gmra.mxu0 %v303
  %v487 = vpop.f32.mrf.mxu0
  %v488 = vadd.f32 0.0, %v487
  %v489 = vpop.f32.mrf.mxu0
  %v490 = vpop.f32.mrf.mxu0
  %v491 = vadd.f32 0.0, %v490
  %v492 = vpop.f32.mrf.mxu0
  %493 = vmatprep.mubr.bf16.mxu0 0
  %494 = vmatmul.mubr.bf16.gmra.mxu0 %v306
  %v495 = vpop.f32.mrf.mxu0
  %v496 = vadd.f32 0.0, %v495
  %v497 = vpop.f32.mrf.mxu0
  %v498 = vpop.f32.mrf.mxu0
  %v499 = vadd.f32 0.0, %v498
  %v500 = vpop.f32.mrf.mxu0
  %501 = vmatprep.mubr.bf16.mxu0 0
  %502 = vmatmul.mubr.bf16.gmra.mxu0 %v309
  %v503 = vpop.f32.mrf.mxu0
  %v504 = vadd.f32 0.0, %v503
  %v505 = vpop.f32.mrf.mxu0
  %v506 = vpop.f32.mrf.mxu0
  %v507 = vadd.f32 0.0, %v506
  %v508 = vpop.f32.mrf.mxu0
  %509 = vmatprep.mubr.bf16.mxu0 0
  %510 = vmatmul.mubr.bf16.gmra.mxu0 %v312
  %v511 = vpop.f32.mrf.mxu0
  %v512 = vadd.f32 0.0, %v511
  %v513 = vpop.f32.mrf.mxu0
  %v514 = vpop.f32.mrf.mxu0
  %v515 = vadd.f32 0.0, %v514
  %v516 = vpop.f32.mrf.mxu0
  %517 = vmatprep.mubr.bf16.mxu0 0
  %518 = vmatmul.mubr.bf16.gmra.mxu0 %v315
  %v519 = vpop.f32.mrf.mxu0
  %v520 = vadd.f32 0.0, %v519
  %v521 = vpop.f32.mrf.mxu0
  %v522 = vpop.f32.mrf.mxu0
  %v523 = vadd.f32 0.0, %v522
  %v524 = vpop.f32.mrf.mxu0
  %525 = vmatprep.mubr.bf16.mxu0 0
  %526 = vmatmul.mubr.bf16.gmra.mxu0 %v318
  %v527 = vpop.f32.mrf.mxu0
  %v528 = vadd.f32 0.0, %v527
  %v529 = vpop.f32.mrf.mxu0
  %v530 = vpop.f32.mrf.mxu0
  %v531 = vadd.f32 0.0, %v530
  %v532 = vpop.f32.mrf.mxu0
  %533 = vmatprep.mubr.bf16.mxu0 0
  %534 = vmatmul.mubr.bf16.gmra.mxu0 %v321
  %v535 = vpop.f32.mrf.mxu0
  %v536 = vadd.f32 0.0, %v535
  %v537 = vpop.f32.mrf.mxu0
  %v538 = vpop.f32.mrf.mxu0
  %v539 = vadd.f32 0.0, %v538
  %v540 = vpop.f32.mrf.mxu0
  %541 = vmatprep.mubr.bf16.mxu0 0
  %542 = vmatmul.mubr.bf16.gmra.mxu0 %v324
  %v543 = vpop.f32.mrf.mxu0
  %v544 = vadd.f32 0.0, %v543
  %v545 = vpop.f32.mrf.mxu0
  %v546 = vpop.f32.mrf.mxu0
  %v547 = vadd.f32 0.0, %v546
  %v548 = vpop.f32.mrf.mxu0
  %549 = vmatprep.mubr.bf16.mxu0 0
  %550 = vmatmul.mubr.bf16.gmra.mxu0 %v327
  %v551 = vpop.f32.mrf.mxu0
  %v552 = vadd.f32 0.0, %v551
  %v553 = vpop.f32.mrf.mxu0
  %v554 = vpop.f32.mrf.mxu0
  %v555 = vadd.f32 0.0, %v554
  %v556 = vpop.f32.mrf.mxu0
  %557 = vmatprep.mubr.bf16.mxu0 0
  %558 = vmatmul.mubr.bf16.gmra.mxu0 %v330
  %v559 = vpop.f32.mrf.mxu0
  %v560 = vadd.f32 0.0, %v559
  %v561 = vpop.f32.mrf.mxu0
  %v562 = vpop.f32.mrf.mxu0
  %v563 = vadd.f32 0.0, %v562
  %v564 = vpop.f32.mrf.mxu0
  %565 = vmatprep.mubr.bf16.mxu0 0
  %566 = vmatmul.mubr.bf16.gmra.mxu0 %v333
  %v567 = vpop.f32.mrf.mxu0
  %v568 = vadd.f32 0.0, %v567
  %v569 = vpop.f32.mrf.mxu0
  %v570 = vpop.f32.mrf.mxu0
  %v571 = vadd.f32 0.0, %v570
  %v572 = vpop.f32.mrf.mxu0
  %573 = vmatprep.mubr.bf16.mxu0 0
  %574 = vmatmul.mubr.bf16.gmra.mxu0 %v336
  %v575 = vpop.f32.mrf.mxu0
  %v576 = vadd.f32 0.0, %v575
  %v577 = vpop.f32.mrf.mxu0
  %v578 = vpop.f32.mrf.mxu0
  %v579 = vadd.f32 0.0, %v578
  %v580 = vpop.f32.mrf.mxu0
  %581 = vmatprep.mubr.bf16.mxu0 0
  %582 = vmatmul.mubr.bf16.gmra.mxu0 %v339
  %v583 = vpop.f32.mrf.mxu0
  %v584 = vadd.f32 0.0, %v583
  %v585 = vpop.f32.mrf.mxu0
  %v586 = vpop.f32.mrf.mxu0
  %v587 = vadd.f32 0.0, %v586
  %v588 = vpop.f32.mrf.mxu0
  %589 = vmatprep.mubr.bf16.mxu0 0
  %590 = vmatmul.mubr.bf16.gmra.mxu0 %v342
  %v591 = vpop.f32.mrf.mxu0
  %v592 = vadd.f32 0.0, %v591
  %v593 = vpop.f32.mrf.mxu0
  %v594 = vpop.f32.mrf.mxu0
  %v595 = vadd.f32 0.0, %v594
  %v596 = vpop.f32.mrf.mxu0
  %597 = vmatprep.mubr.bf16.mxu0 0
  %598 = vmatmul.mubr.bf16.gmra.mxu0 %v345
  %v599 = vpop.f32.mrf.mxu0
  %v600 = vadd.f32 0.0, %v599
  %v601 = vpop.f32.mrf.mxu0
  %v602 = vpop.f32.mrf.mxu0
  %v603 = vadd.f32 0.0, %v602
  %v604 = vpop.f32.mrf.mxu0
  %605 = vmatprep.mubr.bf16.mxu0 0
  %606 = vmatmul.mubr.bf16.gmra.mxu0 %v348
  %v607 = vpop.f32.mrf.mxu0
  %v608 = vadd.f32 0.0, %v607
  %v609 = vpop.f32.mrf.mxu0
  %v610 = vpop.f32.mrf.mxu0
  %v611 = vadd.f32 0.0, %v610
  %v612 = vpop.f32.mrf.mxu0
  %613 = vmatprep.mubr.bf16.mxu0 0
  %614 = vmatmul.mubr.bf16.gmra.mxu0 %v351
  %v615 = vpop.f32.mrf.mxu0
  %v616 = vadd.f32 0.0, %v615
  %v617 = vpop.f32.mrf.mxu0
  %v618 = vpop.f32.mrf.mxu0
  %v619 = vadd.f32 0.0, %v618
  %v620 = vpop.f32.mrf.mxu0
  %621 = vmatprep.mubr.bf16.mxu0 0
  %622 = vmatmul.mubr.bf16.gmra.mxu0 %v354
  %v623 = vpop.f32.mrf.mxu0
  %v624 = vadd.f32 0.0, %v623
  %v625 = vpop.f32.mrf.mxu0
  %v626 = vpop.f32.mrf.mxu0
  %v627 = vadd.f32 0.0, %v626
  %v628 = vpop.f32.mrf.mxu0
  %629 = vmatprep.mubr.bf16.mxu0 0
  %630 = vmatmul.mubr.bf16.gmra.mxu0 %v357
  %v631 = vpop.f32.mrf.mxu0
  %v632 = vadd.f32 0.0, %v631
  %v633 = vpop.f32.mrf.mxu0
  %v634 = vpop.f32.mrf.mxu0
  %v635 = vadd.f32 0.0, %v634
  %v636 = vpop.f32.mrf.mxu0
  %637 = vmatprep.mubr.bf16.mxu0 0
  %638 = vmatmul.mubr.bf16.gmra.mxu0 %v360
  %v639 = vpop.f32.mrf.mxu0
  %v640 = vadd.f32 0.0, %v639
  %v641 = vpop.f32.mrf.mxu0
  %v642 = vpop.f32.mrf.mxu0
  %v643 = vadd.f32 0.0, %v642
  %v644 = vpop.f32.mrf.mxu0
  %645 = vmatprep.mubr.bf16.mxu0 0
  %646 = vmatmul.mubr.bf16.gmra.mxu0 %v363
  %v647 = vpop.f32.mrf.mxu0
  %v648 = vadd.f32 0.0, %v647
  %v649 = vpop.f32.mrf.mxu0
  %v650 = vpop.f32.mrf.mxu0
  %v651 = vadd.f32 0.0, %v650
  %v652 = vpop.f32.mrf.mxu0
  %653 = vdwg.mxu0
  %v654 = vpack.c.bf16 %v403, %v400
  %v655 = vpack.c.bf16 %v411, %v408
  %v656 = vpack.c.bf16 %v419, %v416
  %v657 = vpack.c.bf16 %v427, %v424
  %v658 = vpack.c.bf16 %v435, %v432
  %v659 = vpack.c.bf16 %v443, %v440
  %v660 = vpack.c.bf16 %v451, %v448
  %v661 = vpack.c.bf16 %v459, %v456
  %v662 = vpack.c.bf16 %v467, %v464
  %v663 = vpack.c.bf16 %v475, %v472
  %v664 = vpack.c.bf16 %v483, %v480
  %v665 = vpack.c.bf16 %v491, %v488
  %v666 = vpack.c.bf16 %v499, %v496
  %v667 = vpack.c.bf16 %v507, %v504
  %v668 = vpack.c.bf16 %v515, %v512
  %v669 = vpack.c.bf16 %v523, %v520
  %v670 = vpack.c.bf16 %v531, %v528
  %v671 = vpack.c.bf16 %v539, %v536
  %v672 = vpack.c.bf16 %v547, %v544
  %v673 = vpack.c.bf16 %v555, %v552
  %v674 = vpack.c.bf16 %v563, %v560
  %v675 = vpack.c.bf16 %v571, %v568
  %v676 = vpack.c.bf16 %v579, %v576
  %v677 = vpack.c.bf16 %v587, %v584
  %v678 = vpack.c.bf16 %v595, %v592
  %v679 = vpack.c.bf16 %v603, %v600
  %v680 = vpack.c.bf16 %v611, %v608
  %v681 = vpack.c.bf16 %v619, %v616
  %v682 = vpack.c.bf16 %v627, %v624
  %v683 = vpack.c.bf16 %v635, %v632
  %v684 = vpack.c.bf16 %v643, %v640
  %v685 = vpack.c.bf16 %v651, %v648
  %v718 = vunpack.c.l.b16 %v654
  %v719 = vunpack.c.h.b16 %v654
  %v720 = vunpack.c.l.b16 %v655
  %v721 = vunpack.c.h.b16 %v655
  %v722 = vunpack.c.l.b16 %v656
  %v723 = vunpack.c.h.b16 %v656
  %v724 = vunpack.c.l.b16 %v657
  %v725 = vunpack.c.h.b16 %v657
  %v726 = vunpack.c.l.b16 %v658
  %v727 = vunpack.c.h.b16 %v658
  %v728 = vunpack.c.l.b16 %v659
  %v729 = vunpack.c.h.b16 %v659
  %v730 = vunpack.c.l.b16 %v660
  %v731 = vunpack.c.h.b16 %v660
  %v732 = vunpack.c.l.b16 %v661
  %v733 = vunpack.c.h.b16 %v661
  %v734 = vunpack.c.l.b16 %v662
  %v735 = vunpack.c.h.b16 %v662
  %v736 = vunpack.c.l.b16 %v663
  %v737 = vunpack.c.h.b16 %v663
  %v738 = vunpack.c.l.b16 %v664
  %v739 = vunpack.c.h.b16 %v664
  %v740 = vunpack.c.l.b16 %v665
  %v741 = vunpack.c.h.b16 %v665
  %v742 = vunpack.c.l.b16 %v666
  %v743 = vunpack.c.h.b16 %v666
  %v744 = vunpack.c.l.b16 %v667
  %v745 = vunpack.c.h.b16 %v667
  %v746 = vunpack.c.l.b16 %v668
  %v747 = vunpack.c.h.b16 %v668
  %v748 = vunpack.c.l.b16 %v669
  %v749 = vunpack.c.h.b16 %v669
  %v750 = vunpack.c.l.b16 %v670
  %v751 = vunpack.c.h.b16 %v670
  %v752 = vunpack.c.l.b16 %v671
  %v753 = vunpack.c.h.b16 %v671
  %v754 = vunpack.c.l.b16 %v672
  %v755 = vunpack.c.h.b16 %v672
  %v756 = vunpack.c.l.b16 %v673
  %v757 = vunpack.c.h.b16 %v673
  %v758 = vunpack.c.l.b16 %v674
  %v759 = vunpack.c.h.b16 %v674
  %v760 = vunpack.c.l.b16 %v675
  %v761 = vunpack.c.h.b16 %v675
  %v762 = vunpack.c.l.b16 %v676
  %v763 = vunpack.c.h.b16 %v676
  %v764 = vunpack.c.l.b16 %v677
  %v765 = vunpack.c.h.b16 %v677
  %v766 = vunpack.c.l.b16 %v678
  %v767 = vunpack.c.h.b16 %v678
  %v768 = vunpack.c.l.b16 %v679
  %v769 = vunpack.c.h.b16 %v679
  %v770 = vunpack.c.l.b16 %v680
  %v771 = vunpack.c.h.b16 %v680
  %v772 = vunpack.c.l.b16 %v681
  %v773 = vunpack.c.h.b16 %v681
  %v774 = vunpack.c.l.b16 %v682
  %v775 = vunpack.c.h.b16 %v682
  %v776 = vunpack.c.l.b16 %v683
  %v777 = vunpack.c.h.b16 %v683
  %v778 = vunpack.c.l.b16 %v684
  %v779 = vunpack.c.h.b16 %v684
  %v780 = vunpack.c.l.b16 %v685
  %v781 = vunpack.c.h.b16 %v685
  %v782 = vpack.c.b16 %v718, %v718
  %v783 = vpack.c.b16 %v719, %v719
  %v784 = vpack.c.b16 %v720, %v720
  %v785 = vpack.c.b16 %v721, %v721
  %v786 = vpack.c.b16 %v722, %v722
  %v787 = vpack.c.b16 %v723, %v723
  %v788 = vpack.c.b16 %v724, %v724
  %v789 = vpack.c.b16 %v725, %v725
  %v790 = vpack.c.b16 %v726, %v726
  %v791 = vpack.c.b16 %v727, %v727
  %v792 = vpack.c.b16 %v728, %v728
  %v793 = vpack.c.b16 %v729, %v729
  %v794 = vpack.c.b16 %v730, %v730
  %v795 = vpack.c.b16 %v731, %v731
  %v796 = vpack.c.b16 %v732, %v732
  %v797 = vpack.c.b16 %v733, %v733
  %v798 = vpack.c.b16 %v734, %v734
  %v799 = vpack.c.b16 %v735, %v735
  %v800 = vpack.c.b16 %v736, %v736
  %v801 = vpack.c.b16 %v737, %v737
  %v802 = vpack.c.b16 %v738, %v738
  %v803 = vpack.c.b16 %v739, %v739
  %v804 = vpack.c.b16 %v740, %v740
  %v805 = vpack.c.b16 %v741, %v741
  %v806 = vpack.c.b16 %v742, %v742
  %v807 = vpack.c.b16 %v743, %v743
  %v808 = vpack.c.b16 %v744, %v744
  %v809 = vpack.c.b16 %v745, %v745
  %v810 = vpack.c.b16 %v746, %v746
  %v811 = vpack.c.b16 %v747, %v747
  %v812 = vpack.c.b16 %v748, %v748
  %v813 = vpack.c.b16 %v749, %v749
  %v814 = vpack.c.b16 %v750, %v750
  %v815 = vpack.c.b16 %v751, %v751
  %v816 = vpack.c.b16 %v752, %v752
  %v817 = vpack.c.b16 %v753, %v753
  %v818 = vpack.c.b16 %v754, %v754
  %v819 = vpack.c.b16 %v755, %v755
  %v820 = vpack.c.b16 %v756, %v756
  %v821 = vpack.c.b16 %v757, %v757
  %v822 = vpack.c.b16 %v758, %v758
  %v823 = vpack.c.b16 %v759, %v759
  %v824 = vpack.c.b16 %v760, %v760
  %v825 = vpack.c.b16 %v761, %v761
  %v826 = vpack.c.b16 %v762, %v762
  %v827 = vpack.c.b16 %v763, %v763
  %v828 = vpack.c.b16 %v764, %v764
  %v829 = vpack.c.b16 %v765, %v765
  %v830 = vpack.c.b16 %v766, %v766
  %v831 = vpack.c.b16 %v767, %v767
  %v832 = vpack.c.b16 %v768, %v768
  %v833 = vpack.c.b16 %v769, %v769
  %v834 = vpack.c.b16 %v770, %v770
  %v835 = vpack.c.b16 %v771, %v771
  %v836 = vpack.c.b16 %v772, %v772
  %v837 = vpack.c.b16 %v773, %v773
  %v838 = vpack.c.b16 %v774, %v774
  %v839 = vpack.c.b16 %v775, %v775
  %v840 = vpack.c.b16 %v776, %v776
  %v841 = vpack.c.b16 %v777, %v777
  %v842 = vpack.c.b16 %v778, %v778
  %v843 = vpack.c.b16 %v779, %v779
  %v844 = vpack.c.b16 %v780, %v780
  %v845 = vpack.c.b16 %v781, %v781
  %910 = vst [vmem:[%s2] sm:$0xf] %v782
  %911 = vst [vmem:[%s2 + $0x4] sm:$0xf] %v783
  %912 = vst [vmem:[%s2 + $0x8] sm:$0xf] %v784
  %913 = vst [vmem:[%s2 + $0xc] sm:$0xf] %v785
  %914 = vst [vmem:[%s2 + $0x10] sm:$0xf] %v786
  %915 = vst [vmem:[%s2 + $0x14] sm:$0xf] %v787
  %916 = vst [vmem:[%s2 + $0x18] sm:$0xf] %v788
  %917 = vst [vmem:[%s2 + $0x1c] sm:$0xf] %v789
  %918 = vst [vmem:[%s2 + $0x20] sm:$0xf] %v790
  %919 = vst [vmem:[%s2 + $0x24] sm:$0xf] %v791
  %920 = vst [vmem:[%s2 + $0x28] sm:$0xf] %v792
  %921 = vst [vmem:[%s2 + $0x2c] sm:$0xf] %v793
  %922 = vst [vmem:[%s2 + $0x30] sm:$0xf] %v794
  %923 = vst [vmem:[%s2 + $0x34] sm:$0xf] %v795
  %924 = vst [vmem:[%s2 + $0x38] sm:$0xf] %v796
  %925 = vst [vmem:[%s2 + $0x3c] sm:$0xf] %v797
  %926 = vst [vmem:[%s2 + $0x40] sm:$0xf] %v798
  %927 = vst [vmem:[%s2 + $0x44] sm:$0xf] %v799
  %928 = vst [vmem:[%s2 + $0x48] sm:$0xf] %v800
  %929 = vst [vmem:[%s2 + $0x4c] sm:$0xf] %v801
  %930 = vst [vmem:[%s2 + $0x50] sm:$0xf] %v802
  %931 = vst [vmem:[%s2 + $0x54] sm:$0xf] %v803
  %932 = vst [vmem:[%s2 + $0x58] sm:$0xf] %v804
  %933 = vst [vmem:[%s2 + $0x5c] sm:$0xf] %v805
  %934 = vst [vmem:[%s2 + $0x60] sm:$0xf] %v806
  %935 = vst [vmem:[%s2 + $0x64] sm:$0xf] %v807
  %936 = vst [vmem:[%s2 + $0x68] sm:$0xf] %v808
  %937 = vst [vmem:[%s2 + $0x6c] sm:$0xf] %v809
  %938 = vst [vmem:[%s2 + $0x70] sm:$0xf] %v810
  %939 = vst [vmem:[%s2 + $0x74] sm:$0xf] %v811
  %940 = vst [vmem:[%s2 + $0x78] sm:$0xf] %v812
  %941 = vst [vmem:[%s2 + $0x7c] sm:$0xf] %v813
  %942 = vst [vmem:[%s2 + $0x80] sm:$0xf] %v814
  %943 = vst [vmem:[%s2 + $0x84] sm:$0xf] %v815
  %944 = vst [vmem:[%s2 + $0x88] sm:$0xf] %v816
  %945 = vst [vmem:[%s2 + $0x8c] sm:$0xf] %v817
  %946 = vst [vmem:[%s2 + $0x90] sm:$0xf] %v818
  %947 = vst [vmem:[%s2 + $0x94] sm:$0xf] %v819
  %948 = vst [vmem:[%s2 + $0x98] sm:$0xf] %v820
  %949 = vst [vmem:[%s2 + $0x9c] sm:$0xf] %v821
  %950 = vst [vmem:[%s2 + $0xa0] sm:$0xf] %v822
  %951 = vst [vmem:[%s2 + $0xa4] sm:$0xf] %v823
  %952 = vst [vmem:[%s2 + $0xa8] sm:$0xf] %v824
  %953 = vst [vmem:[%s2 + $0xac] sm:$0xf] %v825
  %954 = vst [vmem:[%s2 + $0xb0] sm:$0xf] %v826
  %955 = vst [vmem:[%s2 + $0xb4] sm:$0xf] %v827
  %956 = vst [vmem:[%s2 + $0xb8] sm:$0xf] %v828
  %957 = vst [vmem:[%s2 + $0xbc] sm:$0xf] %v829
  %958 = vst [vmem:[%s2 + $0xc0] sm:$0xf] %v830
  %959 = vst [vmem:[%s2 + $0xc4] sm:$0xf] %v831
  %960 = vst [vmem:[%s2 + $0xc8] sm:$0xf] %v832
  %961 = vst [vmem:[%s2 + $0xcc] sm:$0xf] %v833
  %962 = vst [vmem:[%s2 + $0xd0] sm:$0xf] %v834
  %963 = vst [vmem:[%s2 + $0xd4] sm:$0xf] %v835
  %964 = vst [vmem:[%s2 + $0xd8] sm:$0xf] %v836
  %965 = vst [vmem:[%s2 + $0xdc] sm:$0xf] %v837
  %966 = vst [vmem:[%s2 + $0xe0] sm:$0xf] %v838
  %967 = vst [vmem:[%s2 + $0xe4] sm:$0xf] %v839
  %968 = vst [vmem:[%s2 + $0xe8] sm:$0xf] %v840
  %969 = vst [vmem:[%s2 + $0xec] sm:$0xf] %v841
  %970 = vst [vmem:[%s2 + $0xf0] sm:$0xf] %v842
  %971 = vst [vmem:[%s2 + $0xf4] sm:$0xf] %v843
  %972 = vst [vmem:[%s2 + $0xf8] sm:$0xf] %v844
  %973 = vst [vmem:[%s2 + $0xfc] sm:$0xf] %v845
  // Predicated region
  $region10: #{vs_forward.3} parent=0 // pred_check
    _
  $region11: #{vs_forward.3} parent=0 // pred_check_branch
    %975 = sbr.rel (0) target = $region13
  $region12: #{vs_forward.3} parent=0 // pred_region
    _
  $region13: #{vs_forward.3} parent=0 // pred_fallthru
    _
  // Predicated region
  $region14: #{vs_forward.3} parent=0 // pred_check
    _
  $region15: #{vs_forward.3} parent=0 // pred_check_branch
    %977 = sbr.rel (0) target = $region17
  $region16: #{vs_forward.3} parent=0 // pred_region
    _
  $region17: #{vs_forward.3} parent=0 // pred_fallthru
    _

// kernel: vs_forward.5
$region0: #{vs_forward.5}
  #allocation0 [shape = 'u32[]', space=smem, size = 0x4, offset = 0x4, fixed_abs, tag = 'smem constant byte address 0x4 - core index']
  #allocation1 [shape = 'u32[144,128]{1,0:T(1,128)}', space=vmem, size = 0x12000, scoped, tag = 'internal scratch']
  #allocation2 [shape = 'f32[256,128]{1,0:T(8,128)}', space=vmem, size = 0x20000, scoped, tag = 'scratch operand']
  %s0 = inlined_call_operand.vmem [shape: bf16[512,512], index: 0, kind: input, shape index: {}]
  %s1 = inlined_call_operand.vmem [shape: bf16[512,128], index: 1, kind: input, shape index: {}]
  %s2 = inlined_call_operand.vmem [shape: f32[1,128], index: 2, kind: input, shape index: {}]
  %s3 = inlined_call_operand.vmem [shape: f32[1,128], index: 3, kind: input, shape index: {}]
  %s4 = inlined_call_operand.vmem [shape: f32[1,128], index: 4, kind: input, shape index: {}]
  %s5 = inlined_call_operand.vmem [shape: f32[512,128], index: 5, kind: output, shape index: {}]
  %s6 = sld [smem:[#allocation0]]
  $region61: #{vs_forward.5} parent=0
    _
  %s8 = ssub.s32 1, %s6
  %s9 = scalar_select 0, %s8, %s6
  loop: start=0, step=1, limit=4
  $region2: #{vs_forward.5} parent=0 // loop_pre_header
    _
  $region3: #{vs_forward.5} parent=0 // loop_header
    %s11 = sphi 0, %s15
    %p12 = scmp.ge.s32.totalorder %s11, 4
    %s18 = sphi 0, %s30
    %s19 = sphi 0, %s26
    %s20 = sphi 0, %s18
    %s21 = sphi 0, %s19
    %s22 = sphi 0, %s20
    %s23 = sphi 0, %s21
    %s35 = sphi 0, %s37
    %s38 = sphi 0, %s35
    %s39 = sphi 0, %s38
    %s55 = sphi 0, %s39
    %s59 = sphi 0, %s59
    %s61 = sphi 0, %s59
    %s62 = sphi 0, %s61
    %s76 = sphi 0, %s62
    %s80 = sphi 0, %s80
    %s82 = sphi 0, %s80
    %s83 = sphi 0, %s82
    %s97 = sphi 0, %s83
    %s101 = sphi 0, %s101
    %s103 = sphi 0, %s101
    %s104 = sphi 0, %s103
    %s118 = sphi 0, %s104
    %s122 = sphi 0, %s122
    %s124 = sphi 0, %s122
    %s125 = sphi 0, %s124
    %s139 = sphi 0, %s125
    %s145 = sphi 0, %s147
    %s148 = sphi 0, %s145
    %s149 = sphi 0, %s148
    %s165 = sphi 0, %s149
  $region4: #{vs_forward.5} parent=0 // loop_header_branch
    %14 = sbr.rel (%p12) target = $region8
  $region5: #{vs_forward.5} parent=0 // loop_body
    %s16 = ssub.s32 %s11, 1
    %s17 = ssub.s32 %s11, 2
    %s24 = sadd.s32 1, %s19
    %p25 = scmp.ge.s32.totalorder %s24, 1
    %s26 = scalar_select %p25, 0, %s24
    %s27 = sadd.s32 1, %s18
    %s28 = scalar_select %p25, %s27, %s18
    %p29 = scmp.ge.s32.totalorder %s28, 2
    %s30 = scalar_select %p29, 0, %s28
    %s31 = ssub.s32 %s18, %s30
    %s32 = ssub.s32 %s19, %s26
    %s33 = sor.u32 %s31, %s32
    %p34 = scmp.eq.s32.totalorder %s33, 0
    %s36 = sadd.s32 %s35, 1
    %s37 = scalar_select %p34, %s35, %s36
    %p40 = pneg %p34
    %p41 = scmp.eq.s32.totalorder %s11, 1
    %p42 = por %p40, %p41
    %p43 = scmp.ne.s32.totalorder %s35, %s38
    %p44 = scmp.eq.s32.totalorder %s11, 0
    %p45 = por %p43, %p44
    %p46 = scmp.ne.s32.totalorder %s35, %s38
    %p47 = scmp.eq.s32.totalorder %s16, 1
    %p48 = por %p46, %p47
    %p49 = scmp.ne.s32.totalorder %s38, %s39
    %p50 = scmp.eq.s32.totalorder %s16, 0
    %p51 = por %p49, %p50
    %p52 = scmp.ne.s32.totalorder %s38, %s39
    %p53 = scmp.eq.s32.totalorder %s17, 1
    %p54 = por %p52, %p53
    %p56 = scmp.ne.s32.totalorder %s39, %s55
    %p57 = scmp.eq.s32.totalorder %s17, 0
    %p58 = por %p56, %p57
    %s60 = sadd.s32 %s59, 1
    %p63 = scmp.eq.s32.totalorder %s11, 1
    %p64 = scmp.ne.s32.totalorder %s59, %s61
    %p65 = scmp.eq.s32.totalorder %s11, 0
    %p66 = por %p64, %p65
    %p67 = scmp.ne.s32.totalorder %s59, %s61
    %p68 = scmp.eq.s32.totalorder %s16, 1
    %p69 = por %p67, %p68
    %p70 = scmp.ne.s32.totalorder %s61, %s62
    %p71 = scmp.eq.s32.totalorder %s16, 0
    %p72 = por %p70, %p71
    %p73 = scmp.ne.s32.totalorder %s61, %s62
    %p74 = scmp.eq.s32.totalorder %s17, 1
    %p75 = por %p73, %p74
    %p77 = scmp.ne.s32.totalorder %s62, %s76
    %p78 = scmp.eq.s32.totalorder %s17, 0
    %p79 = por %p77, %p78
    %s81 = sadd.s32 %s80, 1
    %p84 = scmp.eq.s32.totalorder %s11, 1
    %p85 = scmp.ne.s32.totalorder %s80, %s82
    %p86 = scmp.eq.s32.totalorder %s11, 0
    %p87 = por %p85, %p86
    %p88 = scmp.ne.s32.totalorder %s80, %s82
    %p89 = scmp.eq.s32.totalorder %s16, 1
    %p90 = por %p88, %p89
    %p91 = scmp.ne.s32.totalorder %s82, %s83
    %p92 = scmp.eq.s32.totalorder %s16, 0
    %p93 = por %p91, %p92
    %p94 = scmp.ne.s32.totalorder %s82, %s83
    %p95 = scmp.eq.s32.totalorder %s17, 1
    %p96 = por %p94, %p95
    %p98 = scmp.ne.s32.totalorder %s83, %s97
    %p99 = scmp.eq.s32.totalorder %s17, 0
    %p100 = por %p98, %p99
    %s102 = sadd.s32 %s101, 1
    %p105 = scmp.eq.s32.totalorder %s11, 1
    %p106 = scmp.ne.s32.totalorder %s101, %s103
    %p107 = scmp.eq.s32.totalorder %s11, 0
    %p108 = por %p106, %p107
    %p109 = scmp.ne.s32.totalorder %s101, %s103
    %p110 = scmp.eq.s32.totalorder %s16, 1
    %p111 = por %p109, %p110
    %p112 = scmp.ne.s32.totalorder %s103, %s104
    %p113 = scmp.eq.s32.totalorder %s16, 0
    %p114 = por %p112, %p113
    %p115 = scmp.ne.s32.totalorder %s103, %s104
    %p116 = scmp.eq.s32.totalorder %s17, 1
    %p117 = por %p115, %p116
    %p119 = scmp.ne.s32.totalorder %s104, %s118
    %p120 = scmp.eq.s32.totalorder %s17, 0
    %p121 = por %p119, %p120
    %s123 = sadd.s32 %s122, 1
    %p126 = scmp.eq.s32.totalorder %s11, 1
    %p127 = scmp.ne.s32.totalorder %s122, %s124
    %p128 = scmp.eq.s32.totalorder %s11, 0
    %p129 = por %p127, %p128
    %p130 = scmp.ne.s32.totalorder %s122, %s124
    %p131 = scmp.eq.s32.totalorder %s16, 1
    %p132 = por %p130, %p131
    %p133 = scmp.ne.s32.totalorder %s124, %s125
    %p134 = scmp.eq.s32.totalorder %s16, 0
    %p135 = por %p133, %p134
    %p136 = scmp.ne.s32.totalorder %s124, %s125
    %p137 = scmp.eq.s32.totalorder %s17, 1
    %p138 = por %p136, %p137
    %p140 = scmp.ne.s32.totalorder %s125, %s139
    %p141 = scmp.eq.s32.totalorder %s17, 0
    %p142 = por %p140, %p141
    %s143 = ssub.s32 %s18, %s30
    %p144 = scmp.eq.s32.totalorder %s143, 0
    %s146 = sadd.s32 %s145, 1
    %s147 = scalar_select %p144, %s145, %s146
    %p150 = pneg %p144
    %p151 = scmp.eq.s32.totalorder %s11, 1
    %p152 = por %p150, %p151
    %p153 = scmp.ne.s32.totalorder %s145, %s148
    %p154 = scmp.eq.s32.totalorder %s11, 0
    %p155 = por %p153, %p154
    %p156 = scmp.ne.s32.totalorder %s145, %s148
    %p157 = scmp.eq.s32.totalorder %s16, 1
    %p158 = por %p156, %p157
    %p159 = scmp.ne.s32.totalorder %s148, %s149
    %p160 = scmp.eq.s32.totalorder %s16, 0
    %p161 = por %p159, %p160
    %p162 = scmp.ne.s32.totalorder %s148, %s149
    %p163 = scmp.eq.s32.totalorder %s17, 1
    %p164 = por %p162, %p163
    %p166 = scmp.ne.s32.totalorder %s149, %s165
    %p167 = scmp.eq.s32.totalorder %s17, 0
    %p168 = por %p166, %p167
    %p169 = scmp.le.s32.totalorder 1, %s11
    %p170 = scmp.lt.s32.totalorder %s11, 3
    %p171 = pnand %p169, %p170
    %p172 = pneg %p171
    // Predicated region
    $region9: #{vs_forward.5} parent=5 // pred_check
      _
    $region10: #{vs_forward.5} parent=5 // pred_check_branch
      %174 = sbr.rel (%p171) target = $region12
    $region11: #{vs_forward.5} parent=5 // pred_region
      %s175 = ssub.s32 %s11, 1
      // Predicated region
      $region13: #{vs_forward.5} parent=11 // pred_check
        %p176 = pneg %p72
      $region14: #{vs_forward.5} parent=11 // pred_check_branch
        %178 = sbr.rel (%p176) target = $region16
      $region15: #{vs_forward.5} parent=11 // pred_region
        _
      $region16: #{vs_forward.5} parent=11 // pred_fallthru
        _
      // Predicated region
      $region17: #{vs_forward.5} parent=11 // pred_check
        %p179 = pneg %p93
      $region18: #{vs_forward.5} parent=11 // pred_check_branch
        %181 = sbr.rel (%p179) target = $region20
      $region19: #{vs_forward.5} parent=11 // pred_region
        _
      $region20: #{vs_forward.5} parent=11 // pred_fallthru
        _
      // Predicated region
      $region21: #{vs_forward.5} parent=11 // pred_check
        %p182 = pneg %p114
      $region22: #{vs_forward.5} parent=11 // pred_check_branch
        %184 = sbr.rel (%p182) target = $region24
      $region23: #{vs_forward.5} parent=11 // pred_region
        _
      $region24: #{vs_forward.5} parent=11 // pred_fallthru
        _
      // Predicated region
      $region25: #{vs_forward.5} parent=11 // pred_check
        %p185 = pneg %p135
      $region26: #{vs_forward.5} parent=11 // pred_check_branch
        %187 = sbr.rel (%p185) target = $region28
      $region27: #{vs_forward.5} parent=11 // pred_region
        _
      $region28: #{vs_forward.5} parent=11 // pred_fallthru
        _
    $region12: #{vs_forward.5} parent=5 // pred_fallthru
      _
    %p188 = scmp.lt.s32.totalorder %s11, 2
    // Predicated region
    $region29: #{vs_forward.5} parent=5 // pred_check
      %p189 = pneg %p188
    $region30: #{vs_forward.5} parent=5 // pred_check_branch
      %191 = sbr.rel (%p189) target = $region32
    $region31: #{vs_forward.5} parent=5 // pred_region
      // Predicated region
      $region33: #{vs_forward.5} parent=31 // pred_check
        %p192 = pneg %p45
      $region34: #{vs_forward.5} parent=31 // pred_check_branch
        %194 = sbr.rel (%p192) target = $region36
      $region35: #{vs_forward.5} parent=31 // pred_region
        %s195 = smul.u32 32, %s18
        %s196 = smul.u32 4, %s19
        %p197 = scmp.lt.s32.totalorder %s195, 63
        %s198 = scalar_select %p197, %s195, 63
        %p199 = scmp.lt.s32.totalorder %s196, 3
        %s200 = scalar_select %p199, %s196, 3
        %s201 = smul.addr %s198, 4
        %s202 = sadd.s32 %s200, %s201
        %s203 = smul.addr %s202, 4
        %s204 = scalar_lea.vmem %s0, %s203
        %s205 = smul.u32 32, %s18
        %s206 = smul.u32 4, %s19
      $region36: #{vs_forward.5} parent=31 // pred_fallthru
        _
    $region32: #{vs_forward.5} parent=5 // pred_fallthru
      _
    %p207 = scmp.le.s32.totalorder 1, %s11
    %p208 = scmp.lt.s32.totalorder %s11, 3
    %p209 = pnand %p207, %p208
    %p210 = pneg %p209
    // Predicated region
    $region37: #{vs_forward.5} parent=5 // pred_check
      _
    $region38: #{vs_forward.5} parent=5 // pred_check_branch
      %212 = sbr.rel (%p209) target = $region40
    $region39: #{vs_forward.5} parent=5 // pred_region
      %s213 = ssub.s32 %s11, 1
      %s214 = smul.u32 32, %s20
      %s215 = smul.u32 4, %s21
      %p216 = scmp.lt.s32.totalorder %s214, 63
      %s217 = scalar_select %p216, %s214, 63
      %p218 = scmp.lt.s32.totalorder %s215, 3
      %s219 = scalar_select %p218, %s215, 3
      %s220 = smul.addr %s217, 4
      %s221 = sadd.s32 %s219, %s220
      %s222 = smul.addr %s221, 4
      %s223 = scalar_lea.vmem %s0, %s222
      %p224 = pneg %p51
      %p225 = pneg %p48
      %p226 = pneg %p72
      %p227 = pneg %p69
      %p228 = pneg %p93
      %p229 = pneg %p90
      %p230 = pneg %p114
      %p231 = pneg %p111
      %p232 = pneg %p135
      %p233 = pneg %p132
      %p234 = pneg %p161
      %p235 = pneg %p158
      %s236 = smul.u32 32, %s20
      %p237 = scmp.lt.s32.totalorder %s236, 63
      %s238 = scalar_select %p237, %s236, 63
      %s239 = smul.addr %s238, 8
      %s240 = scalar_lea.vmem %s5, %s239
      %s241 = smul.u32 32, %s20
      %s242 = smul.u32 4, %s21
      %p243 = scmp.lt.s32.totalorder %s241, 63
      %s244 = scalar_select %p243, %s241, 63
      %p245 = scmp.lt.s32.totalorder %s242, 3
      %s246 = scalar_select %p245, %s242, 3
      %s247 = smul.addr %s244, 4
      %s248 = sadd.s32 %s246, %s247
      %s249 = smul.addr %s248, 4
      %s250 = scalar_lea.vmem %s0, %s249
      %s251 = smul.u32 32, %s20
      %s252 = smul.u32 4, %s21
      %s253 = smul.u32 32, %s20
      %p254 = scmp.lt.s32.totalorder %s253, 63
      %s255 = scalar_select %p254, %s253, 63
      %s256 = smul.addr %s255, 8
      %s257 = scalar_lea.vmem %s5, %s256
      %s258 = smul.u32 32, %s20
      %p260 = scmp.eq.s32.totalorder %s21, 0
      // Predicated region
      $region41: #{vs_forward.5} parent=39 // pred_check
        %p261 = pneg %p260
      $region42: #{vs_forward.5} parent=39 // pred_check_branch
        %263 = sbr.rel (%p261) target = $region44
      $region43: #{vs_forward.5} parent=39 // pred_region
        %264 = vst [vmem:[#allocation2] sm:$0xff] 0.0
        %265 = vst [vmem:[#allocation2 + $0x8] sm:$0xff] 0.0
        %266 = vst [vmem:[#allocation2 + $0x10] sm:$0xff] 0.0
        %267 = vst [vmem:[#allocation2 + $0x18] sm:$0xff] 0.0
        %268 = vst [vmem:[#allocation2 + $0x20] sm:$0xff] 0.0
        %269 = vst [vmem:[#allocation2 + $0x28] sm:$0xff] 0.0
        %270 = vst [vmem:[#allocation2 + $0x30] sm:$0xff] 0.0
        %271 = vst [vmem:[#allocation2 + $0x38] sm:$0xff] 0.0
        %272 = vst [vmem:[#allocation2 + $0x40] sm:$0xff] 0.0
        %273 = vst [vmem:[#allocation2 + $0x48] sm:$0xff] 0.0
        %274 = vst [vmem:[#allocation2 + $0x50] sm:$0xff] 0.0
        %275 = vst [vmem:[#allocation2 + $0x58] sm:$0xff] 0.0
        %276 = vst [vmem:[#allocation2 + $0x60] sm:$0xff] 0.0
        %277 = vst [vmem:[#allocation2 + $0x68] sm:$0xff] 0.0
        %278 = vst [vmem:[#allocation2 + $0x70] sm:$0xff] 0.0
        %279 = vst [vmem:[#allocation2 + $0x78] sm:$0xff] 0.0
        %280 = vst [vmem:[#allocation2 + $0x80] sm:$0xff] 0.0
        %281 = vst [vmem:[#allocation2 + $0x88] sm:$0xff] 0.0
        %282 = vst [vmem:[#allocation2 + $0x90] sm:$0xff] 0.0
        %283 = vst [vmem:[#allocation2 + $0x98] sm:$0xff] 0.0
        %284 = vst [vmem:[#allocation2 + $0xa0] sm:$0xff] 0.0
        %285 = vst [vmem:[#allocation2 + $0xa8] sm:$0xff] 0.0
        %286 = vst [vmem:[#allocation2 + $0xb0] sm:$0xff] 0.0
        %287 = vst [vmem:[#allocation2 + $0xb8] sm:$0xff] 0.0
        %288 = vst [vmem:[#allocation2 + $0xc0] sm:$0xff] 0.0
        %289 = vst [vmem:[#allocation2 + $0xc8] sm:$0xff] 0.0
        %290 = vst [vmem:[#allocation2 + $0xd0] sm:$0xff] 0.0
        %291 = vst [vmem:[#allocation2 + $0xd8] sm:$0xff] 0.0
        %292 = vst [vmem:[#allocation2 + $0xe0] sm:$0xff] 0.0
        %293 = vst [vmem:[#allocation2 + $0xe8] sm:$0xff] 0.0
        %294 = vst [vmem:[#allocation2 + $0xf0] sm:$0xff] 0.0
        %295 = vst [vmem:[#allocation2 + $0xf8] sm:$0xff] 0.0
      $region44: #{vs_forward.5} parent=39 // pred_fallthru
        _
      %s296 = smul.u32 %s21, 512
      %v297 = vld [vmem:[#allocation2] sm:$0xff]
      %v298 = vld [vmem:[#allocation2 + $0x8] sm:$0xff]
      %v299 = vld [vmem:[#allocation2 + $0x10] sm:$0xff]
      %v300 = vld [vmem:[#allocation2 + $0x18] sm:$0xff]
      %v301 = vld [vmem:[#allocation2 + $0x20] sm:$0xff]
      %v302 = vld [vmem:[#allocation2 + $0x28] sm:$0xff]
      %v303 = vld [vmem:[#allocation2 + $0x30] sm:$0xff]
      %v304 = vld [vmem:[#allocation2 + $0x38] sm:$0xff]
      %v305 = vld [vmem:[#allocation2 + $0x40] sm:$0xff]
      %v306 = vld [vmem:[#allocation2 + $0x48] sm:$0xff]
      %v307 = vld [vmem:[#allocation2 + $0x50] sm:$0xff]
      %v308 = vld [vmem:[#allocation2 + $0x58] sm:$0xff]
      %v309 = vld [vmem:[#allocation2 + $0x60] sm:$0xff]
      %v310 = vld [vmem:[#allocation2 + $0x68] sm:$0xff]
      %v311 = vld [vmem:[#allocation2 + $0x70] sm:$0xff]
      %v312 = vld [vmem:[#allocation2 + $0x78] sm:$0xff]
      %v313 = vld [vmem:[#allocation2 + $0x80] sm:$0xff]
      %v314 = vld [vmem:[#allocation2 + $0x88] sm:$0xff]
      %v315 = vld [vmem:[#allocation2 + $0x90] sm:$0xff]
      %v316 = vld [vmem:[#allocation2 + $0x98] sm:$0xff]
      %v317 = vld [vmem:[#allocation2 + $0xa0] sm:$0xff]
      %v318 = vld [vmem:[#allocation2 + $0xa8] sm:$0xff]
      %v319 = vld [vmem:[#allocation2 + $0xb0] sm:$0xff]
      %v320 = vld [vmem:[#allocation2 + $0xb8] sm:$0xff]
      %v321 = vld [vmem:[#allocation2 + $0xc0] sm:$0xff]
      %v322 = vld [vmem:[#allocation2 + $0xc8] sm:$0xff]
      %v323 = vld [vmem:[#allocation2 + $0xd0] sm:$0xff]
      %v324 = vld [vmem:[#allocation2 + $0xd8] sm:$0xff]
      %v325 = vld [vmem:[#allocation2 + $0xe0] sm:$0xff]
      %v326 = vld [vmem:[#allocation2 + $0xe8] sm:$0xff]
      %v327 = vld [vmem:[#allocation2 + $0xf0] sm:$0xff]
      %v328 = vld [vmem:[#allocation2 + $0xf8] sm:$0xff]
      %v329 = vld [vmem:[%s250] sm:$0xff]
      %v330 = vld [vmem:[%s250 + $0x8] sm:$0xff]
      %v331 = vld [vmem:[%s250 + $0x10] sm:$0xff]
      %v332 = vld [vmem:[%s250 + $0x18] sm:$0xff]
      %v333 = vld [vmem:[%s250 + $0x20] sm:$0xff]
      %v334 = vld [vmem:[%s250 + $0x28] sm:$0xff]
      %v335 = vld [vmem:[%s250 + $0x30] sm:$0xff]
      %v336 = vld [vmem:[%s250 + $0x38] sm:$0xff]
      %v337 = vld [vmem:[%s250 + $0x40] sm:$0xff]
      %v338 = vld [vmem:[%s250 + $0x48] sm:$0xff]
      %v339 = vld [vmem:[%s250 + $0x50] sm:$0xff]
      %v340 = vld [vmem:[%s250 + $0x58] sm:$0xff]
      %v341 = vld [vmem:[%s250 + $0x60] sm:$0xff]
      %v342 = vld [vmem:[%s250 + $0x68] sm:$0xff]
      %v343 = vld [vmem:[%s250 + $0x70] sm:$0xff]
      %v344 = vld [vmem:[%s250 + $0x78] sm:$0xff]
      %v345 = vld [vmem:[%s250 + $0x80] sm:$0xff]
      %v346 = vld [vmem:[%s250 + $0x88] sm:$0xff]
      %v347 = vld [vmem:[%s250 + $0x90] sm:$0xff]
      %v348 = vld [vmem:[%s250 + $0x98] sm:$0xff]
      %v349 = vld [vmem:[%s250 + $0xa0] sm:$0xff]
      %v350 = vld [vmem:[%s250 + $0xa8] sm:$0xff]
      %v351 = vld [vmem:[%s250 + $0xb0] sm:$0xff]
      %v352 = vld [vmem:[%s250 + $0xb8] sm:$0xff]
      %v353 = vld [vmem:[%s250 + $0xc0] sm:$0xff]
      %v354 = vld [vmem:[%s250 + $0xc8] sm:$0xff]
      %v355 = vld [vmem:[%s250 + $0xd0] sm:$0xff]
      %v356 = vld [vmem:[%s250 + $0xd8] sm:$0xff]
      %v357 = vld [vmem:[%s250 + $0xe0] sm:$0xff]
      %v358 = vld [vmem:[%s250 + $0xe8] sm:$0xff]
      %v359 = vld [vmem:[%s250 + $0xf0] sm:$0xff]
      %v360 = vld [vmem:[%s250 + $0xf8] sm:$0xff]
      %v361 = vld [vmem:[%s250 + $0x100] sm:$0xff]
      %v362 = vld [vmem:[%s250 + $0x108] sm:$0xff]
      %v363 = vld [vmem:[%s250 + $0x110] sm:$0xff]
      %v364 = vld [vmem:[%s250 + $0x118] sm:$0xff]
      %v365 = vld [vmem:[%s250 + $0x120] sm:$0xff]
      %v366 = vld [vmem:[%s250 + $0x128] sm:$0xff]
      %v367 = vld [vmem:[%s250 + $0x130] sm:$0xff]
      %v368 = vld [vmem:[%s250 + $0x138] sm:$0xff]
      %v369 = vld [vmem:[%s250 + $0x140] sm:$0xff]
      %v370 = vld [vmem:[%s250 + $0x148] sm:$0xff]
      %v371 = vld [vmem:[%s250 + $0x150] sm:$0xff]
      %v372 = vld [vmem:[%s250 + $0x158] sm:$0xff]
      %v373 = vld [vmem:[%s250 + $0x160] sm:$0xff]
      %v374 = vld [vmem:[%s250 + $0x168] sm:$0xff]
      %v375 = vld [vmem:[%s250 + $0x170] sm:$0xff]
      %v376 = vld [vmem:[%s250 + $0x178] sm:$0xff]
      %v377 = vld [vmem:[%s250 + $0x180] sm:$0xff]
      %v378 = vld [vmem:[%s250 + $0x188] sm:$0xff]
      %v379 = vld [vmem:[%s250 + $0x190] sm:$0xff]
      %v380 = vld [vmem:[%s250 + $0x198] sm:$0xff]
      %v381 = vld [vmem:[%s250 + $0x1a0] sm:$0xff]
      %v382 = vld [vmem:[%s250 + $0x1a8] sm:$0xff]
      %v383 = vld [vmem:[%s250 + $0x1b0] sm:$0xff]
      %v384 = vld [vmem:[%s250 + $0x1b8] sm:$0xff]
      %v385 = vld [vmem:[%s250 + $0x1c0] sm:$0xff]
      %v386 = vld [vmem:[%s250 + $0x1c8] sm:$0xff]
      %v387 = vld [vmem:[%s250 + $0x1d0] sm:$0xff]
      %v388 = vld [vmem:[%s250 + $0x1d8] sm:$0xff]
      %v389 = vld [vmem:[%s250 + $0x1e0] sm:$0xff]
      %v390 = vld [vmem:[%s250 + $0x1e8] sm:$0xff]
      %v391 = vld [vmem:[%s250 + $0x1f0] sm:$0xff]
      %v392 = vld [vmem:[%s250 + $0x1f8] sm:$0xff]
      %s393 = sshra.s32 %s296, 3
      %s394 = sand.u32 %s296, 7
      %s395 = smul.addr %s393, 4
      %s396 = scalar_lea.vmem %s1, %s395
      %v397 = vld [vmem:[%s396] sm:$0xf]
      %v398 = vld [vmem:[%s396 + $0x4] sm:$0xf]
      %v399 = vld [vmem:[%s396 + $0x8] sm:$0xf]
      %v400 = vld [vmem:[%s396 + $0xc] sm:$0xf]
      %v401 = vld [vmem:[%s396 + $0x10] sm:$0xf]
      %v402 = vld [vmem:[%s396 + $0x14] sm:$0xf]
      %v403 = vld [vmem:[%s396 + $0x18] sm:$0xf]
      %v404 = vld [vmem:[%s396 + $0x1c] sm:$0xf]
      %v405 = vld [vmem:[%s396 + $0x20] sm:$0xf]
      %v406 = vld [vmem:[%s396 + $0x24] sm:$0xf]
      %v407 = vld [vmem:[%s396 + $0x28] sm:$0xf]
      %v408 = vld [vmem:[%s396 + $0x2c] sm:$0xf]
      %v409 = vld [vmem:[%s396 + $0x30] sm:$0xf]
      %v410 = vld [vmem:[%s396 + $0x34] sm:$0xf]
      %v411 = vld [vmem:[%s396 + $0x38] sm:$0xf]
      %v412 = vld [vmem:[%s396 + $0x3c] sm:$0xf]
      %v413 = vld [vmem:[%s396 + $0x40] sm:$0xf]
      %v414 = vld [vmem:[%s396 + $0x44] sm:$0xf]
      %v415 = vld [vmem:[%s396 + $0x48] sm:$0xf]
      %v416 = vld [vmem:[%s396 + $0x4c] sm:$0xf]
      %v417 = vld [vmem:[%s396 + $0x50] sm:$0xf]
      %v418 = vld [vmem:[%s396 + $0x54] sm:$0xf]
      %v419 = vld [vmem:[%s396 + $0x58] sm:$0xf]
      %v420 = vld [vmem:[%s396 + $0x5c] sm:$0xf]
      %v421 = vld [vmem:[%s396 + $0x60] sm:$0xf]
      %v422 = vld [vmem:[%s396 + $0x64] sm:$0xf]
      %v423 = vld [vmem:[%s396 + $0x68] sm:$0xf]
      %v424 = vld [vmem:[%s396 + $0x6c] sm:$0xf]
      %v425 = vld [vmem:[%s396 + $0x70] sm:$0xf]
      %v426 = vld [vmem:[%s396 + $0x74] sm:$0xf]
      %v427 = vld [vmem:[%s396 + $0x78] sm:$0xf]
      %v428 = vld [vmem:[%s396 + $0x7c] sm:$0xf]
      %v429 = vld [vmem:[%s396 + $0x80] sm:$0xf]
      %v430 = vld [vmem:[%s396 + $0x84] sm:$0xf]
      %v431 = vld [vmem:[%s396 + $0x88] sm:$0xf]
      %v432 = vld [vmem:[%s396 + $0x8c] sm:$0xf]
      %v433 = vld [vmem:[%s396 + $0x90] sm:$0xf]
      %v434 = vld [vmem:[%s396 + $0x94] sm:$0xf]
      %v435 = vld [vmem:[%s396 + $0x98] sm:$0xf]
      %v436 = vld [vmem:[%s396 + $0x9c] sm:$0xf]
      %v437 = vld [vmem:[%s396 + $0xa0] sm:$0xf]
      %v438 = vld [vmem:[%s396 + $0xa4] sm:$0xf]
      %v439 = vld [vmem:[%s396 + $0xa8] sm:$0xf]
      %v440 = vld [vmem:[%s396 + $0xac] sm:$0xf]
      %v441 = vld [vmem:[%s396 + $0xb0] sm:$0xf]
      %v442 = vld [vmem:[%s396 + $0xb4] sm:$0xf]
      %v443 = vld [vmem:[%s396 + $0xb8] sm:$0xf]
      %v444 = vld [vmem:[%s396 + $0xbc] sm:$0xf]
      %v445 = vld [vmem:[%s396 + $0xc0] sm:$0xf]
      %v446 = vld [vmem:[%s396 + $0xc4] sm:$0xf]
      %v447 = vld [vmem:[%s396 + $0xc8] sm:$0xf]
      %v448 = vld [vmem:[%s396 + $0xcc] sm:$0xf]
      %v449 = vld [vmem:[%s396 + $0xd0] sm:$0xf]
      %v450 = vld [vmem:[%s396 + $0xd4] sm:$0xf]
      %v451 = vld [vmem:[%s396 + $0xd8] sm:$0xf]
      %v452 = vld [vmem:[%s396 + $0xdc] sm:$0xf]
      %v453 = vld [vmem:[%s396 + $0xe0] sm:$0xf]
      %v454 = vld [vmem:[%s396 + $0xe4] sm:$0xf]
      %v455 = vld [vmem:[%s396 + $0xe8] sm:$0xf]
      %v456 = vld [vmem:[%s396 + $0xec] sm:$0xf]
      %v457 = vld [vmem:[%s396 + $0xf0] sm:$0xf]
      %v458 = vld [vmem:[%s396 + $0xf4] sm:$0xf]
      %v459 = vld [vmem:[%s396 + $0xf8] sm:$0xf]
      %v460 = vld [vmem:[%s396 + $0xfc] sm:$0xf]
      %v525 = vunpack.c.l.b16 %v329
      %v526 = vunpack.c.h.b16 %v329
      %v527 = vunpack.c.l.b16 %v330
      %v528 = vunpack.c.h.b16 %v330
      %v529 = vunpack.c.l.b16 %v331
      %v530 = vunpack.c.h.b16 %v331
      %v531 = vunpack.c.l.b16 %v332
      %v532 = vunpack.c.h.b16 %v332
      %v533 = vunpack.c.l.b16 %v333
      %v534 = vunpack.c.h.b16 %v333
      %v535 = vunpack.c.l.b16 %v334
      %v536 = vunpack.c.h.b16 %v334
      %v537 = vunpack.c.l.b16 %v335
      %v538 = vunpack.c.h.b16 %v335
      %v539 = vunpack.c.l.b16 %v336
      %v540 = vunpack.c.h.b16 %v336
      %v541 = vunpack.c.l.b16 %v337
      %v542 = vunpack.c.h.b16 %v337
      %v543 = vunpack.c.l.b16 %v338
      %v544 = vunpack.c.h.b16 %v338
      %v545 = vunpack.c.l.b16 %v339
      %v546 = vunpack.c.h.b16 %v339
      %v547 = vunpack.c.l.b16 %v340
      %v548 = vunpack.c.h.b16 %v340
      %v549 = vunpack.c.l.b16 %v341
      %v550 = vunpack.c.h.b16 %v341
      %v551 = vunpack.c.l.b16 %v342
      %v552 = vunpack.c.h.b16 %v342
      %v553 = vunpack.c.l.b16 %v343
      %v554 = vunpack.c.h.b16 %v343
      %v555 = vunpack.c.l.b16 %v344
      %v556 = vunpack.c.h.b16 %v344
      %v557 = vunpack.c.l.b16 %v345
      %v558 = vunpack.c.h.b16 %v345
      %v559 = vunpack.c.l.b16 %v346
      %v560 = vunpack.c.h.b16 %v346
      %v561 = vunpack.c.l.b16 %v347
      %v562 = vunpack.c.h.b16 %v347
      %v563 = vunpack.c.l.b16 %v348
      %v564 = vunpack.c.h.b16 %v348
      %v565 = vunpack.c.l.b16 %v349
      %v566 = vunpack.c.h.b16 %v349
      %v567 = vunpack.c.l.b16 %v350
      %v568 = vunpack.c.h.b16 %v350
      %v569 = vunpack.c.l.b16 %v351
      %v570 = vunpack.c.h.b16 %v351
      %v571 = vunpack.c.l.b16 %v352
      %v572 = vunpack.c.h.b16 %v352
      %v573 = vunpack.c.l.b16 %v353
      %v574 = vunpack.c.h.b16 %v353
      %v575 = vunpack.c.l.b16 %v354
      %v576 = vunpack.c.h.b16 %v354
      %v577 = vunpack.c.l.b16 %v355
      %v578 = vunpack.c.h.b16 %v355
      %v579 = vunpack.c.l.b16 %v356
      %v580 = vunpack.c.h.b16 %v356
      %v581 = vunpack.c.l.b16 %v357
      %v582 = vunpack.c.h.b16 %v357
      %v583 = vunpack.c.l.b16 %v358
      %v584 = vunpack.c.h.b16 %v358
      %v585 = vunpack.c.l.b16 %v359
      %v586 = vunpack.c.h.b16 %v359
      %v587 = vunpack.c.l.b16 %v360
      %v588 = vunpack.c.h.b16 %v360
      %v589 = vunpack.c.l.b16 %v361
      %v590 = vunpack.c.h.b16 %v361
      %v591 = vunpack.c.l.b16 %v362
      %v592 = vunpack.c.h.b16 %v362
      %v593 = vunpack.c.l.b16 %v363
      %v594 = vunpack.c.h.b16 %v363
      %v595 = vunpack.c.l.b16 %v364
      %v596 = vunpack.c.h.b16 %v364
      %v597 = vunpack.c.l.b16 %v365
      %v598 = vunpack.c.h.b16 %v365
      %v599 = vunpack.c.l.b16 %v366
      %v600 = vunpack.c.h.b16 %v366
      %v601 = vunpack.c.l.b16 %v367
      %v602 = vunpack.c.h.b16 %v367
      %v603 = vunpack.c.l.b16 %v368
      %v604 = vunpack.c.h.b16 %v368
      %v605 = vunpack.c.l.b16 %v369
      %v606 = vunpack.c.h.b16 %v369
      %v607 = vunpack.c.l.b16 %v370
      %v608 = vunpack.c.h.b16 %v370
      %v609 = vunpack.c.l.b16 %v371
      %v610 = vunpack.c.h.b16 %v371
      %v611 = vunpack.c.l.b16 %v372
      %v612 = vunpack.c.h.b16 %v372
      %v613 = vunpack.c.l.b16 %v373
      %v614 = vunpack.c.h.b16 %v373
      %v615 = vunpack.c.l.b16 %v374
      %v616 = vunpack.c.h.b16 %v374
      %v617 = vunpack.c.l.b16 %v375
      %v618 = vunpack.c.h.b16 %v375
      %v619 = vunpack.c.l.b16 %v376
      %v620 = vunpack.c.h.b16 %v376
      %v621 = vunpack.c.l.b16 %v377
      %v622 = vunpack.c.h.b16 %v377
      %v623 = vunpack.c.l.b16 %v378
      %v624 = vunpack.c.h.b16 %v378
      %v625 = vunpack.c.l.b16 %v379
      %v626 = vunpack.c.h.b16 %v379
      %v627 = vunpack.c.l.b16 %v380
      %v628 = vunpack.c.h.b16 %v380
      %v629 = vunpack.c.l.b16 %v381
      %v630 = vunpack.c.h.b16 %v381
      %v631 = vunpack.c.l.b16 %v382
      %v632 = vunpack.c.h.b16 %v382
      %v633 = vunpack.c.l.b16 %v383
      %v634 = vunpack.c.h.b16 %v383
      %v635 = vunpack.c.l.b16 %v384
      %v636 = vunpack.c.h.b16 %v384
      %v637 = vunpack.c.l.b16 %v385
      %v638 = vunpack.c.h.b16 %v385
      %v639 = vunpack.c.l.b16 %v386
      %v640 = vunpack.c.h.b16 %v386
      %v641 = vunpack.c.l.b16 %v387
      %v642 = vunpack.c.h.b16 %v387
      %v643 = vunpack.c.l.b16 %v388
      %v644 = vunpack.c.h.b16 %v388
      %v645 = vunpack.c.l.b16 %v389
      %v646 = vunpack.c.h.b16 %v389
      %v647 = vunpack.c.l.b16 %v390
      %v648 = vunpack.c.h.b16 %v390
      %v649 = vunpack.c.l.b16 %v391
      %v650 = vunpack.c.h.b16 %v391
      %v651 = vunpack.c.l.b16 %v392
      %v652 = vunpack.c.h.b16 %v392
      %v653 = vpack.c.b16 %v529, %v525
      %v654 = vpack.c.b16 %v530, %v526
      %v655 = vpack.c.b16 %v531, %v527
      %v656 = vpack.c.b16 %v532, %v528
      %v657 = vpack.c.b16 %v537, %v533
      %v658 = vpack.c.b16 %v538, %v534
      %v659 = vpack.c.b16 %v539, %v535
      %v660 = vpack.c.b16 %v540, %v536
      %v661 = vpack.c.b16 %v545, %v541
      %v662 = vpack.c.b16 %v546, %v542
      %v663 = vpack.c.b16 %v547, %v543
      %v664 = vpack.c.b16 %v548, %v544
      %v665 = vpack.c.b16 %v553, %v549
      %v666 = vpack.c.b16 %v554, %v550
      %v667 = vpack.c.b16 %v555, %v551
      %v668 = vpack.c.b16 %v556, %v552
      %v669 = vpack.c.b16 %v561, %v557
      %v670 = vpack.c.b16 %v562, %v558
      %v671 = vpack.c.b16 %v563, %v559
      %v672 = vpack.c.b16 %v564, %v560
      %v673 = vpack.c.b16 %v569, %v565
      %v674 = vpack.c.b16 %v570, %v566
      %v675 = vpack.c.b16 %v571, %v567
      %v676 = vpack.c.b16 %v572, %v568
      %v677 = vpack.c.b16 %v577, %v573
      %v678 = vpack.c.b16 %v578, %v574
      %v679 = vpack.c.b16 %v579, %v575
      %v680 = vpack.c.b16 %v580, %v576
      %v681 = vpack.c.b16 %v585, %v581
      %v682 = vpack.c.b16 %v586, %v582
      %v683 = vpack.c.b16 %v587, %v583
      %v684 = vpack.c.b16 %v588, %v584
      %v685 = vpack.c.b16 %v593, %v589
      %v686 = vpack.c.b16 %v594, %v590
      %v687 = vpack.c.b16 %v595, %v591
      %v688 = vpack.c.b16 %v596, %v592
      %v689 = vpack.c.b16 %v601, %v597
      %v690 = vpack.c.b16 %v602, %v598
      %v691 = vpack.c.b16 %v603, %v599
      %v692 = vpack.c.b16 %v604, %v600
      %v693 = vpack.c.b16 %v609, %v605
      %v694 = vpack.c.b16 %v610, %v606
      %v695 = vpack.c.b16 %v611, %v607
      %v696 = vpack.c.b16 %v612, %v608
      %v697 = vpack.c.b16 %v617, %v613
      %v698 = vpack.c.b16 %v618, %v614
      %v699 = vpack.c.b16 %v619, %v615
      %v700 = vpack.c.b16 %v620, %v616
      %v701 = vpack.c.b16 %v625, %v621
      %v702 = vpack.c.b16 %v626, %v622
      %v703 = vpack.c.b16 %v627, %v623
      %v704 = vpack.c.b16 %v628, %v624
      %v705 = vpack.c.b16 %v633, %v629
      %v706 = vpack.c.b16 %v634, %v630
      %v707 = vpack.c.b16 %v635, %v631
      %v708 = vpack.c.b16 %v636, %v632
      %v709 = vpack.c.b16 %v641, %v637
      %v710 = vpack.c.b16 %v642, %v638
      %v711 = vpack.c.b16 %v643, %v639
      %v712 = vpack.c.b16 %v644, %v640
      %v713 = vpack.c.b16 %v649, %v645
      %v714 = vpack.c.b16 %v650, %v646
      %v715 = vpack.c.b16 %v651, %v647
      %v716 = vpack.c.b16 %v652, %v648
      %v845 = vunpack.c.l.b16 %v397
      %v846 = vunpack.c.l.b16 %v398
      %v847 = vunpack.c.l.b16 %v399
      %v848 = vunpack.c.l.b16 %v400
      %v849 = vunpack.c.l.b16 %v401
      %v850 = vunpack.c.l.b16 %v402
      %v851 = vunpack.c.l.b16 %v403
      %v852 = vunpack.c.l.b16 %v404
      %v853 = vunpack.c.l.b16 %v405
      %v854 = vunpack.c.l.b16 %v406
      %v855 = vunpack.c.l.b16 %v407
      %v856 = vunpack.c.l.b16 %v408
      %v857 = vunpack.c.l.b16 %v409
      %v858 = vunpack.c.l.b16 %v410
      %v859 = vunpack.c.l.b16 %v411
      %v860 = vunpack.c.l.b16 %v412
      %v861 = vunpack.c.l.b16 %v413
      %v862 = vunpack.c.l.b16 %v414
      %v863 = vunpack.c.l.b16 %v415
      %v864 = vunpack.c.l.b16 %v416
      %v865 = vunpack.c.l.b16 %v417
      %v866 = vunpack.c.l.b16 %v418
      %v867 = vunpack.c.l.b16 %v419
      %v868 = vunpack.c.l.b16 %v420
      %v869 = vunpack.c.l.b16 %v421
      %v870 = vunpack.c.l.b16 %v422
      %v871 = vunpack.c.l.b16 %v423
      %v872 = vunpack.c.l.b16 %v424
      %v873 = vunpack.c.l.b16 %v425
      %v874 = vunpack.c.l.b16 %v426
      %v875 = vunpack.c.l.b16 %v427
      %v876 = vunpack.c.l.b16 %v428
      %v877 = vunpack.c.l.b16 %v429
      %v878 = vunpack.c.l.b16 %v430
      %v879 = vunpack.c.l.b16 %v431
      %v880 = vunpack.c.l.b16 %v432
      %v881 = vunpack.c.l.b16 %v433
      %v882 = vunpack.c.l.b16 %v434
      %v883 = vunpack.c.l.b16 %v435
      %v884 = vunpack.c.l.b16 %v436
      %v885 = vunpack.c.l.b16 %v437
      %v886 = vunpack.c.l.b16 %v438
      %v887 = vunpack.c.l.b16 %v439
      %v888 = vunpack.c.l.b16 %v440
      %v889 = vunpack.c.l.b16 %v441
      %v890 = vunpack.c.l.b16 %v442
      %v891 = vunpack.c.l.b16 %v443
      %v892 = vunpack.c.l.b16 %v444
      %v893 = vunpack.c.l.b16 %v445
      %v894 = vunpack.c.l.b16 %v446
      %v895 = vunpack.c.l.b16 %v447
      %v896 = vunpack.c.l.b16 %v448
      %v897 = vunpack.c.l.b16 %v449
      %v898 = vunpack.c.l.b16 %v450
      %v899 = vunpack.c.l.b16 %v451
      %v900 = vunpack.c.l.b16 %v452
      %v901 = vunpack.c.l.b16 %v453
      %v902 = vunpack.c.l.b16 %v454
      %v903 = vunpack.c.l.b16 %v455
      %v904 = vunpack.c.l.b16 %v456
      %v905 = vunpack.c.l.b16 %v457
      %v906 = vunpack.c.l.b16 %v458
      %v907 = vunpack.c.l.b16 %v459
      %v908 = vunpack.c.l.b16 %v460
      %v909 = vpack.c.b16 %v846, %v845
      %v910 = vpack.c.b16 %v848, %v847
      %v911 = vpack.c.b16 %v850, %v849
      %v912 = vpack.c.b16 %v852, %v851
      %v913 = vpack.c.b16 %v854, %v853
      %v914 = vpack.c.b16 %v856, %v855
      %v915 = vpack.c.b16 %v858, %v857
      %v916 = vpack.c.b16 %v860, %v859
      %v917 = vpack.c.b16 %v862, %v861
      %v918 = vpack.c.b16 %v864, %v863
      %v919 = vpack.c.b16 %v866, %v865
      %v920 = vpack.c.b16 %v868, %v867
      %v921 = vpack.c.b16 %v870, %v869
      %v922 = vpack.c.b16 %v872, %v871
      %v923 = vpack.c.b16 %v874, %v873
      %v924 = vpack.c.b16 %v876, %v875
      %v925 = vpack.c.b16 %v878, %v877
      %v926 = vpack.c.b16 %v880, %v879
      %v927 = vpack.c.b16 %v882, %v881
      %v928 = vpack.c.b16 %v884, %v883
      %v929 = vpack.c.b16 %v886, %v885
      %v930 = vpack.c.b16 %v888, %v887
      %v931 = vpack.c.b16 %v890, %v889
      %v932 = vpack.c.b16 %v892, %v891
      %v933 = vpack.c.b16 %v894, %v893
      %v934 = vpack.c.b16 %v896, %v895
      %v935 = vpack.c.b16 %v898, %v897
      %v936 = vpack.c.b16 %v900, %v899
      %v937 = vpack.c.b16 %v902, %v901
      %v938 = vpack.c.b16 %v904, %v903
      %v939 = vpack.c.b16 %v906, %v905
      %v940 = vpack.c.b16 %v908, %v907
      %973 = vmatprep.subr.bf16.mxu0 0
      %974 = vmatpush1.bf16.msra.mxu0 %v916
      %975 = vmatprep.subr.bf16.mxu0 0
      %976 = vmatpush1.bf16.msra.mxu0 %v915
      %977 = vmatprep.subr.bf16.mxu0 0
      %978 = vmatpush1.bf16.msra.mxu0 %v914
      %979 = vmatprep.subr.bf16.mxu0 0
      %980 = vmatpush1.bf16.msra.mxu0 %v913
      %981 = vmatprep.subr.bf16.mxu0 0
      %982 = vmatpush1.bf16.msra.mxu0 %v912
      %983 = vmatprep.subr.bf16.mxu0 0
      %984 = vmatpush1.bf16.msra.mxu0 %v911
      %985 = vmatprep.subr.bf16.mxu0 0
      %986 = vmatpush1.bf16.msra.mxu0 %v910
      %987 = vmatprep.subr.bf16.mxu0 0
      %988 = vmatpush1.bf16.msra.mxu0 %v909
      %989 = vmatprep.subr.bf16.mxu0 0
      %990 = vmatpush2.bf16.msra.mxu0 %v924
      %991 = vmatprep.subr.bf16.mxu0 0
      %992 = vmatpush2.bf16.msra.mxu0 %v923
      %993 = vmatprep.subr.bf16.mxu0 0
      %994 = vmatpush2.bf16.msra.mxu0 %v922
      %995 = vmatprep.subr.bf16.mxu0 0
      %996 = vmatpush2.bf16.msra.mxu0 %v921
      %997 = vmatprep.subr.bf16.mxu0 0
      %998 = vmatpush2.bf16.msra.mxu0 %v920
      %999 = vmatprep.subr.bf16.mxu0 0
      %1000 = vmatpush2.bf16.msra.mxu0 %v919
      %1001 = vmatprep.subr.bf16.mxu0 0
      %1002 = vmatpush2.bf16.msra.mxu0 %v918
      %1003 = vmatprep.subr.bf16.mxu0 0
      %1004 = vmatpush2.bf16.msra.mxu0 %v917
      %1005 = vmatprep.mubr.bf16.mxu0 %v654
      %1006 = vmatmul.mubr.bf16.gmra.mxu0 %v653
      %v1007 = vpop.f32.mrf.mxu0
      %v1008 = vadd.f32 0.0, %v1007
      %v1009 = vpop.f32.mrf.mxu0
      %v1010 = vpop.f32.mrf.mxu0
      %v1011 = vadd.f32 0.0, %v1010
      %v1012 = vpop.f32.mrf.mxu0
      %1013 = vmatprep.mubr.bf16.mxu0 %v658
      %1014 = vmatmul.mubr.bf16.gmra.mxu0 %v657
      %v1015 = vpop.f32.mrf.mxu0
      %v1016 = vadd.f32 0.0, %v1015
      %v1017 = vpop.f32.mrf.mxu0
      %v1018 = vpop.f32.mrf.mxu0
      %v1019 = vadd.f32 0.0, %v1018
      %v1020 = vpop.f32.mrf.mxu0
      %1021 = vmatprep.mubr.bf16.mxu0 %v662
      %1022 = vmatmul.mubr.bf16.gmra.mxu0 %v661
      %v1023 = vpop.f32.mrf.mxu0
      %v1024 = vadd.f32 0.0, %v1023
      %v1025 = vpop.f32.mrf.mxu0
      %v1026 = vpop.f32.mrf.mxu0
      %v1027 = vadd.f32 0.0, %v1026
      %v1028 = vpop.f32.mrf.mxu0
      %1029 = vmatprep.mubr.bf16.mxu0 %v666
      %1030 = vmatmul.mubr.bf16.gmra.mxu0 %v665
      %v1031 = vpop.f32.mrf.mxu0
      %v1032 = vadd.f32 0.0, %v1031
      %v1033 = vpop.f32.mrf.mxu0
      %v1034 = vpop.f32.mrf.mxu0
      %v1035 = vadd.f32 0.0, %v1034
      %v1036 = vpop.f32.mrf.mxu0
      %1037 = vmatprep.mubr.bf16.mxu0 %v670
      %1038 = vmatmul.mubr.bf16.gmra.mxu0 %v669
      %v1039 = vpop.f32.mrf.mxu0
      %v1040 = vadd.f32 0.0, %v1039
      %v1041 = vpop.f32.mrf.mxu0
      %v1042 = vpop.f32.mrf.mxu0
      %v1043 = vadd.f32 0.0, %v1042
      %v1044 = vpop.f32.mrf.mxu0
      %1045 = vmatprep.mubr.bf16.mxu0 %v674
      %1046 = vmatmul.mubr.bf16.gmra.mxu0 %v673
      %v1047 = vpop.f32.mrf.mxu0
      %v1048 = vadd.f32 0.0, %v1047
      %v1049 = vpop.f32.mrf.mxu0
      %v1050 = vpop.f32.mrf.mxu0
      %v1051 = vadd.f32 0.0, %v1050
      %v1052 = vpop.f32.mrf.mxu0
      %1053 = vmatprep.mubr.bf16.mxu0 %v678
      %1054 = vmatmul.mubr.bf16.gmra.mxu0 %v677
      %v1055 = vpop.f32.mrf.mxu0
      %v1056 = vadd.f32 0.0, %v1055
      %v1057 = vpop.f32.mrf.mxu0
      %v1058 = vpop.f32.mrf.mxu0
      %v1059 = vadd.f32 0.0, %v1058
      %v1060 = vpop.f32.mrf.mxu0
      %1061 = vmatprep.mubr.bf16.mxu0 %v682
      %1062 = vmatmul.mubr.bf16.gmra.mxu0 %v681
      %v1063 = vpop.f32.mrf.mxu0
      %v1064 = vadd.f32 0.0, %v1063
      %v1065 = vpop.f32.mrf.mxu0
      %v1066 = vpop.f32.mrf.mxu0
      %v1067 = vadd.f32 0.0, %v1066
      %v1068 = vpop.f32.mrf.mxu0
      %1069 = vmatprep.mubr.bf16.mxu0 %v686
      %1070 = vmatmul.mubr.bf16.gmra.mxu0 %v685
      %v1071 = vpop.f32.mrf.mxu0
      %v1072 = vadd.f32 0.0, %v1071
      %v1073 = vpop.f32.mrf.mxu0
      %v1074 = vpop.f32.mrf.mxu0
      %v1075 = vadd.f32 0.0, %v1074
      %v1076 = vpop.f32.mrf.mxu0
      %1077 = vmatprep.mubr.bf16.mxu0 %v690
      %1078 = vmatmul.mubr.bf16.gmra.mxu0 %v689
      %v1079 = vpop.f32.mrf.mxu0
      %v1080 = vadd.f32 0.0, %v1079
      %v1081 = vpop.f32.mrf.mxu0
      %v1082 = vpop.f32.mrf.mxu0
      %v1083 = vadd.f32 0.0, %v1082
      %v1084 = vpop.f32.mrf.mxu0
      %1085 = vmatprep.mubr.bf16.mxu0 %v694
      %1086 = vmatmul.mubr.bf16.gmra.mxu0 %v693
      %v1087 = vpop.f32.mrf.mxu0
      %v1088 = vadd.f32 0.0, %v1087
      %v1089 = vpop.f32.mrf.mxu0
      %v1090 = vpop.f32.mrf.mxu0
      %v1091 = vadd.f32 0.0, %v1090
      %v1092 = vpop.f32.mrf.mxu0
      %1093 = vmatprep.mubr.bf16.mxu0 %v698
      %1094 = vmatmul.mubr.bf16.gmra.mxu0 %v697
      %v1095 = vpop.f32.mrf.mxu0
      %v1096 = vadd.f32 0.0, %v1095
      %v1097 = vpop.f32.mrf.mxu0
      %v1098 = vpop.f32.mrf.mxu0
      %v1099 = vadd.f32 0.0, %v1098
      %v1100 = vpop.f32.mrf.mxu0
      %1101 = vmatprep.mubr.bf16.mxu0 %v702
      %1102 = vmatmul.mubr.bf16.gmra.mxu0 %v701
      %v1103 = vpop.f32.mrf.mxu0
      %v1104 = vadd.f32 0.0, %v1103
      %v1105 = vpop.f32.mrf.mxu0
      %v1106 = vpop.f32.mrf.mxu0
      %v1107 = vadd.f32 0.0, %v1106
      %v1108 = vpop.f32.mrf.mxu0
      %1109 = vmatprep.mubr.bf16.mxu0 %v706
      %1110 = vmatmul.mubr.bf16.gmra.mxu0 %v705
      %v1111 = vpop.f32.mrf.mxu0
      %v1112 = vadd.f32 0.0, %v1111
      %v1113 = vpop.f32.mrf.mxu0
      %v1114 = vpop.f32.mrf.mxu0
      %v1115 = vadd.f32 0.0, %v1114
      %v1116 = vpop.f32.mrf.mxu0
      %1117 = vmatprep.mubr.bf16.mxu0 %v710
      %1118 = vmatmul.mubr.bf16.gmra.mxu0 %v709
      %v1119 = vpop.f32.mrf.mxu0
      %v1120 = vadd.f32 0.0, %v1119
      %v1121 = vpop.f32.mrf.mxu0
      %v1122 = vpop.f32.mrf.mxu0
      %v1123 = vadd.f32 0.0, %v1122
      %v1124 = vpop.f32.mrf.mxu0
      %1125 = vmatprep.mubr.bf16.mxu0 %v714
      %1126 = vmatmul.mubr.bf16.gmra.mxu0 %v713
      %v1127 = vpop.f32.mrf.mxu0
      %v1128 = vadd.f32 0.0, %v1127
      %v1129 = vpop.f32.mrf.mxu0
      %v1130 = vpop.f32.mrf.mxu0
      %v1131 = vadd.f32 0.0, %v1130
      %v1132 = vpop.f32.mrf.mxu0
      %1133 = vdwg.mxu0
      %1134 = vmatprep.subr.bf16.mxu0 0
      %1135 = vmatpush1.bf16.msra.mxu0 %v932
      %1136 = vmatprep.subr.bf16.mxu0 0
      %1137 = vmatpush1.bf16.msra.mxu0 %v931
      %1138 = vmatprep.subr.bf16.mxu0 0
      %1139 = vmatpush1.bf16.msra.mxu0 %v930
      %1140 = vmatprep.subr.bf16.mxu0 0
      %1141 = vmatpush1.bf16.msra.mxu0 %v929
      %1142 = vmatprep.subr.bf16.mxu0 0
      %1143 = vmatpush1.bf16.msra.mxu0 %v928
      %1144 = vmatprep.subr.bf16.mxu0 0
      %1145 = vmatpush1.bf16.msra.mxu0 %v927
      %1146 = vmatprep.subr.bf16.mxu0 0
      %1147 = vmatpush1.bf16.msra.mxu0 %v926
      %1148 = vmatprep.subr.bf16.mxu0 0
      %1149 = vmatpush1.bf16.msra.mxu0 %v925
      %1150 = vmatprep.subr.bf16.mxu0 0
      %1151 = vmatpush2.bf16.msra.mxu0 %v940
      %1152 = vmatprep.subr.bf16.mxu0 0
      %1153 = vmatpush2.bf16.msra.mxu0 %v939
      %1154 = vmatprep.subr.bf16.mxu0 0
      %1155 = vmatpush2.bf16.msra.mxu0 %v938
      %1156 = vmatprep.subr.bf16.mxu0 0
      %1157 = vmatpush2.bf16.msra.mxu0 %v937
      %1158 = vmatprep.subr.bf16.mxu0 0
      %1159 = vmatpush2.bf16.msra.mxu0 %v936
      %1160 = vmatprep.subr.bf16.mxu0 0
      %1161 = vmatpush2.bf16.msra.mxu0 %v935
      %1162 = vmatprep.subr.bf16.mxu0 0
      %1163 = vmatpush2.bf16.msra.mxu0 %v934
      %1164 = vmatprep.subr.bf16.mxu0 0
      %1165 = vmatpush2.bf16.msra.mxu0 %v933
      %1166 = vmatprep.mubr.bf16.mxu0 %v656
      %1167 = vmatmul.mubr.bf16.gmra.mxu0 %v655
      %v1168 = vpop.f32.mrf.mxu0
      %v1169 = vadd.f32 %v1008, %v1168
      %v1170 = vpop.f32.mrf.mxu0
      %v1171 = vpop.f32.mrf.mxu0
      %v1172 = vadd.f32 %v1011, %v1171
      %v1173 = vpop.f32.mrf.mxu0
      %1174 = vmatprep.mubr.bf16.mxu0 %v660
      %1175 = vmatmul.mubr.bf16.gmra.mxu0 %v659
      %v1176 = vpop.f32.mrf.mxu0
      %v1177 = vadd.f32 %v1016, %v1176
      %v1178 = vpop.f32.mrf.mxu0
      %v1179 = vpop.f32.mrf.mxu0
      %v1180 = vadd.f32 %v1019, %v1179
      %v1181 = vpop.f32.mrf.mxu0
      %1182 = vmatprep.mubr.bf16.mxu0 %v664
      %1183 = vmatmul.mubr.bf16.gmra.mxu0 %v663
      %v1184 = vpop.f32.mrf.mxu0
      %v1185 = vadd.f32 %v1024, %v1184
      %v1186 = vpop.f32.mrf.mxu0
      %v1187 = vpop.f32.mrf.mxu0
      %v1188 = vadd.f32 %v1027, %v1187
      %v1189 = vpop.f32.mrf.mxu0
      %1190 = vmatprep.mubr.bf16.mxu0 %v668
      %1191 = vmatmul.mubr.bf16.gmra.mxu0 %v667
      %v1192 = vpop.f32.mrf.mxu0
      %v1193 = vadd.f32 %v1032, %v1192
      %v1194 = vpop.f32.mrf.mxu0
      %v1195 = vpop.f32.mrf.mxu0
      %v1196 = vadd.f32 %v1035, %v1195
      %v1197 = vpop.f32.mrf.mxu0
      %1198 = vmatprep.mubr.bf16.mxu0 %v672
      %1199 = vmatmul.mubr.bf16.gmra.mxu0 %v671
      %v1200 = vpop.f32.mrf.mxu0
      %v1201 = vadd.f32 %v1040, %v1200
      %v1202 = vpop.f32.mrf.mxu0
      %v1203 = vpop.f32.mrf.mxu0
      %v1204 = vadd.f32 %v1043, %v1203
      %v1205 = vpop.f32.mrf.mxu0
      %1206 = vmatprep.mubr.bf16.mxu0 %v676
      %1207 = vmatmul.mubr.bf16.gmra.mxu0 %v675
      %v1208 = vpop.f32.mrf.mxu0
      %v1209 = vadd.f32 %v1048, %v1208
      %v1210 = vpop.f32.mrf.mxu0
      %v1211 = vpop.f32.mrf.mxu0
      %v1212 = vadd.f32 %v1051, %v1211
      %v1213 = vpop.f32.mrf.mxu0
      %1214 = vmatprep.mubr.bf16.mxu0 %v680
      %1215 = vmatmul.mubr.bf16.gmra.mxu0 %v679
      %v1216 = vpop.f32.mrf.mxu0
      %v1217 = vadd.f32 %v1056, %v1216
      %v1218 = vpop.f32.mrf.mxu0
      %v1219 = vpop.f32.mrf.mxu0
      %v1220 = vadd.f32 %v1059, %v1219
      %v1221 = vpop.f32.mrf.mxu0
      %1222 = vmatprep.mubr.bf16.mxu0 %v684
      %1223 = vmatmul.mubr.bf16.gmra.mxu0 %v683
      %v1224 = vpop.f32.mrf.mxu0
      %v1225 = vadd.f32 %v1064, %v1224
      %v1226 = vpop.f32.mrf.mxu0
      %v1227 = vpop.f32.mrf.mxu0
      %v1228 = vadd.f32 %v1067, %v1227
      %v1229 = vpop.f32.mrf.mxu0
      %1230 = vmatprep.mubr.bf16.mxu0 %v688
      %1231 = vmatmul.mubr.bf16.gmra.mxu0 %v687
      %v1232 = vpop.f32.mrf.mxu0
      %v1233 = vadd.f32 %v1072, %v1232
      %v1234 = vpop.f32.mrf.mxu0
      %v1235 = vpop.f32.mrf.mxu0
      %v1236 = vadd.f32 %v1075, %v1235
      %v1237 = vpop.f32.mrf.mxu0
      %1238 = vmatprep.mubr.bf16.mxu0 %v692
      %1239 = vmatmul.mubr.bf16.gmra.mxu0 %v691
      %v1240 = vpop.f32.mrf.mxu0
      %v1241 = vadd.f32 %v1080, %v1240
      %v1242 = vpop.f32.mrf.mxu0
      %v1243 = vpop.f32.mrf.mxu0
      %v1244 = vadd.f32 %v1083, %v1243
      %v1245 = vpop.f32.mrf.mxu0
      %1246 = vmatprep.mubr.bf16.mxu0 %v696
      %1247 = vmatmul.mubr.bf16.gmra.mxu0 %v695
      %v1248 = vpop.f32.mrf.mxu0
      %v1249 = vadd.f32 %v1088, %v1248
      %v1250 = vpop.f32.mrf.mxu0
      %v1251 = vpop.f32.mrf.mxu0
      %v1252 = vadd.f32 %v1091, %v1251
      %v1253 = vpop.f32.mrf.mxu0
      %1254 = vmatprep.mubr.bf16.mxu0 %v700
      %1255 = vmatmul.mubr.bf16.gmra.mxu0 %v699
      %v1256 = vpop.f32.mrf.mxu0
      %v1257 = vadd.f32 %v1096, %v1256
      %v1258 = vpop.f32.mrf.mxu0
      %v1259 = vpop.f32.mrf.mxu0
      %v1260 = vadd.f32 %v1099, %v1259
      %v1261 = vpop.f32.mrf.mxu0
      %1262 = vmatprep.mubr.bf16.mxu0 %v704
      %1263 = vmatmul.mubr.bf16.gmra.mxu0 %v703
      %v1264 = vpop.f32.mrf.mxu0
      %v1265 = vadd.f32 %v1104, %v1264
      %v1266 = vpop.f32.mrf.mxu0
      %v1267 = vpop.f32.mrf.mxu0
      %v1268 = vadd.f32 %v1107, %v1267
      %v1269 = vpop.f32.mrf.mxu0
      %1270 = vmatprep.mubr.bf16.mxu0 %v708
      %1271 = vmatmul.mubr.bf16.gmra.mxu0 %v707
      %v1272 = vpop.f32.mrf.mxu0
      %v1273 = vadd.f32 %v1112, %v1272
      %v1274 = vpop.f32.mrf.mxu0
      %v1275 = vpop.f32.mrf.mxu0
      %v1276 = vadd.f32 %v1115, %v1275
      %v1277 = vpop.f32.mrf.mxu0
      %1278 = vmatprep.mubr.bf16.mxu0 %v712
      %1279 = vmatmul.mubr.bf16.gmra.mxu0 %v711
      %v1280 = vpop.f32.mrf.mxu0
      %v1281 = vadd.f32 %v1120, %v1280
      %v1282 = vpop.f32.mrf.mxu0
      %v1283 = vpop.f32.mrf.mxu0
      %v1284 = vadd.f32 %v1123, %v1283
      %v1285 = vpop.f32.mrf.mxu0
      %1286 = vmatprep.mubr.bf16.mxu0 %v716
      %1287 = vmatmul.mubr.bf16.gmra.mxu0 %v715
      %v1288 = vpop.f32.mrf.mxu0
      %v1289 = vadd.f32 %v1128, %v1288
      %v1290 = vpop.f32.mrf.mxu0
      %v1291 = vpop.f32.mrf.mxu0
      %v1292 = vadd.f32 %v1131, %v1291
      %v1293 = vpop.f32.mrf.mxu0
      %1294 = vdwg.mxu0
      %v1295 = vadd.f32 %v297, %v1169
      %v1296 = vadd.f32 %v298, %v1172
      %v1297 = vadd.f32 %v299, %v1177
      %v1298 = vadd.f32 %v300, %v1180
      %v1299 = vadd.f32 %v301, %v1185
      %v1300 = vadd.f32 %v302, %v1188
      %v1301 = vadd.f32 %v303, %v1193
      %v1302 = vadd.f32 %v304, %v1196
      %v1303 = vadd.f32 %v305, %v1201
      %v1304 = vadd.f32 %v306, %v1204
      %v1305 = vadd.f32 %v307, %v1209
      %v1306 = vadd.f32 %v308, %v1212
      %v1307 = vadd.f32 %v309, %v1217
      %v1308 = vadd.f32 %v310, %v1220
      %v1309 = vadd.f32 %v311, %v1225
      %v1310 = vadd.f32 %v312, %v1228
      %v1311 = vadd.f32 %v313, %v1233
      %v1312 = vadd.f32 %v314, %v1236
      %v1313 = vadd.f32 %v315, %v1241
      %v1314 = vadd.f32 %v316, %v1244
      %v1315 = vadd.f32 %v317, %v1249
      %v1316 = vadd.f32 %v318, %v1252
      %v1317 = vadd.f32 %v319, %v1257
      %v1318 = vadd.f32 %v320, %v1260
      %v1319 = vadd.f32 %v321, %v1265
      %v1320 = vadd.f32 %v322, %v1268
      %v1321 = vadd.f32 %v323, %v1273
      %v1322 = vadd.f32 %v324, %v1276
      %v1323 = vadd.f32 %v325, %v1281
      %v1324 = vadd.f32 %v326, %v1284
      %v1325 = vadd.f32 %v327, %v1289
      %v1326 = vadd.f32 %v328, %v1292
      %1327 = vst [vmem:[#allocation2] sm:$0xff] %v1295
      %1328 = vst [vmem:[#allocation2 + $0x8] sm:$0xff] %v1296
      %1329 = vst [vmem:[#allocation2 + $0x10] sm:$0xff] %v1297
      %1330 = vst [vmem:[#allocation2 + $0x18] sm:$0xff] %v1298
      %1331 = vst [vmem:[#allocation2 + $0x20] sm:$0xff] %v1299
      %1332 = vst [vmem:[#allocation2 + $0x28] sm:$0xff] %v1300
      %1333 = vst [vmem:[#allocation2 + $0x30] sm:$0xff] %v1301
      %1334 = vst [vmem:[#allocation2 + $0x38] sm:$0xff] %v1302
      %1335 = vst [vmem:[#allocation2 + $0x40] sm:$0xff] %v1303
      %1336 = vst [vmem:[#allocation2 + $0x48] sm:$0xff] %v1304
      %1337 = vst [vmem:[#allocation2 + $0x50] sm:$0xff] %v1305
      %1338 = vst [vmem:[#allocation2 + $0x58] sm:$0xff] %v1306
      %1339 = vst [vmem:[#allocation2 + $0x60] sm:$0xff] %v1307
      %1340 = vst [vmem:[#allocation2 + $0x68] sm:$0xff] %v1308
      %1341 = vst [vmem:[#allocation2 + $0x70] sm:$0xff] %v1309
      %1342 = vst [vmem:[#allocation2 + $0x78] sm:$0xff] %v1310
      %1343 = vst [vmem:[#allocation2 + $0x80] sm:$0xff] %v1311
      %1344 = vst [vmem:[#allocation2 + $0x88] sm:$0xff] %v1312
      %1345 = vst [vmem:[#allocation2 + $0x90] sm:$0xff] %v1313
      %1346 = vst [vmem:[#allocation2 + $0x98] sm:$0xff] %v1314
      %1347 = vst [vmem:[#allocation2 + $0xa0] sm:$0xff] %v1315
      %1348 = vst [vmem:[#allocation2 + $0xa8] sm:$0xff] %v1316
      %1349 = vst [vmem:[#allocation2 + $0xb0] sm:$0xff] %v1317
      %1350 = vst [vmem:[#allocation2 + $0xb8] sm:$0xff] %v1318
      %1351 = vst [vmem:[#allocation2 + $0xc0] sm:$0xff] %v1319
      %1352 = vst [vmem:[#allocation2 + $0xc8] sm:$0xff] %v1320
      %1353 = vst [vmem:[#allocation2 + $0xd0] sm:$0xff] %v1321
      %1354 = vst [vmem:[#allocation2 + $0xd8] sm:$0xff] %v1322
      %1355 = vst [vmem:[#allocation2 + $0xe0] sm:$0xff] %v1323
      %1356 = vst [vmem:[#allocation2 + $0xe8] sm:$0xff] %v1324
      %1357 = vst [vmem:[#allocation2 + $0xf0] sm:$0xff] %v1325
      %1358 = vst [vmem:[#allocation2 + $0xf8] sm:$0xff] %v1326
      // Predicated region
      $region45: #{vs_forward.5} parent=39 // pred_check
        %p1359 = pneg %p260
      $region46: #{vs_forward.5} parent=39 // pred_check_branch
        %1361 = sbr.rel (%p1359) target = $region48
      $region47: #{vs_forward.5} parent=39 // pred_region
        %v1362 = vld [vmem:[#allocation2] sm:$0xff]
        %v1363 = vld [vmem:[#allocation2 + $0x8] sm:$0xff]
        %v1364 = vld [vmem:[#allocation2 + $0x10] sm:$0xff]
        %v1365 = vld [vmem:[#allocation2 + $0x18] sm:$0xff]
        %v1366 = vld [vmem:[#allocation2 + $0x20] sm:$0xff]
        %v1367 = vld [vmem:[#allocation2 + $0x28] sm:$0xff]
        %v1368 = vld [vmem:[#allocation2 + $0x30] sm:$0xff]
        %v1369 = vld [vmem:[#allocation2 + $0x38] sm:$0xff]
        %v1370 = vld [vmem:[#allocation2 + $0x40] sm:$0xff]
        %v1371 = vld [vmem:[#allocation2 + $0x48] sm:$0xff]
        %v1372 = vld [vmem:[#allocation2 + $0x50] sm:$0xff]
        %v1373 = vld [vmem:[#allocation2 + $0x58] sm:$0xff]
        %v1374 = vld [vmem:[#allocation2 + $0x60] sm:$0xff]
        %v1375 = vld [vmem:[#allocation2 + $0x68] sm:$0xff]
        %v1376 = vld [vmem:[#allocation2 + $0x70] sm:$0xff]
        %v1377 = vld [vmem:[#allocation2 + $0x78] sm:$0xff]
        %v1378 = vld [vmem:[#allocation2 + $0x80] sm:$0xff]
        %v1379 = vld [vmem:[#allocation2 + $0x88] sm:$0xff]
        %v1380 = vld [vmem:[#allocation2 + $0x90] sm:$0xff]
        %v1381 = vld [vmem:[#allocation2 + $0x98] sm:$0xff]
        %v1382 = vld [vmem:[#allocation2 + $0xa0] sm:$0xff]
        %v1383 = vld [vmem:[#allocation2 + $0xa8] sm:$0xff]
        %v1384 = vld [vmem:[#allocation2 + $0xb0] sm:$0xff]
        %v1385 = vld [vmem:[#allocation2 + $0xb8] sm:$0xff]
        %v1386 = vld [vmem:[#allocation2 + $0xc0] sm:$0xff]
        %v1387 = vld [vmem:[#allocation2 + $0xc8] sm:$0xff]
        %v1388 = vld [vmem:[#allocation2 + $0xd0] sm:$0xff]
        %v1389 = vld [vmem:[#allocation2 + $0xd8] sm:$0xff]
        %v1390 = vld [vmem:[#allocation2 + $0xe0] sm:$0xff]
        %v1391 = vld [vmem:[#allocation2 + $0xe8] sm:$0xff]
        %v1392 = vld [vmem:[#allocation2 + $0xf0] sm:$0xff]
        %v1393 = vld [vmem:[#allocation2 + $0xf8] sm:$0xff]
        %v1394 = vld [vmem:[%s2] sm:$0x1]
        %v1396 = vlaneseq
        %v1397 = vshrl.u32 %v1396, 7
        %v1398 = vsub.s32 0, %v1397
        %v1399 = vrot.slane %v1394, %v1398
        %v1401 = vadd.f32 %v1362, %v1399
        %v1402 = vadd.f32 %v1363, %v1399
        %v1403 = vadd.f32 %v1364, %v1399
        %v1404 = vadd.f32 %v1365, %v1399
        %v1405 = vadd.f32 %v1366, %v1399
        %v1406 = vadd.f32 %v1367, %v1399
        %v1407 = vadd.f32 %v1368, %v1399
        %v1408 = vadd.f32 %v1369, %v1399
        %v1409 = vadd.f32 %v1370, %v1399
        %v1410 = vadd.f32 %v1371, %v1399
        %v1411 = vadd.f32 %v1372, %v1399
        %v1412 = vadd.f32 %v1373, %v1399
        %v1413 = vadd.f32 %v1374, %v1399
        %v1414 = vadd.f32 %v1375, %v1399
        %v1415 = vadd.f32 %v1376, %v1399
        %v1416 = vadd.f32 %v1377, %v1399
        %v1417 = vadd.f32 %v1378, %v1399
        %v1418 = vadd.f32 %v1379, %v1399
        %v1419 = vadd.f32 %v1380, %v1399
        %v1420 = vadd.f32 %v1381, %v1399
        %v1421 = vadd.f32 %v1382, %v1399
        %v1422 = vadd.f32 %v1383, %v1399
        %v1423 = vadd.f32 %v1384, %v1399
        %v1424 = vadd.f32 %v1385, %v1399
        %v1425 = vadd.f32 %v1386, %v1399
        %v1426 = vadd.f32 %v1387, %v1399
        %v1427 = vadd.f32 %v1388, %v1399
        %v1428 = vadd.f32 %v1389, %v1399
        %v1429 = vadd.f32 %v1390, %v1399
        %v1430 = vadd.f32 %v1391, %v1399
        %v1431 = vadd.f32 %v1392, %v1399
        %v1432 = vadd.f32 %v1393, %v1399
        %v1433 = vld [vmem:[%s3] sm:$0x1]
        %v1435 = vlaneseq
        %v1436 = vshrl.u32 %v1435, 7
        %v1437 = vsub.s32 0, %v1436
        %v1438 = vrot.slane %v1433, %v1437
        %v1440 = vmul.f32 %v1401, %v1438
        %v1441 = vmul.f32 %v1402, %v1438
        %v1442 = vmul.f32 %v1403, %v1438
        %v1443 = vmul.f32 %v1404, %v1438
        %v1444 = vmul.f32 %v1405, %v1438
        %v1445 = vmul.f32 %v1406, %v1438
        %v1446 = vmul.f32 %v1407, %v1438
        %v1447 = vmul.f32 %v1408, %v1438
        %v1448 = vmul.f32 %v1409, %v1438
        %v1449 = vmul.f32 %v1410, %v1438
        %v1450 = vmul.f32 %v1411, %v1438
        %v1451 = vmul.f32 %v1412, %v1438
        %v1452 = vmul.f32 %v1413, %v1438
        %v1453 = vmul.f32 %v1414, %v1438
        %v1454 = vmul.f32 %v1415, %v1438
        %v1455 = vmul.f32 %v1416, %v1438
        %v1456 = vmul.f32 %v1417, %v1438
        %v1457 = vmul.f32 %v1418, %v1438
        %v1458 = vmul.f32 %v1419, %v1438
        %v1459 = vmul.f32 %v1420, %v1438
        %v1460 = vmul.f32 %v1421, %v1438
        %v1461 = vmul.f32 %v1422, %v1438
        %v1462 = vmul.f32 %v1423, %v1438
        %v1463 = vmul.f32 %v1424, %v1438
        %v1464 = vmul.f32 %v1425, %v1438
        %v1465 = vmul.f32 %v1426, %v1438
        %v1466 = vmul.f32 %v1427, %v1438
        %v1467 = vmul.f32 %v1428, %v1438
        %v1468 = vmul.f32 %v1429, %v1438
        %v1469 = vmul.f32 %v1430, %v1438
        %v1470 = vmul.f32 %v1431, %v1438
        %v1471 = vmul.f32 %v1432, %v1438
        %v1472 = vld [vmem:[%s4] sm:$0x1]
        %v1474 = vlaneseq
        %v1475 = vshrl.u32 %v1474, 7
        %v1476 = vsub.s32 0, %v1475
        %v1477 = vrot.slane %v1472, %v1476
        %v1479 = vadd.f32 %v1440, %v1477
        %v1480 = vadd.f32 %v1441, %v1477
        %v1481 = vadd.f32 %v1442, %v1477
        %v1482 = vadd.f32 %v1443, %v1477
        %v1483 = vadd.f32 %v1444, %v1477
        %v1484 = vadd.f32 %v1445, %v1477
        %v1485 = vadd.f32 %v1446, %v1477
        %v1486 = vadd.f32 %v1447, %v1477
        %v1487 = vadd.f32 %v1448, %v1477
        %v1488 = vadd.f32 %v1449, %v1477
        %v1489 = vadd.f32 %v1450, %v1477
        %v1490 = vadd.f32 %v1451, %v1477
        %v1491 = vadd.f32 %v1452, %v1477
        %v1492 = vadd.f32 %v1453, %v1477
        %v1493 = vadd.f32 %v1454, %v1477
        %v1494 = vadd.f32 %v1455, %v1477
        %v1495 = vadd.f32 %v1456, %v1477
        %v1496 = vadd.f32 %v1457, %v1477
        %v1497 = vadd.f32 %v1458, %v1477
        %v1498 = vadd.f32 %v1459, %v1477
        %v1499 = vadd.f32 %v1460, %v1477
        %v1500 = vadd.f32 %v1461, %v1477
        %v1501 = vadd.f32 %v1462, %v1477
        %v1502 = vadd.f32 %v1463, %v1477
        %v1503 = vadd.f32 %v1464, %v1477
        %v1504 = vadd.f32 %v1465, %v1477
        %v1505 = vadd.f32 %v1466, %v1477
        %v1506 = vadd.f32 %v1467, %v1477
        %v1507 = vadd.f32 %v1468, %v1477
        %v1508 = vadd.f32 %v1469, %v1477
        %v1509 = vadd.f32 %v1470, %v1477
        %v1510 = vadd.f32 %v1471, %v1477
        %1511 = vst [vmem:[%s257] sm:$0xff] %v1479
        %1512 = vst [vmem:[%s257 + $0x8] sm:$0xff] %v1480
        %1513 = vst [vmem:[%s257 + $0x10] sm:$0xff] %v1481
        %1514 = vst [vmem:[%s257 + $0x18] sm:$0xff] %v1482
        %1515 = vst [vmem:[%s257 + $0x20] sm:$0xff] %v1483
        %1516 = vst [vmem:[%s257 + $0x28] sm:$0xff] %v1484
        %1517 = vst [vmem:[%s257 + $0x30] sm:$0xff] %v1485
        %1518 = vst [vmem:[%s257 + $0x38] sm:$0xff] %v1486
        %1519 = vst [vmem:[%s257 + $0x40] sm:$0xff] %v1487
        %1520 = vst [vmem:[%s257 + $0x48] sm:$0xff] %v1488
        %1521 = vst [vmem:[%s257 + $0x50] sm:$0xff] %v1489
        %1522 = vst [vmem:[%s257 + $0x58] sm:$0xff] %v1490
        %1523 = vst [vmem:[%s257 + $0x60] sm:$0xff] %v1491
        %1524 = vst [vmem:[%s257 + $0x68] sm:$0xff] %v1492
        %1525 = vst [vmem:[%s257 + $0x70] sm:$0xff] %v1493
        %1526 = vst [vmem:[%s257 + $0x78] sm:$0xff] %v1494
        %1527 = vst [vmem:[%s257 + $0x80] sm:$0xff] %v1495
        %1528 = vst [vmem:[%s257 + $0x88] sm:$0xff] %v1496
        %1529 = vst [vmem:[%s257 + $0x90] sm:$0xff] %v1497
        %1530 = vst [vmem:[%s257 + $0x98] sm:$0xff] %v1498
        %1531 = vst [vmem:[%s257 + $0xa0] sm:$0xff] %v1499
        %1532 = vst [vmem:[%s257 + $0xa8] sm:$0xff] %v1500
        %1533 = vst [vmem:[%s257 + $0xb0] sm:$0xff] %v1501
        %1534 = vst [vmem:[%s257 + $0xb8] sm:$0xff] %v1502
        %1535 = vst [vmem:[%s257 + $0xc0] sm:$0xff] %v1503
        %1536 = vst [vmem:[%s257 + $0xc8] sm:$0xff] %v1504
        %1537 = vst [vmem:[%s257 + $0xd0] sm:$0xff] %v1505
        %1538 = vst [vmem:[%s257 + $0xd8] sm:$0xff] %v1506
        %1539 = vst [vmem:[%s257 + $0xe0] sm:$0xff] %v1507
        %1540 = vst [vmem:[%s257 + $0xe8] sm:$0xff] %v1508
        %1541 = vst [vmem:[%s257 + $0xf0] sm:$0xff] %v1509
        %1542 = vst [vmem:[%s257 + $0xf8] sm:$0xff] %v1510
      $region48: #{vs_forward.5} parent=39 // pred_fallthru
        _
      %s1543 = smul.u32 32, %s20
      %p1544 = scmp.lt.s32.totalorder %s1543, 63
      %s1545 = scalar_select %p1544, %s1543, 63
      %s1546 = smul.addr %s1545, 8
      %s1547 = scalar_lea.vmem %s5, %s1546
      // Predicated region
      $region49: #{vs_forward.5} parent=39 // pred_check
        %p1548 = pneg %p158
      $region50: #{vs_forward.5} parent=39 // pred_check_branch
        %1550 = sbr.rel (%p1548) target = $region52
      $region51: #{vs_forward.5} parent=39 // pred_region
        %s1551 = smul.u32 32, %s20
      $region52: #{vs_forward.5} parent=39 // pred_fallthru
        _
    $region40: #{vs_forward.5} parent=5 // pred_fallthru
      _
    %p1552 = scmp.le.s32.totalorder 2, %s11
    // Predicated region
    $region53: #{vs_forward.5} parent=5 // pred_check
      %p1553 = pneg %p1552
    $region54: #{vs_forward.5} parent=5 // pred_check_branch
      %1555 = sbr.rel (%p1553) target = $region56
    $region55: #{vs_forward.5} parent=5 // pred_region
      %s1556 = ssub.s32 %s11, 2
      // Predicated region
      $region57: #{vs_forward.5} parent=55 // pred_check
        %p1557 = pneg %p164
      $region58: #{vs_forward.5} parent=55 // pred_check_branch
        %1559 = sbr.rel (%p1557) target = $region60
      $region59: #{vs_forward.5} parent=55 // pred_region
        %s1560 = smul.u32 32, %s22
        %p1561 = scmp.lt.s32.totalorder %s1560, 63
        %s1562 = scalar_select %p1561, %s1560, 63
        %s1563 = smul.addr %s1562, 8
        %s1564 = scalar_lea.vmem %s5, %s1563
      $region60: #{vs_forward.5} parent=55 // pred_fallthru
        _
    $region56: #{vs_forward.5} parent=5 // pred_fallthru
      _
  $region6: #{vs_forward.5} parent=0 // loop_footer
    %s15 = sadd.s32 1, %s11
  $region7: #{vs_forward.5} parent=0 // loop_footer_branch
    %10 = sbr.rel target = $region3
  $region8: #{vs_forward.5} parent=0 // loop_exit
    _

// kernel: vs_forward.4
$region0: #{vs_forward.4}
  #allocation0 [shape = 'u32[]', space=smem, size = 0x4, offset = 0x4, fixed_abs, tag = 'smem constant byte address 0x4 - core index']
  #allocation1 [shape = 'u32[144,128]{1,0:T(1,128)}', space=vmem, size = 0x12000, scoped, tag = 'internal scratch']
  #allocation2 [shape = 'f32[256,128]{1,0:T(8,128)}', space=vmem, size = 0x20000, scoped, tag = 'scratch operand']
  %s0 = inlined_call_operand.hbm [shape: bf16[512,512], index: 0, kind: input, shape index: {}]
  %s1 = inlined_call_operand.vmem [shape: bf16[512,128], index: 1, kind: input, shape index: {}]
  %s2 = inlined_call_operand.vmem [shape: f32[1,128], index: 2, kind: input, shape index: {}]
  %s3 = inlined_call_operand.vmem [shape: bf16[128,128], index: 3, kind: input, shape index: {}]
  %s4 = inlined_call_operand.vmem [shape: bf16[512,128], index: 4, kind: output, shape index: {}]
  %s5 = sld [smem:[#allocation0]]
  $region61: #{vs_forward.4} parent=0
    _
  %s7 = ssub.s32 1, %s5
  %s8 = scalar_select 0, %s7, %s5
  $region1: #{vs_forward.4} parent=0
    #allocation3 [shape = 'u8[524288]{0}', space=vmem, size = 0x80000, scoped, tag = 'input window, operand 0']
    #allocation4 [shape = 's32[2]{0}', space=sflag, size = 0x8, scoped, tag = 'scoped memory for vs_forward.4']
    %9 = vsyncpa [#allocation4], 0
    %s10 = scalar_lea.sflag [#allocation4], 1
    %11 = vsyncpa %s10, 0
    loop: start=0, step=1, limit=4
    $region2: #{vs_forward.4} parent=1 // loop_pre_header
      _
    $region3: #{vs_forward.4} parent=1 // loop_header
      %s13 = sphi 0, %s17
      %p14 = scmp.ge.s32.totalorder %s13, 4
      %s20 = sphi 0, %s32
      %s21 = sphi 0, %s28
      %s22 = sphi 0, %s20
      %s23 = sphi 0, %s21
      %s24 = sphi 0, %s22
      %s25 = sphi 0, %s23
      %s37 = sphi 0, %s39
      %s40 = sphi 0, %s37
      %s41 = sphi 0, %s40
      %s57 = sphi 0, %s41
      %s61 = sphi 0, %s61
      %s63 = sphi 0, %s61
      %s64 = sphi 0, %s63
      %s78 = sphi 0, %s64
      %s82 = sphi 0, %s82
      %s84 = sphi 0, %s82
      %s85 = sphi 0, %s84
      %s99 = sphi 0, %s85
      %s103 = sphi 0, %s103
      %s105 = sphi 0, %s103
      %s106 = sphi 0, %s105
      %s120 = sphi 0, %s106
      %s126 = sphi 0, %s128
      %s129 = sphi 0, %s126
      %s130 = sphi 0, %s129
      %s146 = sphi 0, %s130
    $region4: #{vs_forward.4} parent=1 // loop_header_branch
      %16 = sbr.rel (%p14) target = $region8
    $region5: #{vs_forward.4} parent=1 // loop_body
      %s18 = ssub.s32 %s13, 1
      %s19 = ssub.s32 %s13, 2
      %s26 = sadd.s32 1, %s21
      %p27 = scmp.ge.s32.totalorder %s26, 1
      %s28 = scalar_select %p27, 0, %s26
      %s29 = sadd.s32 1, %s20
      %s30 = scalar_select %p27, %s29, %s20
      %p31 = scmp.ge.s32.totalorder %s30, 2
      %s32 = scalar_select %p31, 0, %s30
      %s33 = ssub.s32 %s20, %s32
      %s34 = ssub.s32 %s21, %s28
      %s35 = sor.u32 %s33, %s34
      %p36 = scmp.eq.s32.totalorder %s35, 0
      %s38 = sadd.s32 %s37, 1
      %s39 = scalar_select %p36, %s37, %s38
      %p42 = pneg %p36
      %p43 = scmp.eq.s32.totalorder %s13, 1
      %p44 = por %p42, %p43
      %p45 = scmp.ne.s32.totalorder %s37, %s40
      %p46 = scmp.eq.s32.totalorder %s13, 0
      %p47 = por %p45, %p46
      %p48 = scmp.ne.s32.totalorder %s37, %s40
      %p49 = scmp.eq.s32.totalorder %s18, 1
      %p50 = por %p48, %p49
      %p51 = scmp.ne.s32.totalorder %s40, %s41
      %p52 = scmp.eq.s32.totalorder %s18, 0
      %p53 = por %p51, %p52
      %p54 = scmp.ne.s32.totalorder %s40, %s41
      %p55 = scmp.eq.s32.totalorder %s19, 1
      %p56 = por %p54, %p55
      %p58 = scmp.ne.s32.totalorder %s41, %s57
      %p59 = scmp.eq.s32.totalorder %s19, 0
      %p60 = por %p58, %p59
      %s62 = sadd.s32 %s61, 1
      %p65 = scmp.eq.s32.totalorder %s13, 1
      %p66 = scmp.ne.s32.totalorder %s61, %s63
      %p67 = scmp.eq.s32.totalorder %s13, 0
      %p68 = por %p66, %p67
      %p69 = scmp.ne.s32.totalorder %s61, %s63
      %p70 = scmp.eq.s32.totalorder %s18, 1
      %p71 = por %p69, %p70
      %p72 = scmp.ne.s32.totalorder %s63, %s64
      %p73 = scmp.eq.s32.totalorder %s18, 0
      %p74 = por %p72, %p73
      %p75 = scmp.ne.s32.totalorder %s63, %s64
      %p76 = scmp.eq.s32.totalorder %s19, 1
      %p77 = por %p75, %p76
      %p79 = scmp.ne.s32.totalorder %s64, %s78
      %p80 = scmp.eq.s32.totalorder %s19, 0
      %p81 = por %p79, %p80
      %s83 = sadd.s32 %s82, 1
      %p86 = scmp.eq.s32.totalorder %s13, 1
      %p87 = scmp.ne.s32.totalorder %s82, %s84
      %p88 = scmp.eq.s32.totalorder %s13, 0
      %p89 = por %p87, %p88
      %p90 = scmp.ne.s32.totalorder %s82, %s84
      %p91 = scmp.eq.s32.totalorder %s18, 1
      %p92 = por %p90, %p91
      %p93 = scmp.ne.s32.totalorder %s84, %s85
      %p94 = scmp.eq.s32.totalorder %s18, 0
      %p95 = por %p93, %p94
      %p96 = scmp.ne.s32.totalorder %s84, %s85
      %p97 = scmp.eq.s32.totalorder %s19, 1
      %p98 = por %p96, %p97
      %p100 = scmp.ne.s32.totalorder %s85, %s99
      %p101 = scmp.eq.s32.totalorder %s19, 0
      %p102 = por %p100, %p101
      %s104 = sadd.s32 %s103, 1
      %p107 = scmp.eq.s32.totalorder %s13, 1
      %p108 = scmp.ne.s32.totalorder %s103, %s105
      %p109 = scmp.eq.s32.totalorder %s13, 0
      %p110 = por %p108, %p109
      %p111 = scmp.ne.s32.totalorder %s103, %s105
      %p112 = scmp.eq.s32.totalorder %s18, 1
      %p113 = por %p111, %p112
      %p114 = scmp.ne.s32.totalorder %s105, %s106
      %p115 = scmp.eq.s32.totalorder %s18, 0
      %p116 = por %p114, %p115
      %p117 = scmp.ne.s32.totalorder %s105, %s106
      %p118 = scmp.eq.s32.totalorder %s19, 1
      %p119 = por %p117, %p118
      %p121 = scmp.ne.s32.totalorder %s106, %s120
      %p122 = scmp.eq.s32.totalorder %s19, 0
      %p123 = por %p121, %p122
      %s124 = ssub.s32 %s20, %s32
      %p125 = scmp.eq.s32.totalorder %s124, 0
      %s127 = sadd.s32 %s126, 1
      %s128 = scalar_select %p125, %s126, %s127
      %p131 = pneg %p125
      %p132 = scmp.eq.s32.totalorder %s13, 1
      %p133 = por %p131, %p132
      %p134 = scmp.ne.s32.totalorder %s126, %s129
      %p135 = scmp.eq.s32.totalorder %s13, 0
      %p136 = por %p134, %p135
      %p137 = scmp.ne.s32.totalorder %s126, %s129
      %p138 = scmp.eq.s32.totalorder %s18, 1
      %p139 = por %p137, %p138
      %p140 = scmp.ne.s32.totalorder %s129, %s130
      %p141 = scmp.eq.s32.totalorder %s18, 0
      %p142 = por %p140, %p141
      %p143 = scmp.ne.s32.totalorder %s129, %s130
      %p144 = scmp.eq.s32.totalorder %s19, 1
      %p145 = por %p143, %p144
      %p147 = scmp.ne.s32.totalorder %s130, %s146
      %p148 = scmp.eq.s32.totalorder %s19, 0
      %p149 = por %p147, %p148
      %p150 = scmp.le.s32.totalorder 1, %s13
      %p151 = scmp.lt.s32.totalorder %s13, 3
      %p152 = pnand %p150, %p151
      %p153 = pneg %p152
      // Predicated region
      $region9: #{vs_forward.4} parent=5 // pred_check
        _
      $region10: #{vs_forward.4} parent=5 // pred_check_branch
        %155 = sbr.rel (%p152) target = $region12
      $region11: #{vs_forward.4} parent=5 // pred_region
        %s156 = ssub.s32 %s13, 1
        // Predicated region
        $region13: #{vs_forward.4} parent=11 // pred_check
          %p157 = pneg %p74
        $region14: #{vs_forward.4} parent=11 // pred_check_branch
          %159 = sbr.rel (%p157) target = $region16
        $region15: #{vs_forward.4} parent=11 // pred_region
          _
        $region16: #{vs_forward.4} parent=11 // pred_fallthru
          _
        // Predicated region
        $region17: #{vs_forward.4} parent=11 // pred_check
          %p160 = pneg %p95
        $region18: #{vs_forward.4} parent=11 // pred_check_branch
          %162 = sbr.rel (%p160) target = $region20
        $region19: #{vs_forward.4} parent=11 // pred_region
          _
        $region20: #{vs_forward.4} parent=11 // pred_fallthru
          _
        // Predicated region
        $region21: #{vs_forward.4} parent=11 // pred_check
          %p163 = pneg %p116
        $region22: #{vs_forward.4} parent=11 // pred_check_branch
          %165 = sbr.rel (%p163) target = $region24
        $region23: #{vs_forward.4} parent=11 // pred_region
          _
        $region24: #{vs_forward.4} parent=11 // pred_fallthru
          _
      $region12: #{vs_forward.4} parent=5 // pred_fallthru
        _
      %p166 = scmp.lt.s32.totalorder %s13, 2
      // Predicated region
      $region25: #{vs_forward.4} parent=5 // pred_check
        %p167 = pneg %p166
      $region26: #{vs_forward.4} parent=5 // pred_check_branch
        %169 = sbr.rel (%p167) target = $region28
      $region27: #{vs_forward.4} parent=5 // pred_region
        // Predicated region
        $region29: #{vs_forward.4} parent=27 // pred_check
          %p170 = pneg %p47
        $region30: #{vs_forward.4} parent=27 // pred_check_branch
          %172 = sbr.rel (%p170) target = $region32
        $region31: #{vs_forward.4} parent=27 // pred_region
          %s173 = sand.u32 %s37, 1
          %s174 = scalar_lea.sflag [#allocation4], %s173
          %s175 = sand.u32 %s37, 1
          %s176 = smul.addr %s175, 512
          %s177 = scalar_lea.vmem [#allocation3], %s176
          %s178 = smul.u32 32, %s20
          %s179 = smul.u32 4, %s21
          %s181 = ssub.s32 8192, 8192
          %182 = vsyncadd %s174, %s181
          %s183 = smul.addr %s178, 4
          %s184 = sadd.s32 %s179, %s183
          %s185 = smul.addr %s184, 64
          %s186 = scalar_lea.hbm %s0, %s185
          %s187 = sshll.u32 %s177, 4
          %s188 = int_to_ptr.vmem [resolvable:$true] %s187
          %193 = dma.hbm_to_vmem [thread:$0]  %s186, 8192, %s188, %s174, 256, 256, 16
        $region32: #{vs_forward.4} parent=27 // pred_fallthru
          _
      $region28: #{vs_forward.4} parent=5 // pred_fallthru
        _
      %p194 = scmp.le.s32.totalorder 1, %s13
      %p195 = scmp.lt.s32.totalorder %s13, 3
      %p196 = pnand %p194, %p195
      %p197 = pneg %p196
      // Predicated region
      $region33: #{vs_forward.4} parent=5 // pred_check
        _
      $region34: #{vs_forward.4} parent=5 // pred_check_branch
        %199 = sbr.rel (%p196) target = $region36
      $region35: #{vs_forward.4} parent=5 // pred_region
        %s200 = ssub.s32 %s13, 1
        %s201 = sand.u32 %s40, 1
        %s202 = scalar_lea.sflag [#allocation4], %s201
        %s203 = sand.u32 %s40, 1
        %s204 = smul.addr %s203, 512
        %s205 = scalar_lea.vmem [#allocation3], %s204
        // Predicated region
        $region37: #{vs_forward.4} parent=35 // pred_check
          %p206 = pneg %p53
        $region38: #{vs_forward.4} parent=35 // pred_check_branch
          %208 = sbr.rel (%p206) target = $region40
        $region39: #{vs_forward.4} parent=35 // pred_region
          %209 = dma.done %s202, 8192
        $region40: #{vs_forward.4} parent=35 // pred_fallthru
          _
        %s210 = sand.u32 %s40, 1
        %s211 = scalar_lea.sflag [#allocation4], %s210
        %s212 = sand.u32 %s40, 1
        %s213 = smul.addr %s212, 512
        %s214 = scalar_lea.vmem [#allocation3], %s213
        %p215 = pneg %p53
        %p216 = pneg %p50
        %p217 = pneg %p74
        %p218 = pneg %p71
        %p219 = pneg %p95
        %p220 = pneg %p92
        %p221 = pneg %p116
        %p222 = pneg %p113
        %p223 = pneg %p142
        %p224 = pneg %p139
        %s225 = smul.u32 32, %s22
        %p226 = scmp.lt.s32.totalorder %s225, 63
        %s227 = scalar_select %p226, %s225, 63
        %s228 = smul.addr %s227, 4
        %s229 = scalar_lea.vmem %s4, %s228
        %s230 = smul.u32 32, %s22
        %s231 = smul.u32 4, %s23
        %s232 = smul.u32 32, %s22
        %p233 = scmp.lt.s32.totalorder %s232, 63
        %s234 = scalar_select %p233, %s232, 63
        %s235 = smul.addr %s234, 4
        %s236 = scalar_lea.vmem %s4, %s235
        %s237 = smul.u32 32, %s22
        %p239 = scmp.eq.s32.totalorder %s23, 0
        // Predicated region
        $region41: #{vs_forward.4} parent=35 // pred_check
          %p240 = pneg %p239
        $region42: #{vs_forward.4} parent=35 // pred_check_branch
          %242 = sbr.rel (%p240) target = $region44
        $region43: #{vs_forward.4} parent=35 // pred_region
          %243 = vst [vmem:[#allocation2] sm:$0xff] 0.0
          %244 = vst [vmem:[#allocation2 + $0x8] sm:$0xff] 0.0
          %245 = vst [vmem:[#allocation2 + $0x10] sm:$0xff] 0.0
          %246 = vst [vmem:[#allocation2 + $0x18] sm:$0xff] 0.0
          %247 = vst [vmem:[#allocation2 + $0x20] sm:$0xff] 0.0
          %248 = vst [vmem:[#allocation2 + $0x28] sm:$0xff] 0.0
          %249 = vst [vmem:[#allocation2 + $0x30] sm:$0xff] 0.0
          %250 = vst [vmem:[#allocation2 + $0x38] sm:$0xff] 0.0
          %251 = vst [vmem:[#allocation2 + $0x40] sm:$0xff] 0.0
          %252 = vst [vmem:[#allocation2 + $0x48] sm:$0xff] 0.0
          %253 = vst [vmem:[#allocation2 + $0x50] sm:$0xff] 0.0
          %254 = vst [vmem:[#allocation2 + $0x58] sm:$0xff] 0.0
          %255 = vst [vmem:[#allocation2 + $0x60] sm:$0xff] 0.0
          %256 = vst [vmem:[#allocation2 + $0x68] sm:$0xff] 0.0
          %257 = vst [vmem:[#allocation2 + $0x70] sm:$0xff] 0.0
          %258 = vst [vmem:[#allocation2 + $0x78] sm:$0xff] 0.0
          %259 = vst [vmem:[#allocation2 + $0x80] sm:$0xff] 0.0
          %260 = vst [vmem:[#allocation2 + $0x88] sm:$0xff] 0.0
          %261 = vst [vmem:[#allocation2 + $0x90] sm:$0xff] 0.0
          %262 = vst [vmem:[#allocation2 + $0x98] sm:$0xff] 0.0
          %263 = vst [vmem:[#allocation2 + $0xa0] sm:$0xff] 0.0
          %264 = vst [vmem:[#allocation2 + $0xa8] sm:$0xff] 0.0
          %265 = vst [vmem:[#allocation2 + $0xb0] sm:$0xff] 0.0
          %266 = vst [vmem:[#allocation2 + $0xb8] sm:$0xff] 0.0
          %267 = vst [vmem:[#allocation2 + $0xc0] sm:$0xff] 0.0
          %268 = vst [vmem:[#allocation2 + $0xc8] sm:$0xff] 0.0
          %269 = vst [vmem:[#allocation2 + $0xd0] sm:$0xff] 0.0
          %270 = vst [vmem:[#allocation2 + $0xd8] sm:$0xff] 0.0
          %271 = vst [vmem:[#allocation2 + $0xe0] sm:$0xff] 0.0
          %272 = vst [vmem:[#allocation2 + $0xe8] sm:$0xff] 0.0
          %273 = vst [vmem:[#allocation2 + $0xf0] sm:$0xff] 0.0
          %274 = vst [vmem:[#allocation2 + $0xf8] sm:$0xff] 0.0
        $region44: #{vs_forward.4} parent=35 // pred_fallthru
          _
        %s275 = smul.u32 %s23, 512
        %v276 = vld [vmem:[#allocation2] sm:$0xff]
        %v277 = vld [vmem:[#allocation2 + $0x8] sm:$0xff]
        %v278 = vld [vmem:[#allocation2 + $0x10] sm:$0xff]
        %v279 = vld [vmem:[#allocation2 + $0x18] sm:$0xff]
        %v280 = vld [vmem:[#allocation2 + $0x20] sm:$0xff]
        %v281 = vld [vmem:[#allocation2 + $0x28] sm:$0xff]
        %v282 = vld [vmem:[#allocation2 + $0x30] sm:$0xff]
        %v283 = vld [vmem:[#allocation2 + $0x38] sm:$0xff]
        %v284 = vld [vmem:[#allocation2 + $0x40] sm:$0xff]
        %v285 = vld [vmem:[#allocation2 + $0x48] sm:$0xff]
        %v286 = vld [vmem:[#allocation2 + $0x50] sm:$0xff]
        %v287 = vld [vmem:[#allocation2 + $0x58] sm:$0xff]
        %v288 = vld [vmem:[#allocation2 + $0x60] sm:$0xff]
        %v289 = vld [vmem:[#allocation2 + $0x68] sm:$0xff]
        %v290 = vld [vmem:[#allocation2 + $0x70] sm:$0xff]
        %v291 = vld [vmem:[#allocation2 + $0x78] sm:$0xff]
        %v292 = vld [vmem:[#allocation2 + $0x80] sm:$0xff]
        %v293 = vld [vmem:[#allocation2 + $0x88] sm:$0xff]
        %v294 = vld [vmem:[#allocation2 + $0x90] sm:$0xff]
        %v295 = vld [vmem:[#allocation2 + $0x98] sm:$0xff]
        %v296 = vld [vmem:[#allocation2 + $0xa0] sm:$0xff]
        %v297 = vld [vmem:[#allocation2 + $0xa8] sm:$0xff]
        %v298 = vld [vmem:[#allocation2 + $0xb0] sm:$0xff]
        %v299 = vld [vmem:[#allocation2 + $0xb8] sm:$0xff]
        %v300 = vld [vmem:[#allocation2 + $0xc0] sm:$0xff]
        %v301 = vld [vmem:[#allocation2 + $0xc8] sm:$0xff]
        %v302 = vld [vmem:[#allocation2 + $0xd0] sm:$0xff]
        %v303 = vld [vmem:[#allocation2 + $0xd8] sm:$0xff]
        %v304 = vld [vmem:[#allocation2 + $0xe0] sm:$0xff]
        %v305 = vld [vmem:[#allocation2 + $0xe8] sm:$0xff]
        %v306 = vld [vmem:[#allocation2 + $0xf0] sm:$0xff]
        %v307 = vld [vmem:[#allocation2 + $0xf8] sm:$0xff]
        %v308 = vld [vmem:[%s205] sm:$0xff]
        %v309 = vld [vmem:[%s205 + $0x8] sm:$0xff]
        %v310 = vld [vmem:[%s205 + $0x10] sm:$0xff]
        %v311 = vld [vmem:[%s205 + $0x18] sm:$0xff]
        %v312 = vld [vmem:[%s205 + $0x20] sm:$0xff]
        %v313 = vld [vmem:[%s205 + $0x28] sm:$0xff]
        %v314 = vld [vmem:[%s205 + $0x30] sm:$0xff]
        %v315 = vld [vmem:[%s205 + $0x38] sm:$0xff]
        %v316 = vld [vmem:[%s205 + $0x40] sm:$0xff]
        %v317 = vld [vmem:[%s205 + $0x48] sm:$0xff]
        %v318 = vld [vmem:[%s205 + $0x50] sm:$0xff]
        %v319 = vld [vmem:[%s205 + $0x58] sm:$0xff]
        %v320 = vld [vmem:[%s205 + $0x60] sm:$0xff]
        %v321 = vld [vmem:[%s205 + $0x68] sm:$0xff]
        %v322 = vld [vmem:[%s205 + $0x70] sm:$0xff]
        %v323 = vld [vmem:[%s205 + $0x78] sm:$0xff]
        %v324 = vld [vmem:[%s205 + $0x80] sm:$0xff]
        %v325 = vld [vmem:[%s205 + $0x88] sm:$0xff]
        %v326 = vld [vmem:[%s205 + $0x90] sm:$0xff]
        %v327 = vld [vmem:[%s205 + $0x98] sm:$0xff]
        %v328 = vld [vmem:[%s205 + $0xa0] sm:$0xff]
        %v329 = vld [vmem:[%s205 + $0xa8] sm:$0xff]
        %v330 = vld [vmem:[%s205 + $0xb0] sm:$0xff]
        %v331 = vld [vmem:[%s205 + $0xb8] sm:$0xff]
        %v332 = vld [vmem:[%s205 + $0xc0] sm:$0xff]
        %v333 = vld [vmem:[%s205 + $0xc8] sm:$0xff]
        %v334 = vld [vmem:[%s205 + $0xd0] sm:$0xff]
        %v335 = vld [vmem:[%s205 + $0xd8] sm:$0xff]
        %v336 = vld [vmem:[%s205 + $0xe0] sm:$0xff]
        %v337 = vld [vmem:[%s205 + $0xe8] sm:$0xff]
        %v338 = vld [vmem:[%s205 + $0xf0] sm:$0xff]
        %v339 = vld [vmem:[%s205 + $0xf8] sm:$0xff]
        %v340 = vld [vmem:[%s205 + $0x100] sm:$0xff]
        %v341 = vld [vmem:[%s205 + $0x108] sm:$0xff]
        %v342 = vld [vmem:[%s205 + $0x110] sm:$0xff]
        %v343 = vld [vmem:[%s205 + $0x118] sm:$0xff]
        %v344 = vld [vmem:[%s205 + $0x120] sm:$0xff]
        %v345 = vld [vmem:[%s205 + $0x128] sm:$0xff]
        %v346 = vld [vmem:[%s205 + $0x130] sm:$0xff]
        %v347 = vld [vmem:[%s205 + $0x138] sm:$0xff]
        %v348 = vld [vmem:[%s205 + $0x140] sm:$0xff]
        %v349 = vld [vmem:[%s205 + $0x148] sm:$0xff]
        %v350 = vld [vmem:[%s205 + $0x150] sm:$0xff]
        %v351 = vld [vmem:[%s205 + $0x158] sm:$0xff]
        %v352 = vld [vmem:[%s205 + $0x160] sm:$0xff]
        %v353 = vld [vmem:[%s205 + $0x168] sm:$0xff]
        %v354 = vld [vmem:[%s205 + $0x170] sm:$0xff]
        %v355 = vld [vmem:[%s205 + $0x178] sm:$0xff]
        %v356 = vld [vmem:[%s205 + $0x180] sm:$0xff]
        %v357 = vld [vmem:[%s205 + $0x188] sm:$0xff]
        %v358 = vld [vmem:[%s205 + $0x190] sm:$0xff]
        %v359 = vld [vmem:[%s205 + $0x198] sm:$0xff]
        %v360 = vld [vmem:[%s205 + $0x1a0] sm:$0xff]
        %v361 = vld [vmem:[%s205 + $0x1a8] sm:$0xff]
        %v362 = vld [vmem:[%s205 + $0x1b0] sm:$0xff]
        %v363 = vld [vmem:[%s205 + $0x1b8] sm:$0xff]
        %v364 = vld [vmem:[%s205 + $0x1c0] sm:$0xff]
        %v365 = vld [vmem:[%s205 + $0x1c8] sm:$0xff]
        %v366 = vld [vmem:[%s205 + $0x1d0] sm:$0xff]
        %v367 = vld [vmem:[%s205 + $0x1d8] sm:$0xff]
        %v368 = vld [vmem:[%s205 + $0x1e0] sm:$0xff]
        %v369 = vld [vmem:[%s205 + $0x1e8] sm:$0xff]
        %v370 = vld [vmem:[%s205 + $0x1f0] sm:$0xff]
        %v371 = vld [vmem:[%s205 + $0x1f8] sm:$0xff]
        %s372 = sshra.s32 %s275, 3
        %s373 = sand.u32 %s275, 7
        %s374 = smul.addr %s372, 4
        %s375 = scalar_lea.vmem %s1, %s374
        %v376 = vld [vmem:[%s375] sm:$0xf]
        %v377 = vld [vmem:[%s375 + $0x4] sm:$0xf]
        %v378 = vld [vmem:[%s375 + $0x8] sm:$0xf]
        %v379 = vld [vmem:[%s375 + $0xc] sm:$0xf]
        %v380 = vld [vmem:[%s375 + $0x10] sm:$0xf]
        %v381 = vld [vmem:[%s375 + $0x14] sm:$0xf]
        %v382 = vld [vmem:[%s375 + $0x18] sm:$0xf]
        %v383 = vld [vmem:[%s375 + $0x1c] sm:$0xf]
        %v384 = vld [vmem:[%s375 + $0x20] sm:$0xf]
        %v385 = vld [vmem:[%s375 + $0x24] sm:$0xf]
        %v386 = vld [vmem:[%s375 + $0x28] sm:$0xf]
        %v387 = vld [vmem:[%s375 + $0x2c] sm:$0xf]
        %v388 = vld [vmem:[%s375 + $0x30] sm:$0xf]
        %v389 = vld [vmem:[%s375 + $0x34] sm:$0xf]
        %v390 = vld [vmem:[%s375 + $0x38] sm:$0xf]
        %v391 = vld [vmem:[%s375 + $0x3c] sm:$0xf]
        %v392 = vld [vmem:[%s375 + $0x40] sm:$0xf]
        %v393 = vld [vmem:[%s375 + $0x44] sm:$0xf]
        %v394 = vld [vmem:[%s375 + $0x48] sm:$0xf]
        %v395 = vld [vmem:[%s375 + $0x4c] sm:$0xf]
        %v396 = vld [vmem:[%s375 + $0x50] sm:$0xf]
        %v397 = vld [vmem:[%s375 + $0x54] sm:$0xf]
        %v398 = vld [vmem:[%s375 + $0x58] sm:$0xf]
        %v399 = vld [vmem:[%s375 + $0x5c] sm:$0xf]
        %v400 = vld [vmem:[%s375 + $0x60] sm:$0xf]
        %v401 = vld [vmem:[%s375 + $0x64] sm:$0xf]
        %v402 = vld [vmem:[%s375 + $0x68] sm:$0xf]
        %v403 = vld [vmem:[%s375 + $0x6c] sm:$0xf]
        %v404 = vld [vmem:[%s375 + $0x70] sm:$0xf]
        %v405 = vld [vmem:[%s375 + $0x74] sm:$0xf]
        %v406 = vld [vmem:[%s375 + $0x78] sm:$0xf]
        %v407 = vld [vmem:[%s375 + $0x7c] sm:$0xf]
        %v408 = vld [vmem:[%s375 + $0x80] sm:$0xf]
        %v409 = vld [vmem:[%s375 + $0x84] sm:$0xf]
        %v410 = vld [vmem:[%s375 + $0x88] sm:$0xf]
        %v411 = vld [vmem:[%s375 + $0x8c] sm:$0xf]
        %v412 = vld [vmem:[%s375 + $0x90] sm:$0xf]
        %v413 = vld [vmem:[%s375 + $0x94] sm:$0xf]
        %v414 = vld [vmem:[%s375 + $0x98] sm:$0xf]
        %v415 = vld [vmem:[%s375 + $0x9c] sm:$0xf]
        %v416 = vld [vmem:[%s375 + $0xa0] sm:$0xf]
        %v417 = vld [vmem:[%s375 + $0xa4] sm:$0xf]
        %v418 = vld [vmem:[%s375 + $0xa8] sm:$0xf]
        %v419 = vld [vmem:[%s375 + $0xac] sm:$0xf]
        %v420 = vld [vmem:[%s375 + $0xb0] sm:$0xf]
        %v421 = vld [vmem:[%s375 + $0xb4] sm:$0xf]
        %v422 = vld [vmem:[%s375 + $0xb8] sm:$0xf]
        %v423 = vld [vmem:[%s375 + $0xbc] sm:$0xf]
        %v424 = vld [vmem:[%s375 + $0xc0] sm:$0xf]
        %v425 = vld [vmem:[%s375 + $0xc4] sm:$0xf]
        %v426 = vld [vmem:[%s375 + $0xc8] sm:$0xf]
        %v427 = vld [vmem:[%s375 + $0xcc] sm:$0xf]
        %v428 = vld [vmem:[%s375 + $0xd0] sm:$0xf]
        %v429 = vld [vmem:[%s375 + $0xd4] sm:$0xf]
        %v430 = vld [vmem:[%s375 + $0xd8] sm:$0xf]
        %v431 = vld [vmem:[%s375 + $0xdc] sm:$0xf]
        %v432 = vld [vmem:[%s375 + $0xe0] sm:$0xf]
        %v433 = vld [vmem:[%s375 + $0xe4] sm:$0xf]
        %v434 = vld [vmem:[%s375 + $0xe8] sm:$0xf]
        %v435 = vld [vmem:[%s375 + $0xec] sm:$0xf]
        %v436 = vld [vmem:[%s375 + $0xf0] sm:$0xf]
        %v437 = vld [vmem:[%s375 + $0xf4] sm:$0xf]
        %v438 = vld [vmem:[%s375 + $0xf8] sm:$0xf]
        %v439 = vld [vmem:[%s375 + $0xfc] sm:$0xf]
        %v504 = vunpack.c.l.b16 %v308
        %v505 = vunpack.c.h.b16 %v308
        %v506 = vunpack.c.l.b16 %v309
        %v507 = vunpack.c.h.b16 %v309
        %v508 = vunpack.c.l.b16 %v310
        %v509 = vunpack.c.h.b16 %v310
        %v510 = vunpack.c.l.b16 %v311
        %v511 = vunpack.c.h.b16 %v311
        %v512 = vunpack.c.l.b16 %v312
        %v513 = vunpack.c.h.b16 %v312
        %v514 = vunpack.c.l.b16 %v313
        %v515 = vunpack.c.h.b16 %v313
        %v516 = vunpack.c.l.b16 %v314
        %v517 = vunpack.c.h.b16 %v314
        %v518 = vunpack.c.l.b16 %v315
        %v519 = vunpack.c.h.b16 %v315
        %v520 = vunpack.c.l.b16 %v316
        %v521 = vunpack.c.h.b16 %v316
        %v522 = vunpack.c.l.b16 %v317
        %v523 = vunpack.c.h.b16 %v317
        %v524 = vunpack.c.l.b16 %v318
        %v525 = vunpack.c.h.b16 %v318
        %v526 = vunpack.c.l.b16 %v319
        %v527 = vunpack.c.h.b16 %v319
        %v528 = vunpack.c.l.b16 %v320
        %v529 = vunpack.c.h.b16 %v320
        %v530 = vunpack.c.l.b16 %v321
        %v531 = vunpack.c.h.b16 %v321
        %v532 = vunpack.c.l.b16 %v322
        %v533 = vunpack.c.h.b16 %v322
        %v534 = vunpack.c.l.b16 %v323
        %v535 = vunpack.c.h.b16 %v323
        %v536 = vunpack.c.l.b16 %v324
        %v537 = vunpack.c.h.b16 %v324
        %v538 = vunpack.c.l.b16 %v325
        %v539 = vunpack.c.h.b16 %v325
        %v540 = vunpack.c.l.b16 %v326
        %v541 = vunpack.c.h.b16 %v326
        %v542 = vunpack.c.l.b16 %v327
        %v543 = vunpack.c.h.b16 %v327
        %v544 = vunpack.c.l.b16 %v328
        %v545 = vunpack.c.h.b16 %v328
        %v546 = vunpack.c.l.b16 %v329
        %v547 = vunpack.c.h.b16 %v329
        %v548 = vunpack.c.l.b16 %v330
        %v549 = vunpack.c.h.b16 %v330
        %v550 = vunpack.c.l.b16 %v331
        %v551 = vunpack.c.h.b16 %v331
        %v552 = vunpack.c.l.b16 %v332
        %v553 = vunpack.c.h.b16 %v332
        %v554 = vunpack.c.l.b16 %v333
        %v555 = vunpack.c.h.b16 %v333
        %v556 = vunpack.c.l.b16 %v334
        %v557 = vunpack.c.h.b16 %v334
        %v558 = vunpack.c.l.b16 %v335
        %v559 = vunpack.c.h.b16 %v335
        %v560 = vunpack.c.l.b16 %v336
        %v561 = vunpack.c.h.b16 %v336
        %v562 = vunpack.c.l.b16 %v337
        %v563 = vunpack.c.h.b16 %v337
        %v564 = vunpack.c.l.b16 %v338
        %v565 = vunpack.c.h.b16 %v338
        %v566 = vunpack.c.l.b16 %v339
        %v567 = vunpack.c.h.b16 %v339
        %v568 = vunpack.c.l.b16 %v340
        %v569 = vunpack.c.h.b16 %v340
        %v570 = vunpack.c.l.b16 %v341
        %v571 = vunpack.c.h.b16 %v341
        %v572 = vunpack.c.l.b16 %v342
        %v573 = vunpack.c.h.b16 %v342
        %v574 = vunpack.c.l.b16 %v343
        %v575 = vunpack.c.h.b16 %v343
        %v576 = vunpack.c.l.b16 %v344
        %v577 = vunpack.c.h.b16 %v344
        %v578 = vunpack.c.l.b16 %v345
        %v579 = vunpack.c.h.b16 %v345
        %v580 = vunpack.c.l.b16 %v346
        %v581 = vunpack.c.h.b16 %v346
        %v582 = vunpack.c.l.b16 %v347
        %v583 = vunpack.c.h.b16 %v347
        %v584 = vunpack.c.l.b16 %v348
        %v585 = vunpack.c.h.b16 %v348
        %v586 = vunpack.c.l.b16 %v349
        %v587 = vunpack.c.h.b16 %v349
        %v588 = vunpack.c.l.b16 %v350
        %v589 = vunpack.c.h.b16 %v350
        %v590 = vunpack.c.l.b16 %v351
        %v591 = vunpack.c.h.b16 %v351
        %v592 = vunpack.c.l.b16 %v352
        %v593 = vunpack.c.h.b16 %v352
        %v594 = vunpack.c.l.b16 %v353
        %v595 = vunpack.c.h.b16 %v353
        %v596 = vunpack.c.l.b16 %v354
        %v597 = vunpack.c.h.b16 %v354
        %v598 = vunpack.c.l.b16 %v355
        %v599 = vunpack.c.h.b16 %v355
        %v600 = vunpack.c.l.b16 %v356
        %v601 = vunpack.c.h.b16 %v356
        %v602 = vunpack.c.l.b16 %v357
        %v603 = vunpack.c.h.b16 %v357
        %v604 = vunpack.c.l.b16 %v358
        %v605 = vunpack.c.h.b16 %v358
        %v606 = vunpack.c.l.b16 %v359
        %v607 = vunpack.c.h.b16 %v359
        %v608 = vunpack.c.l.b16 %v360
        %v609 = vunpack.c.h.b16 %v360
        %v610 = vunpack.c.l.b16 %v361
        %v611 = vunpack.c.h.b16 %v361
        %v612 = vunpack.c.l.b16 %v362
        %v613 = vunpack.c.h.b16 %v362
        %v614 = vunpack.c.l.b16 %v363
        %v615 = vunpack.c.h.b16 %v363
        %v616 = vunpack.c.l.b16 %v364
        %v617 = vunpack.c.h.b16 %v364
        %v618 = vunpack.c.l.b16 %v365
        %v619 = vunpack.c.h.b16 %v365
        %v620 = vunpack.c.l.b16 %v366
        %v621 = vunpack.c.h.b16 %v366
        %v622 = vunpack.c.l.b16 %v367
        %v623 = vunpack.c.h.b16 %v367
        %v624 = vunpack.c.l.b16 %v368
        %v625 = vunpack.c.h.b16 %v368
        %v626 = vunpack.c.l.b16 %v369
        %v627 = vunpack.c.h.b16 %v369
        %v628 = vunpack.c.l.b16 %v370
        %v629 = vunpack.c.h.b16 %v370
        %v630 = vunpack.c.l.b16 %v371
        %v631 = vunpack.c.h.b16 %v371
        %v632 = vpack.c.b16 %v508, %v504
        %v633 = vpack.c.b16 %v509, %v505
        %v634 = vpack.c.b16 %v510, %v506
        %v635 = vpack.c.b16 %v511, %v507
        %v636 = vpack.c.b16 %v516, %v512
        %v637 = vpack.c.b16 %v517, %v513
        %v638 = vpack.c.b16 %v518, %v514
        %v639 = vpack.c.b16 %v519, %v515
        %v640 = vpack.c.b16 %v524, %v520
        %v641 = vpack.c.b16 %v525, %v521
        %v642 = vpack.c.b16 %v526, %v522
        %v643 = vpack.c.b16 %v527, %v523
        %v644 = vpack.c.b16 %v532, %v528
        %v645 = vpack.c.b16 %v533, %v529
        %v646 = vpack.c.b16 %v534, %v530
        %v647 = vpack.c.b16 %v535, %v531
        %v648 = vpack.c.b16 %v540, %v536
        %v649 = vpack.c.b16 %v541, %v537
        %v650 = vpack.c.b16 %v542, %v538
        %v651 = vpack.c.b16 %v543, %v539
        %v652 = vpack.c.b16 %v548, %v544
        %v653 = vpack.c.b16 %v549, %v545
        %v654 = vpack.c.b16 %v550, %v546
        %v655 = vpack.c.b16 %v551, %v547
        %v656 = vpack.c.b16 %v556, %v552
        %v657 = vpack.c.b16 %v557, %v553
        %v658 = vpack.c.b16 %v558, %v554
        %v659 = vpack.c.b16 %v559, %v555
        %v660 = vpack.c.b16 %v564, %v560
        %v661 = vpack.c.b16 %v565, %v561
        %v662 = vpack.c.b16 %v566, %v562
        %v663 = vpack.c.b16 %v567, %v563
        %v664 = vpack.c.b16 %v572, %v568
        %v665 = vpack.c.b16 %v573, %v569
        %v666 = vpack.c.b16 %v574, %v570
        %v667 = vpack.c.b16 %v575, %v571
        %v668 = vpack.c.b16 %v580, %v576
        %v669 = vpack.c.b16 %v581, %v577
        %v670 = vpack.c.b16 %v582, %v578
        %v671 = vpack.c.b16 %v583, %v579
        %v672 = vpack.c.b16 %v588, %v584
        %v673 = vpack.c.b16 %v589, %v585
        %v674 = vpack.c.b16 %v590, %v586
        %v675 = vpack.c.b16 %v591, %v587
        %v676 = vpack.c.b16 %v596, %v592
        %v677 = vpack.c.b16 %v597, %v593
        %v678 = vpack.c.b16 %v598, %v594
        %v679 = vpack.c.b16 %v599, %v595
        %v680 = vpack.c.b16 %v604, %v600
        %v681 = vpack.c.b16 %v605, %v601
        %v682 = vpack.c.b16 %v606, %v602
        %v683 = vpack.c.b16 %v607, %v603
        %v684 = vpack.c.b16 %v612, %v608
        %v685 = vpack.c.b16 %v613, %v609
        %v686 = vpack.c.b16 %v614, %v610
        %v687 = vpack.c.b16 %v615, %v611
        %v688 = vpack.c.b16 %v620, %v616
        %v689 = vpack.c.b16 %v621, %v617
        %v690 = vpack.c.b16 %v622, %v618
        %v691 = vpack.c.b16 %v623, %v619
        %v692 = vpack.c.b16 %v628, %v624
        %v693 = vpack.c.b16 %v629, %v625
        %v694 = vpack.c.b16 %v630, %v626
        %v695 = vpack.c.b16 %v631, %v627
        %v824 = vunpack.c.l.b16 %v376
        %v825 = vunpack.c.l.b16 %v377
        %v826 = vunpack.c.l.b16 %v378
        %v827 = vunpack.c.l.b16 %v379
        %v828 = vunpack.c.l.b16 %v380
        %v829 = vunpack.c.l.b16 %v381
        %v830 = vunpack.c.l.b16 %v382
        %v831 = vunpack.c.l.b16 %v383
        %v832 = vunpack.c.l.b16 %v384
        %v833 = vunpack.c.l.b16 %v385
        %v834 = vunpack.c.l.b16 %v386
        %v835 = vunpack.c.l.b16 %v387
        %v836 = vunpack.c.l.b16 %v388
        %v837 = vunpack.c.l.b16 %v389
        %v838 = vunpack.c.l.b16 %v390
        %v839 = vunpack.c.l.b16 %v391
        %v840 = vunpack.c.l.b16 %v392
        %v841 = vunpack.c.l.b16 %v393
        %v842 = vunpack.c.l.b16 %v394
        %v843 = vunpack.c.l.b16 %v395
        %v844 = vunpack.c.l.b16 %v396
        %v845 = vunpack.c.l.b16 %v397
        %v846 = vunpack.c.l.b16 %v398
        %v847 = vunpack.c.l.b16 %v399
        %v848 = vunpack.c.l.b16 %v400
        %v849 = vunpack.c.l.b16 %v401
        %v850 = vunpack.c.l.b16 %v402
        %v851 = vunpack.c.l.b16 %v403
        %v852 = vunpack.c.l.b16 %v404
        %v853 = vunpack.c.l.b16 %v405
        %v854 = vunpack.c.l.b16 %v406
        %v855 = vunpack.c.l.b16 %v407
        %v856 = vunpack.c.l.b16 %v408
        %v857 = vunpack.c.l.b16 %v409
        %v858 = vunpack.c.l.b16 %v410
        %v859 = vunpack.c.l.b16 %v411
        %v860 = vunpack.c.l.b16 %v412
        %v861 = vunpack.c.l.b16 %v413
        %v862 = vunpack.c.l.b16 %v414
        %v863 = vunpack.c.l.b16 %v415
        %v864 = vunpack.c.l.b16 %v416
        %v865 = vunpack.c.l.b16 %v417
        %v866 = vunpack.c.l.b16 %v418
        %v867 = vunpack.c.l.b16 %v419
        %v868 = vunpack.c.l.b16 %v420
        %v869 = vunpack.c.l.b16 %v421
        %v870 = vunpack.c.l.b16 %v422
        %v871 = vunpack.c.l.b16 %v423
        %v872 = vunpack.c.l.b16 %v424
        %v873 = vunpack.c.l.b16 %v425
        %v874 = vunpack.c.l.b16 %v426
        %v875 = vunpack.c.l.b16 %v427
        %v876 = vunpack.c.l.b16 %v428
        %v877 = vunpack.c.l.b16 %v429
        %v878 = vunpack.c.l.b16 %v430
        %v879 = vunpack.c.l.b16 %v431
        %v880 = vunpack.c.l.b16 %v432
        %v881 = vunpack.c.l.b16 %v433
        %v882 = vunpack.c.l.b16 %v434
        %v883 = vunpack.c.l.b16 %v435
        %v884 = vunpack.c.l.b16 %v436
        %v885 = vunpack.c.l.b16 %v437
        %v886 = vunpack.c.l.b16 %v438
        %v887 = vunpack.c.l.b16 %v439
        %v888 = vpack.c.b16 %v825, %v824
        %v889 = vpack.c.b16 %v827, %v826
        %v890 = vpack.c.b16 %v829, %v828
        %v891 = vpack.c.b16 %v831, %v830
        %v892 = vpack.c.b16 %v833, %v832
        %v893 = vpack.c.b16 %v835, %v834
        %v894 = vpack.c.b16 %v837, %v836
        %v895 = vpack.c.b16 %v839, %v838
        %v896 = vpack.c.b16 %v841, %v840
        %v897 = vpack.c.b16 %v843, %v842
        %v898 = vpack.c.b16 %v845, %v844
        %v899 = vpack.c.b16 %v847, %v846
        %v900 = vpack.c.b16 %v849, %v848
        %v901 = vpack.c.b16 %v851, %v850
        %v902 = vpack.c.b16 %v853, %v852
        %v903 = vpack.c.b16 %v855, %v854
        %v904 = vpack.c.b16 %v857, %v856
        %v905 = vpack.c.b16 %v859, %v858
        %v906 = vpack.c.b16 %v861, %v860
        %v907 = vpack.c.b16 %v863, %v862
        %v908 = vpack.c.b16 %v865, %v864
        %v909 = vpack.c.b16 %v867, %v866
        %v910 = vpack.c.b16 %v869, %v868
        %v911 = vpack.c.b16 %v871, %v870
        %v912 = vpack.c.b16 %v873, %v872
        %v913 = vpack.c.b16 %v875, %v874
        %v914 = vpack.c.b16 %v877, %v876
        %v915 = vpack.c.b16 %v879, %v878
        %v916 = vpack.c.b16 %v881, %v880
        %v917 = vpack.c.b16 %v883, %v882
        %v918 = vpack.c.b16 %v885, %v884
        %v919 = vpack.c.b16 %v887, %v886
        %952 = vmatprep.subr.bf16.mxu0 0
        %953 = vmatpush1.bf16.msra.mxu0 %v895
        %954 = vmatprep.subr.bf16.mxu0 0
        %955 = vmatpush1.bf16.msra.mxu0 %v894
        %956 = vmatprep.subr.bf16.mxu0 0
        %957 = vmatpush1.bf16.msra.mxu0 %v893
        %958 = vmatprep.subr.bf16.mxu0 0
        %959 = vmatpush1.bf16.msra.mxu0 %v892
        %960 = vmatprep.subr.bf16.mxu0 0
        %961 = vmatpush1.bf16.msra.mxu0 %v891
        %962 = vmatprep.subr.bf16.mxu0 0
        %963 = vmatpush1.bf16.msra.mxu0 %v890
        %964 = vmatprep.subr.bf16.mxu0 0
        %965 = vmatpush1.bf16.msra.mxu0 %v889
        %966 = vmatprep.subr.bf16.mxu0 0
        %967 = vmatpush1.bf16.msra.mxu0 %v888
        %968 = vmatprep.subr.bf16.mxu0 0
        %969 = vmatpush2.bf16.msra.mxu0 %v903
        %970 = vmatprep.subr.bf16.mxu0 0
        %971 = vmatpush2.bf16.msra.mxu0 %v902
        %972 = vmatprep.subr.bf16.mxu0 0
        %973 = vmatpush2.bf16.msra.mxu0 %v901
        %974 = vmatprep.subr.bf16.mxu0 0
        %975 = vmatpush2.bf16.msra.mxu0 %v900
        %976 = vmatprep.subr.bf16.mxu0 0
        %977 = vmatpush2.bf16.msra.mxu0 %v899
        %978 = vmatprep.subr.bf16.mxu0 0
        %979 = vmatpush2.bf16.msra.mxu0 %v898
        %980 = vmatprep.subr.bf16.mxu0 0
        %981 = vmatpush2.bf16.msra.mxu0 %v897
        %982 = vmatprep.subr.bf16.mxu0 0
        %983 = vmatpush2.bf16.msra.mxu0 %v896
        %984 = vmatprep.mubr.bf16.mxu0 %v633
        %985 = vmatmul.mubr.bf16.gmra.mxu0 %v632
        %v986 = vpop.f32.mrf.mxu0
        %v987 = vadd.f32 0.0, %v986
        %v988 = vpop.f32.mrf.mxu0
        %v989 = vpop.f32.mrf.mxu0
        %v990 = vadd.f32 0.0, %v989
        %v991 = vpop.f32.mrf.mxu0
        %992 = vmatprep.mubr.bf16.mxu0 %v637
        %993 = vmatmul.mubr.bf16.gmra.mxu0 %v636
        %v994 = vpop.f32.mrf.mxu0
        %v995 = vadd.f32 0.0, %v994
        %v996 = vpop.f32.mrf.mxu0
        %v997 = vpop.f32.mrf.mxu0
        %v998 = vadd.f32 0.0, %v997
        %v999 = vpop.f32.mrf.mxu0
        %1000 = vmatprep.mubr.bf16.mxu0 %v641
        %1001 = vmatmul.mubr.bf16.gmra.mxu0 %v640
        %v1002 = vpop.f32.mrf.mxu0
        %v1003 = vadd.f32 0.0, %v1002
        %v1004 = vpop.f32.mrf.mxu0
        %v1005 = vpop.f32.mrf.mxu0
        %v1006 = vadd.f32 0.0, %v1005
        %v1007 = vpop.f32.mrf.mxu0
        %1008 = vmatprep.mubr.bf16.mxu0 %v645
        %1009 = vmatmul.mubr.bf16.gmra.mxu0 %v644
        %v1010 = vpop.f32.mrf.mxu0
        %v1011 = vadd.f32 0.0, %v1010
        %v1012 = vpop.f32.mrf.mxu0
        %v1013 = vpop.f32.mrf.mxu0
        %v1014 = vadd.f32 0.0, %v1013
        %v1015 = vpop.f32.mrf.mxu0
        %1016 = vmatprep.mubr.bf16.mxu0 %v649
        %1017 = vmatmul.mubr.bf16.gmra.mxu0 %v648
        %v1018 = vpop.f32.mrf.mxu0
        %v1019 = vadd.f32 0.0, %v1018
        %v1020 = vpop.f32.mrf.mxu0
        %v1021 = vpop.f32.mrf.mxu0
        %v1022 = vadd.f32 0.0, %v1021
        %v1023 = vpop.f32.mrf.mxu0
        %1024 = vmatprep.mubr.bf16.mxu0 %v653
        %1025 = vmatmul.mubr.bf16.gmra.mxu0 %v652
        %v1026 = vpop.f32.mrf.mxu0
        %v1027 = vadd.f32 0.0, %v1026
        %v1028 = vpop.f32.mrf.mxu0
        %v1029 = vpop.f32.mrf.mxu0
        %v1030 = vadd.f32 0.0, %v1029
        %v1031 = vpop.f32.mrf.mxu0
        %1032 = vmatprep.mubr.bf16.mxu0 %v657
        %1033 = vmatmul.mubr.bf16.gmra.mxu0 %v656
        %v1034 = vpop.f32.mrf.mxu0
        %v1035 = vadd.f32 0.0, %v1034
        %v1036 = vpop.f32.mrf.mxu0
        %v1037 = vpop.f32.mrf.mxu0
        %v1038 = vadd.f32 0.0, %v1037
        %v1039 = vpop.f32.mrf.mxu0
        %1040 = vmatprep.mubr.bf16.mxu0 %v661
        %1041 = vmatmul.mubr.bf16.gmra.mxu0 %v660
        %v1042 = vpop.f32.mrf.mxu0
        %v1043 = vadd.f32 0.0, %v1042
        %v1044 = vpop.f32.mrf.mxu0
        %v1045 = vpop.f32.mrf.mxu0
        %v1046 = vadd.f32 0.0, %v1045
        %v1047 = vpop.f32.mrf.mxu0
        %1048 = vmatprep.mubr.bf16.mxu0 %v665
        %1049 = vmatmul.mubr.bf16.gmra.mxu0 %v664
        %v1050 = vpop.f32.mrf.mxu0
        %v1051 = vadd.f32 0.0, %v1050
        %v1052 = vpop.f32.mrf.mxu0
        %v1053 = vpop.f32.mrf.mxu0
        %v1054 = vadd.f32 0.0, %v1053
        %v1055 = vpop.f32.mrf.mxu0
        %1056 = vmatprep.mubr.bf16.mxu0 %v669
        %1057 = vmatmul.mubr.bf16.gmra.mxu0 %v668
        %v1058 = vpop.f32.mrf.mxu0
        %v1059 = vadd.f32 0.0, %v1058
        %v1060 = vpop.f32.mrf.mxu0
        %v1061 = vpop.f32.mrf.mxu0
        %v1062 = vadd.f32 0.0, %v1061
        %v1063 = vpop.f32.mrf.mxu0
        %1064 = vmatprep.mubr.bf16.mxu0 %v673
        %1065 = vmatmul.mubr.bf16.gmra.mxu0 %v672
        %v1066 = vpop.f32.mrf.mxu0
        %v1067 = vadd.f32 0.0, %v1066
        %v1068 = vpop.f32.mrf.mxu0
        %v1069 = vpop.f32.mrf.mxu0
        %v1070 = vadd.f32 0.0, %v1069
        %v1071 = vpop.f32.mrf.mxu0
        %1072 = vmatprep.mubr.bf16.mxu0 %v677
        %1073 = vmatmul.mubr.bf16.gmra.mxu0 %v676
        %v1074 = vpop.f32.mrf.mxu0
        %v1075 = vadd.f32 0.0, %v1074
        %v1076 = vpop.f32.mrf.mxu0
        %v1077 = vpop.f32.mrf.mxu0
        %v1078 = vadd.f32 0.0, %v1077
        %v1079 = vpop.f32.mrf.mxu0
        %1080 = vmatprep.mubr.bf16.mxu0 %v681
        %1081 = vmatmul.mubr.bf16.gmra.mxu0 %v680
        %v1082 = vpop.f32.mrf.mxu0
        %v1083 = vadd.f32 0.0, %v1082
        %v1084 = vpop.f32.mrf.mxu0
        %v1085 = vpop.f32.mrf.mxu0
        %v1086 = vadd.f32 0.0, %v1085
        %v1087 = vpop.f32.mrf.mxu0
        %1088 = vmatprep.mubr.bf16.mxu0 %v685
        %1089 = vmatmul.mubr.bf16.gmra.mxu0 %v684
        %v1090 = vpop.f32.mrf.mxu0
        %v1091 = vadd.f32 0.0, %v1090
        %v1092 = vpop.f32.mrf.mxu0
        %v1093 = vpop.f32.mrf.mxu0
        %v1094 = vadd.f32 0.0, %v1093
        %v1095 = vpop.f32.mrf.mxu0
        %1096 = vmatprep.mubr.bf16.mxu0 %v689
        %1097 = vmatmul.mubr.bf16.gmra.mxu0 %v688
        %v1098 = vpop.f32.mrf.mxu0
        %v1099 = vadd.f32 0.0, %v1098
        %v1100 = vpop.f32.mrf.mxu0
        %v1101 = vpop.f32.mrf.mxu0
        %v1102 = vadd.f32 0.0, %v1101
        %v1103 = vpop.f32.mrf.mxu0
        %1104 = vmatprep.mubr.bf16.mxu0 %v693
        %1105 = vmatmul.mubr.bf16.gmra.mxu0 %v692
        %v1106 = vpop.f32.mrf.mxu0
        %v1107 = vadd.f32 0.0, %v1106
        %v1108 = vpop.f32.mrf.mxu0
        %v1109 = vpop.f32.mrf.mxu0
        %v1110 = vadd.f32 0.0, %v1109
        %v1111 = vpop.f32.mrf.mxu0
        %1112 = vdwg.mxu0
        %1113 = vmatprep.subr.bf16.mxu0 0
        %1114 = vmatpush1.bf16.msra.mxu0 %v911
        %1115 = vmatprep.subr.bf16.mxu0 0
        %1116 = vmatpush1.bf16.msra.mxu0 %v910
        %1117 = vmatprep.subr.bf16.mxu0 0
        %1118 = vmatpush1.bf16.msra.mxu0 %v909
        %1119 = vmatprep.subr.bf16.mxu0 0
        %1120 = vmatpush1.bf16.msra.mxu0 %v908
        %1121 = vmatprep.subr.bf16.mxu0 0
        %1122 = vmatpush1.bf16.msra.mxu0 %v907
        %1123 = vmatprep.subr.bf16.mxu0 0
        %1124 = vmatpush1.bf16.msra.mxu0 %v906
        %1125 = vmatprep.subr.bf16.mxu0 0
        %1126 = vmatpush1.bf16.msra.mxu0 %v905
        %1127 = vmatprep.subr.bf16.mxu0 0
        %1128 = vmatpush1.bf16.msra.mxu0 %v904
        %1129 = vmatprep.subr.bf16.mxu0 0
        %1130 = vmatpush2.bf16.msra.mxu0 %v919
        %1131 = vmatprep.subr.bf16.mxu0 0
        %1132 = vmatpush2.bf16.msra.mxu0 %v918
        %1133 = vmatprep.subr.bf16.mxu0 0
        %1134 = vmatpush2.bf16.msra.mxu0 %v917
        %1135 = vmatprep.subr.bf16.mxu0 0
        %1136 = vmatpush2.bf16.msra.mxu0 %v916
        %1137 = vmatprep.subr.bf16.mxu0 0
        %1138 = vmatpush2.bf16.msra.mxu0 %v915
        %1139 = vmatprep.subr.bf16.mxu0 0
        %1140 = vmatpush2.bf16.msra.mxu0 %v914
        %1141 = vmatprep.subr.bf16.mxu0 0
        %1142 = vmatpush2.bf16.msra.mxu0 %v913
        %1143 = vmatprep.subr.bf16.mxu0 0
        %1144 = vmatpush2.bf16.msra.mxu0 %v912
        %1145 = vmatprep.mubr.bf16.mxu0 %v635
        %1146 = vmatmul.mubr.bf16.gmra.mxu0 %v634
        %v1147 = vpop.f32.mrf.mxu0
        %v1148 = vadd.f32 %v987, %v1147
        %v1149 = vpop.f32.mrf.mxu0
        %v1150 = vpop.f32.mrf.mxu0
        %v1151 = vadd.f32 %v990, %v1150
        %v1152 = vpop.f32.mrf.mxu0
        %1153 = vmatprep.mubr.bf16.mxu0 %v639
        %1154 = vmatmul.mubr.bf16.gmra.mxu0 %v638
        %v1155 = vpop.f32.mrf.mxu0
        %v1156 = vadd.f32 %v995, %v1155
        %v1157 = vpop.f32.mrf.mxu0
        %v1158 = vpop.f32.mrf.mxu0
        %v1159 = vadd.f32 %v998, %v1158
        %v1160 = vpop.f32.mrf.mxu0
        %1161 = vmatprep.mubr.bf16.mxu0 %v643
        %1162 = vmatmul.mubr.bf16.gmra.mxu0 %v642
        %v1163 = vpop.f32.mrf.mxu0
        %v1164 = vadd.f32 %v1003, %v1163
        %v1165 = vpop.f32.mrf.mxu0
        %v1166 = vpop.f32.mrf.mxu0
        %v1167 = vadd.f32 %v1006, %v1166
        %v1168 = vpop.f32.mrf.mxu0
        %1169 = vmatprep.mubr.bf16.mxu0 %v647
        %1170 = vmatmul.mubr.bf16.gmra.mxu0 %v646
        %v1171 = vpop.f32.mrf.mxu0
        %v1172 = vadd.f32 %v1011, %v1171
        %v1173 = vpop.f32.mrf.mxu0
        %v1174 = vpop.f32.mrf.mxu0
        %v1175 = vadd.f32 %v1014, %v1174
        %v1176 = vpop.f32.mrf.mxu0
        %1177 = vmatprep.mubr.bf16.mxu0 %v651
        %1178 = vmatmul.mubr.bf16.gmra.mxu0 %v650
        %v1179 = vpop.f32.mrf.mxu0
        %v1180 = vadd.f32 %v1019, %v1179
        %v1181 = vpop.f32.mrf.mxu0
        %v1182 = vpop.f32.mrf.mxu0
        %v1183 = vadd.f32 %v1022, %v1182
        %v1184 = vpop.f32.mrf.mxu0
        %1185 = vmatprep.mubr.bf16.mxu0 %v655
        %1186 = vmatmul.mubr.bf16.gmra.mxu0 %v654
        %v1187 = vpop.f32.mrf.mxu0
        %v1188 = vadd.f32 %v1027, %v1187
        %v1189 = vpop.f32.mrf.mxu0
        %v1190 = vpop.f32.mrf.mxu0
        %v1191 = vadd.f32 %v1030, %v1190
        %v1192 = vpop.f32.mrf.mxu0
        %1193 = vmatprep.mubr.bf16.mxu0 %v659
        %1194 = vmatmul.mubr.bf16.gmra.mxu0 %v658
        %v1195 = vpop.f32.mrf.mxu0
        %v1196 = vadd.f32 %v1035, %v1195
        %v1197 = vpop.f32.mrf.mxu0
        %v1198 = vpop.f32.mrf.mxu0
        %v1199 = vadd.f32 %v1038, %v1198
        %v1200 = vpop.f32.mrf.mxu0
        %1201 = vmatprep.mubr.bf16.mxu0 %v663
        %1202 = vmatmul.mubr.bf16.gmra.mxu0 %v662
        %v1203 = vpop.f32.mrf.mxu0
        %v1204 = vadd.f32 %v1043, %v1203
        %v1205 = vpop.f32.mrf.mxu0
        %v1206 = vpop.f32.mrf.mxu0
        %v1207 = vadd.f32 %v1046, %v1206
        %v1208 = vpop.f32.mrf.mxu0
        %1209 = vmatprep.mubr.bf16.mxu0 %v667
        %1210 = vmatmul.mubr.bf16.gmra.mxu0 %v666
        %v1211 = vpop.f32.mrf.mxu0
        %v1212 = vadd.f32 %v1051, %v1211
        %v1213 = vpop.f32.mrf.mxu0
        %v1214 = vpop.f32.mrf.mxu0
        %v1215 = vadd.f32 %v1054, %v1214
        %v1216 = vpop.f32.mrf.mxu0
        %1217 = vmatprep.mubr.bf16.mxu0 %v671
        %1218 = vmatmul.mubr.bf16.gmra.mxu0 %v670
        %v1219 = vpop.f32.mrf.mxu0
        %v1220 = vadd.f32 %v1059, %v1219
        %v1221 = vpop.f32.mrf.mxu0
        %v1222 = vpop.f32.mrf.mxu0
        %v1223 = vadd.f32 %v1062, %v1222
        %v1224 = vpop.f32.mrf.mxu0
        %1225 = vmatprep.mubr.bf16.mxu0 %v675
        %1226 = vmatmul.mubr.bf16.gmra.mxu0 %v674
        %v1227 = vpop.f32.mrf.mxu0
        %v1228 = vadd.f32 %v1067, %v1227
        %v1229 = vpop.f32.mrf.mxu0
        %v1230 = vpop.f32.mrf.mxu0
        %v1231 = vadd.f32 %v1070, %v1230
        %v1232 = vpop.f32.mrf.mxu0
        %1233 = vmatprep.mubr.bf16.mxu0 %v679
        %1234 = vmatmul.mubr.bf16.gmra.mxu0 %v678
        %v1235 = vpop.f32.mrf.mxu0
        %v1236 = vadd.f32 %v1075, %v1235
        %v1237 = vpop.f32.mrf.mxu0
        %v1238 = vpop.f32.mrf.mxu0
        %v1239 = vadd.f32 %v1078, %v1238
        %v1240 = vpop.f32.mrf.mxu0
        %1241 = vmatprep.mubr.bf16.mxu0 %v683
        %1242 = vmatmul.mubr.bf16.gmra.mxu0 %v682
        %v1243 = vpop.f32.mrf.mxu0
        %v1244 = vadd.f32 %v1083, %v1243
        %v1245 = vpop.f32.mrf.mxu0
        %v1246 = vpop.f32.mrf.mxu0
        %v1247 = vadd.f32 %v1086, %v1246
        %v1248 = vpop.f32.mrf.mxu0
        %1249 = vmatprep.mubr.bf16.mxu0 %v687
        %1250 = vmatmul.mubr.bf16.gmra.mxu0 %v686
        %v1251 = vpop.f32.mrf.mxu0
        %v1252 = vadd.f32 %v1091, %v1251
        %v1253 = vpop.f32.mrf.mxu0
        %v1254 = vpop.f32.mrf.mxu0
        %v1255 = vadd.f32 %v1094, %v1254
        %v1256 = vpop.f32.mrf.mxu0
        %1257 = vmatprep.mubr.bf16.mxu0 %v691
        %1258 = vmatmul.mubr.bf16.gmra.mxu0 %v690
        %v1259 = vpop.f32.mrf.mxu0
        %v1260 = vadd.f32 %v1099, %v1259
        %v1261 = vpop.f32.mrf.mxu0
        %v1262 = vpop.f32.mrf.mxu0
        %v1263 = vadd.f32 %v1102, %v1262
        %v1264 = vpop.f32.mrf.mxu0
        %1265 = vmatprep.mubr.bf16.mxu0 %v695
        %1266 = vmatmul.mubr.bf16.gmra.mxu0 %v694
        %v1267 = vpop.f32.mrf.mxu0
        %v1268 = vadd.f32 %v1107, %v1267
        %v1269 = vpop.f32.mrf.mxu0
        %v1270 = vpop.f32.mrf.mxu0
        %v1271 = vadd.f32 %v1110, %v1270
        %v1272 = vpop.f32.mrf.mxu0
        %1273 = vdwg.mxu0
        %v1274 = vadd.f32 %v276, %v1148
        %v1275 = vadd.f32 %v277, %v1151
        %v1276 = vadd.f32 %v278, %v1156
        %v1277 = vadd.f32 %v279, %v1159
        %v1278 = vadd.f32 %v280, %v1164
        %v1279 = vadd.f32 %v281, %v1167
        %v1280 = vadd.f32 %v282, %v1172
        %v1281 = vadd.f32 %v283, %v1175
        %v1282 = vadd.f32 %v284, %v1180
        %v1283 = vadd.f32 %v285, %v1183
        %v1284 = vadd.f32 %v286, %v1188
        %v1285 = vadd.f32 %v287, %v1191
        %v1286 = vadd.f32 %v288, %v1196
        %v1287 = vadd.f32 %v289, %v1199
        %v1288 = vadd.f32 %v290, %v1204
        %v1289 = vadd.f32 %v291, %v1207
        %v1290 = vadd.f32 %v292, %v1212
        %v1291 = vadd.f32 %v293, %v1215
        %v1292 = vadd.f32 %v294, %v1220
        %v1293 = vadd.f32 %v295, %v1223
        %v1294 = vadd.f32 %v296, %v1228
        %v1295 = vadd.f32 %v297, %v1231
        %v1296 = vadd.f32 %v298, %v1236
        %v1297 = vadd.f32 %v299, %v1239
        %v1298 = vadd.f32 %v300, %v1244
        %v1299 = vadd.f32 %v301, %v1247
        %v1300 = vadd.f32 %v302, %v1252
        %v1301 = vadd.f32 %v303, %v1255
        %v1302 = vadd.f32 %v304, %v1260
        %v1303 = vadd.f32 %v305, %v1263
        %v1304 = vadd.f32 %v306, %v1268
        %v1305 = vadd.f32 %v307, %v1271
        %1306 = vst [vmem:[#allocation2] sm:$0xff] %v1274
        %1307 = vst [vmem:[#allocation2 + $0x8] sm:$0xff] %v1275
        %1308 = vst [vmem:[#allocation2 + $0x10] sm:$0xff] %v1276
        %1309 = vst [vmem:[#allocation2 + $0x18] sm:$0xff] %v1277
        %1310 = vst [vmem:[#allocation2 + $0x20] sm:$0xff] %v1278
        %1311 = vst [vmem:[#allocation2 + $0x28] sm:$0xff] %v1279
        %1312 = vst [vmem:[#allocation2 + $0x30] sm:$0xff] %v1280
        %1313 = vst [vmem:[#allocation2 + $0x38] sm:$0xff] %v1281
        %1314 = vst [vmem:[#allocation2 + $0x40] sm:$0xff] %v1282
        %1315 = vst [vmem:[#allocation2 + $0x48] sm:$0xff] %v1283
        %1316 = vst [vmem:[#allocation2 + $0x50] sm:$0xff] %v1284
        %1317 = vst [vmem:[#allocation2 + $0x58] sm:$0xff] %v1285
        %1318 = vst [vmem:[#allocation2 + $0x60] sm:$0xff] %v1286
        %1319 = vst [vmem:[#allocation2 + $0x68] sm:$0xff] %v1287
        %1320 = vst [vmem:[#allocation2 + $0x70] sm:$0xff] %v1288
        %1321 = vst [vmem:[#allocation2 + $0x78] sm:$0xff] %v1289
        %1322 = vst [vmem:[#allocation2 + $0x80] sm:$0xff] %v1290
        %1323 = vst [vmem:[#allocation2 + $0x88] sm:$0xff] %v1291
        %1324 = vst [vmem:[#allocation2 + $0x90] sm:$0xff] %v1292
        %1325 = vst [vmem:[#allocation2 + $0x98] sm:$0xff] %v1293
        %1326 = vst [vmem:[#allocation2 + $0xa0] sm:$0xff] %v1294
        %1327 = vst [vmem:[#allocation2 + $0xa8] sm:$0xff] %v1295
        %1328 = vst [vmem:[#allocation2 + $0xb0] sm:$0xff] %v1296
        %1329 = vst [vmem:[#allocation2 + $0xb8] sm:$0xff] %v1297
        %1330 = vst [vmem:[#allocation2 + $0xc0] sm:$0xff] %v1298
        %1331 = vst [vmem:[#allocation2 + $0xc8] sm:$0xff] %v1299
        %1332 = vst [vmem:[#allocation2 + $0xd0] sm:$0xff] %v1300
        %1333 = vst [vmem:[#allocation2 + $0xd8] sm:$0xff] %v1301
        %1334 = vst [vmem:[#allocation2 + $0xe0] sm:$0xff] %v1302
        %1335 = vst [vmem:[#allocation2 + $0xe8] sm:$0xff] %v1303
        %1336 = vst [vmem:[#allocation2 + $0xf0] sm:$0xff] %v1304
        %1337 = vst [vmem:[#allocation2 + $0xf8] sm:$0xff] %v1305
        // Predicated region
        $region45: #{vs_forward.4} parent=35 // pred_check
          %p1338 = pneg %p239
        $region46: #{vs_forward.4} parent=35 // pred_check_branch
          %1340 = sbr.rel (%p1338) target = $region48
        $region47: #{vs_forward.4} parent=35 // pred_region
          %v1341 = vld [vmem:[#allocation2] sm:$0xff]
          %v1342 = vld [vmem:[#allocation2 + $0x8] sm:$0xff]
          %v1343 = vld [vmem:[#allocation2 + $0x10] sm:$0xff]
          %v1344 = vld [vmem:[#allocation2 + $0x18] sm:$0xff]
          %v1345 = vld [vmem:[#allocation2 + $0x20] sm:$0xff]
          %v1346 = vld [vmem:[#allocation2 + $0x28] sm:$0xff]
          %v1347 = vld [vmem:[#allocation2 + $0x30] sm:$0xff]
          %v1348 = vld [vmem:[#allocation2 + $0x38] sm:$0xff]
          %v1349 = vld [vmem:[#allocation2 + $0x40] sm:$0xff]
          %v1350 = vld [vmem:[#allocation2 + $0x48] sm:$0xff]
          %v1351 = vld [vmem:[#allocation2 + $0x50] sm:$0xff]
          %v1352 = vld [vmem:[#allocation2 + $0x58] sm:$0xff]
          %v1353 = vld [vmem:[#allocation2 + $0x60] sm:$0xff]
          %v1354 = vld [vmem:[#allocation2 + $0x68] sm:$0xff]
          %v1355 = vld [vmem:[#allocation2 + $0x70] sm:$0xff]
          %v1356 = vld [vmem:[#allocation2 + $0x78] sm:$0xff]
          %v1357 = vld [vmem:[#allocation2 + $0x80] sm:$0xff]
          %v1358 = vld [vmem:[#allocation2 + $0x88] sm:$0xff]
          %v1359 = vld [vmem:[#allocation2 + $0x90] sm:$0xff]
          %v1360 = vld [vmem:[#allocation2 + $0x98] sm:$0xff]
          %v1361 = vld [vmem:[#allocation2 + $0xa0] sm:$0xff]
          %v1362 = vld [vmem:[#allocation2 + $0xa8] sm:$0xff]
          %v1363 = vld [vmem:[#allocation2 + $0xb0] sm:$0xff]
          %v1364 = vld [vmem:[#allocation2 + $0xb8] sm:$0xff]
          %v1365 = vld [vmem:[#allocation2 + $0xc0] sm:$0xff]
          %v1366 = vld [vmem:[#allocation2 + $0xc8] sm:$0xff]
          %v1367 = vld [vmem:[#allocation2 + $0xd0] sm:$0xff]
          %v1368 = vld [vmem:[#allocation2 + $0xd8] sm:$0xff]
          %v1369 = vld [vmem:[#allocation2 + $0xe0] sm:$0xff]
          %v1370 = vld [vmem:[#allocation2 + $0xe8] sm:$0xff]
          %v1371 = vld [vmem:[#allocation2 + $0xf0] sm:$0xff]
          %v1372 = vld [vmem:[#allocation2 + $0xf8] sm:$0xff]
          %v1373 = vld [vmem:[%s2] sm:$0x1]
          %v1375 = vlaneseq
          %v1376 = vshrl.u32 %v1375, 7
          %v1377 = vsub.s32 0, %v1376
          %v1378 = vrot.slane %v1373, %v1377
          %v1380 = vadd.f32 %v1341, %v1378
          %v1381 = vadd.f32 %v1342, %v1378
          %v1382 = vadd.f32 %v1343, %v1378
          %v1383 = vadd.f32 %v1344, %v1378
          %v1384 = vadd.f32 %v1345, %v1378
          %v1385 = vadd.f32 %v1346, %v1378
          %v1386 = vadd.f32 %v1347, %v1378
          %v1387 = vadd.f32 %v1348, %v1378
          %v1388 = vadd.f32 %v1349, %v1378
          %v1389 = vadd.f32 %v1350, %v1378
          %v1390 = vadd.f32 %v1351, %v1378
          %v1391 = vadd.f32 %v1352, %v1378
          %v1392 = vadd.f32 %v1353, %v1378
          %v1393 = vadd.f32 %v1354, %v1378
          %v1394 = vadd.f32 %v1355, %v1378
          %v1395 = vadd.f32 %v1356, %v1378
          %v1396 = vadd.f32 %v1357, %v1378
          %v1397 = vadd.f32 %v1358, %v1378
          %v1398 = vadd.f32 %v1359, %v1378
          %v1399 = vadd.f32 %v1360, %v1378
          %v1400 = vadd.f32 %v1361, %v1378
          %v1401 = vadd.f32 %v1362, %v1378
          %v1402 = vadd.f32 %v1363, %v1378
          %v1403 = vadd.f32 %v1364, %v1378
          %v1404 = vadd.f32 %v1365, %v1378
          %v1405 = vadd.f32 %v1366, %v1378
          %v1406 = vadd.f32 %v1367, %v1378
          %v1407 = vadd.f32 %v1368, %v1378
          %v1408 = vadd.f32 %v1369, %v1378
          %v1409 = vadd.f32 %v1370, %v1378
          %v1410 = vadd.f32 %v1371, %v1378
          %v1411 = vadd.f32 %v1372, %v1378
          %v1412 = vmax.f32 %v1380, 0.0
          %v1413 = vmax.f32 %v1381, 0.0
          %v1414 = vmax.f32 %v1382, 0.0
          %v1415 = vmax.f32 %v1383, 0.0
          %v1416 = vmax.f32 %v1384, 0.0
          %v1417 = vmax.f32 %v1385, 0.0
          %v1418 = vmax.f32 %v1386, 0.0
          %v1419 = vmax.f32 %v1387, 0.0
          %v1420 = vmax.f32 %v1388, 0.0
          %v1421 = vmax.f32 %v1389, 0.0
          %v1422 = vmax.f32 %v1390, 0.0
          %v1423 = vmax.f32 %v1391, 0.0
          %v1424 = vmax.f32 %v1392, 0.0
          %v1425 = vmax.f32 %v1393, 0.0
          %v1426 = vmax.f32 %v1394, 0.0
          %v1427 = vmax.f32 %v1395, 0.0
          %v1428 = vmax.f32 %v1396, 0.0
          %v1429 = vmax.f32 %v1397, 0.0
          %v1430 = vmax.f32 %v1398, 0.0
          %v1431 = vmax.f32 %v1399, 0.0
          %v1432 = vmax.f32 %v1400, 0.0
          %v1433 = vmax.f32 %v1401, 0.0
          %v1434 = vmax.f32 %v1402, 0.0
          %v1435 = vmax.f32 %v1403, 0.0
          %v1436 = vmax.f32 %v1404, 0.0
          %v1437 = vmax.f32 %v1405, 0.0
          %v1438 = vmax.f32 %v1406, 0.0
          %v1439 = vmax.f32 %v1407, 0.0
          %v1440 = vmax.f32 %v1408, 0.0
          %v1441 = vmax.f32 %v1409, 0.0
          %v1442 = vmax.f32 %v1410, 0.0
          %v1443 = vmax.f32 %v1411, 0.0
          %v1444 = vpack.c.bf16 %v1413, %v1412
          %v1445 = vpack.c.bf16 %v1415, %v1414
          %v1446 = vpack.c.bf16 %v1417, %v1416
          %v1447 = vpack.c.bf16 %v1419, %v1418
          %v1448 = vpack.c.bf16 %v1421, %v1420
          %v1449 = vpack.c.bf16 %v1423, %v1422
          %v1450 = vpack.c.bf16 %v1425, %v1424
          %v1451 = vpack.c.bf16 %v1427, %v1426
          %v1452 = vpack.c.bf16 %v1429, %v1428
          %v1453 = vpack.c.bf16 %v1431, %v1430
          %v1454 = vpack.c.bf16 %v1433, %v1432
          %v1455 = vpack.c.bf16 %v1435, %v1434
          %v1456 = vpack.c.bf16 %v1437, %v1436
          %v1457 = vpack.c.bf16 %v1439, %v1438
          %v1458 = vpack.c.bf16 %v1441, %v1440
          %v1459 = vpack.c.bf16 %v1443, %v1442
          %v1460 = vld [vmem:[%s3] sm:$0xf]
          %v1461 = vld [vmem:[%s3 + $0x4] sm:$0xf]
          %v1462 = vld [vmem:[%s3 + $0x8] sm:$0xf]
          %v1463 = vld [vmem:[%s3 + $0xc] sm:$0xf]
          %v1464 = vld [vmem:[%s3 + $0x10] sm:$0xf]
          %v1465 = vld [vmem:[%s3 + $0x14] sm:$0xf]
          %v1466 = vld [vmem:[%s3 + $0x18] sm:$0xf]
          %v1467 = vld [vmem:[%s3 + $0x1c] sm:$0xf]
          %v1468 = vld [vmem:[%s3 + $0x20] sm:$0xf]
          %v1469 = vld [vmem:[%s3 + $0x24] sm:$0xf]
          %v1470 = vld [vmem:[%s3 + $0x28] sm:$0xf]
          %v1471 = vld [vmem:[%s3 + $0x2c] sm:$0xf]
          %v1472 = vld [vmem:[%s3 + $0x30] sm:$0xf]
          %v1473 = vld [vmem:[%s3 + $0x34] sm:$0xf]
          %v1474 = vld [vmem:[%s3 + $0x38] sm:$0xf]
          %v1475 = vld [vmem:[%s3 + $0x3c] sm:$0xf]
          %v1492 = vunpack.c.l.b16 %v1460
          %v1493 = vunpack.c.l.b16 %v1461
          %v1494 = vunpack.c.l.b16 %v1462
          %v1495 = vunpack.c.l.b16 %v1463
          %v1496 = vunpack.c.l.b16 %v1464
          %v1497 = vunpack.c.l.b16 %v1465
          %v1498 = vunpack.c.l.b16 %v1466
          %v1499 = vunpack.c.l.b16 %v1467
          %v1500 = vunpack.c.l.b16 %v1468
          %v1501 = vunpack.c.l.b16 %v1469
          %v1502 = vunpack.c.l.b16 %v1470
          %v1503 = vunpack.c.l.b16 %v1471
          %v1504 = vunpack.c.l.b16 %v1472
          %v1505 = vunpack.c.l.b16 %v1473
          %v1506 = vunpack.c.l.b16 %v1474
          %v1507 = vunpack.c.l.b16 %v1475
          %v1508 = vpack.c.b16 %v1493, %v1492
          %v1509 = vpack.c.b16 %v1495, %v1494
          %v1510 = vpack.c.b16 %v1497, %v1496
          %v1511 = vpack.c.b16 %v1499, %v1498
          %v1512 = vpack.c.b16 %v1501, %v1500
          %v1513 = vpack.c.b16 %v1503, %v1502
          %v1514 = vpack.c.b16 %v1505, %v1504
          %v1515 = vpack.c.b16 %v1507, %v1506
          %1524 = vmatprep.subr.bf16.mxu0 0
          %1525 = vmatpush1.bf16.msra.mxu0 %v1515
          %1526 = vmatprep.subr.bf16.mxu0 0
          %1527 = vmatpush1.bf16.msra.mxu0 %v1514
          %1528 = vmatprep.subr.bf16.mxu0 0
          %1529 = vmatpush1.bf16.msra.mxu0 %v1513
          %1530 = vmatprep.subr.bf16.mxu0 0
          %1531 = vmatpush1.bf16.msra.mxu0 %v1512
          %1532 = vmatprep.subr.bf16.mxu0 0
          %1533 = vmatpush1.bf16.msra.mxu0 %v1511
          %1534 = vmatprep.subr.bf16.mxu0 0
          %1535 = vmatpush1.bf16.msra.mxu0 %v1510
          %1536 = vmatprep.subr.bf16.mxu0 0
          %1537 = vmatpush1.bf16.msra.mxu0 %v1509
          %1538 = vmatprep.subr.bf16.mxu0 0
          %1539 = vmatpush1.bf16.msra.mxu0 %v1508
          %1540 = vmatprep.subr.bf16.mxu0 0
          %1541 = vmatpush2.bf16.msra.mxu0 0
          %1542 = vmatprep.subr.bf16.mxu0 0
          %1543 = vmatpush2.bf16.msra.mxu0 0
          %1544 = vmatprep.subr.bf16.mxu0 0
          %1545 = vmatpush2.bf16.msra.mxu0 0
          %1546 = vmatprep.subr.bf16.mxu0 0
          %1547 = vmatpush2.bf16.msra.mxu0 0
          %1548 = vmatprep.subr.bf16.mxu0 0
          %1549 = vmatpush2.bf16.msra.mxu0 0
          %1550 = vmatprep.subr.bf16.mxu0 0
          %1551 = vmatpush2.bf16.msra.mxu0 0
          %1552 = vmatprep.subr.bf16.mxu0 0
          %1553 = vmatpush2.bf16.msra.mxu0 0
          %1554 = vmatprep.subr.bf16.mxu0 0
          %1555 = vmatpush2.bf16.msra.mxu0 0
          %1556 = vmatprep.mubr.bf16.mxu0 0
          %1557 = vmatmul.mubr.bf16.gmra.mxu0 %v1444
          %v1558 = vpop.f32.mrf.mxu0
          %v1559 = vadd.f32 0.0, %v1558
          %v1560 = vpop.f32.mrf.mxu0
          %v1561 = vpop.f32.mrf.mxu0
          %v1562 = vadd.f32 0.0, %v1561
          %v1563 = vpop.f32.mrf.mxu0
          %1564 = vmatprep.mubr.bf16.mxu0 0
          %1565 = vmatmul.mubr.bf16.gmra.mxu0 %v1445
          %v1566 = vpop.f32.mrf.mxu0
          %v1567 = vadd.f32 0.0, %v1566
          %v1568 = vpop.f32.mrf.mxu0
          %v1569 = vpop.f32.mrf.mxu0
          %v1570 = vadd.f32 0.0, %v1569
          %v1571 = vpop.f32.mrf.mxu0
          %1572 = vmatprep.mubr.bf16.mxu0 0
          %1573 = vmatmul.mubr.bf16.gmra.mxu0 %v1446
          %v1574 = vpop.f32.mrf.mxu0
          %v1575 = vadd.f32 0.0, %v1574
          %v1576 = vpop.f32.mrf.mxu0
          %v1577 = vpop.f32.mrf.mxu0
          %v1578 = vadd.f32 0.0, %v1577
          %v1579 = vpop.f32.mrf.mxu0
          %1580 = vmatprep.mubr.bf16.mxu0 0
          %1581 = vmatmul.mubr.bf16.gmra.mxu0 %v1447
          %v1582 = vpop.f32.mrf.mxu0
          %v1583 = vadd.f32 0.0, %v1582
          %v1584 = vpop.f32.mrf.mxu0
          %v1585 = vpop.f32.mrf.mxu0
          %v1586 = vadd.f32 0.0, %v1585
          %v1587 = vpop.f32.mrf.mxu0
          %1588 = vmatprep.mubr.bf16.mxu0 0
          %1589 = vmatmul.mubr.bf16.gmra.mxu0 %v1448
          %v1590 = vpop.f32.mrf.mxu0
          %v1591 = vadd.f32 0.0, %v1590
          %v1592 = vpop.f32.mrf.mxu0
          %v1593 = vpop.f32.mrf.mxu0
          %v1594 = vadd.f32 0.0, %v1593
          %v1595 = vpop.f32.mrf.mxu0
          %1596 = vmatprep.mubr.bf16.mxu0 0
          %1597 = vmatmul.mubr.bf16.gmra.mxu0 %v1449
          %v1598 = vpop.f32.mrf.mxu0
          %v1599 = vadd.f32 0.0, %v1598
          %v1600 = vpop.f32.mrf.mxu0
          %v1601 = vpop.f32.mrf.mxu0
          %v1602 = vadd.f32 0.0, %v1601
          %v1603 = vpop.f32.mrf.mxu0
          %1604 = vmatprep.mubr.bf16.mxu0 0
          %1605 = vmatmul.mubr.bf16.gmra.mxu0 %v1450
          %v1606 = vpop.f32.mrf.mxu0
          %v1607 = vadd.f32 0.0, %v1606
          %v1608 = vpop.f32.mrf.mxu0
          %v1609 = vpop.f32.mrf.mxu0
          %v1610 = vadd.f32 0.0, %v1609
          %v1611 = vpop.f32.mrf.mxu0
          %1612 = vmatprep.mubr.bf16.mxu0 0
          %1613 = vmatmul.mubr.bf16.gmra.mxu0 %v1451
          %v1614 = vpop.f32.mrf.mxu0
          %v1615 = vadd.f32 0.0, %v1614
          %v1616 = vpop.f32.mrf.mxu0
          %v1617 = vpop.f32.mrf.mxu0
          %v1618 = vadd.f32 0.0, %v1617
          %v1619 = vpop.f32.mrf.mxu0
          %1620 = vmatprep.mubr.bf16.mxu0 0
          %1621 = vmatmul.mubr.bf16.gmra.mxu0 %v1452
          %v1622 = vpop.f32.mrf.mxu0
          %v1623 = vadd.f32 0.0, %v1622
          %v1624 = vpop.f32.mrf.mxu0
          %v1625 = vpop.f32.mrf.mxu0
          %v1626 = vadd.f32 0.0, %v1625
          %v1627 = vpop.f32.mrf.mxu0
          %1628 = vmatprep.mubr.bf16.mxu0 0
          %1629 = vmatmul.mubr.bf16.gmra.mxu0 %v1453
          %v1630 = vpop.f32.mrf.mxu0
          %v1631 = vadd.f32 0.0, %v1630
          %v1632 = vpop.f32.mrf.mxu0
          %v1633 = vpop.f32.mrf.mxu0
          %v1634 = vadd.f32 0.0, %v1633
          %v1635 = vpop.f32.mrf.mxu0
          %1636 = vmatprep.mubr.bf16.mxu0 0
          %1637 = vmatmul.mubr.bf16.gmra.mxu0 %v1454
          %v1638 = vpop.f32.mrf.mxu0
          %v1639 = vadd.f32 0.0, %v1638
          %v1640 = vpop.f32.mrf.mxu0
          %v1641 = vpop.f32.mrf.mxu0
          %v1642 = vadd.f32 0.0, %v1641
          %v1643 = vpop.f32.mrf.mxu0
          %1644 = vmatprep.mubr.bf16.mxu0 0
          %1645 = vmatmul.mubr.bf16.gmra.mxu0 %v1455
          %v1646 = vpop.f32.mrf.mxu0
          %v1647 = vadd.f32 0.0, %v1646
          %v1648 = vpop.f32.mrf.mxu0
          %v1649 = vpop.f32.mrf.mxu0
          %v1650 = vadd.f32 0.0, %v1649
          %v1651 = vpop.f32.mrf.mxu0
          %1652 = vmatprep.mubr.bf16.mxu0 0
          %1653 = vmatmul.mubr.bf16.gmra.mxu0 %v1456
          %v1654 = vpop.f32.mrf.mxu0
          %v1655 = vadd.f32 0.0, %v1654
          %v1656 = vpop.f32.mrf.mxu0
          %v1657 = vpop.f32.mrf.mxu0
          %v1658 = vadd.f32 0.0, %v1657
          %v1659 = vpop.f32.mrf.mxu0
          %1660 = vmatprep.mubr.bf16.mxu0 0
          %1661 = vmatmul.mubr.bf16.gmra.mxu0 %v1457
          %v1662 = vpop.f32.mrf.mxu0
          %v1663 = vadd.f32 0.0, %v1662
          %v1664 = vpop.f32.mrf.mxu0
          %v1665 = vpop.f32.mrf.mxu0
          %v1666 = vadd.f32 0.0, %v1665
          %v1667 = vpop.f32.mrf.mxu0
          %1668 = vmatprep.mubr.bf16.mxu0 0
          %1669 = vmatmul.mubr.bf16.gmra.mxu0 %v1458
          %v1670 = vpop.f32.mrf.mxu0
          %v1671 = vadd.f32 0.0, %v1670
          %v1672 = vpop.f32.mrf.mxu0
          %v1673 = vpop.f32.mrf.mxu0
          %v1674 = vadd.f32 0.0, %v1673
          %v1675 = vpop.f32.mrf.mxu0
          %1676 = vmatprep.mubr.bf16.mxu0 0
          %1677 = vmatmul.mubr.bf16.gmra.mxu0 %v1459
          %v1678 = vpop.f32.mrf.mxu0
          %v1679 = vadd.f32 0.0, %v1678
          %v1680 = vpop.f32.mrf.mxu0
          %v1681 = vpop.f32.mrf.mxu0
          %v1682 = vadd.f32 0.0, %v1681
          %v1683 = vpop.f32.mrf.mxu0
          %1684 = vdwg.mxu0
          %v1685 = vpack.c.bf16 %v1562, %v1559
          %v1686 = vpack.c.bf16 %v1570, %v1567
          %v1687 = vpack.c.bf16 %v1578, %v1575
          %v1688 = vpack.c.bf16 %v1586, %v1583
          %v1689 = vpack.c.bf16 %v1594, %v1591
          %v1690 = vpack.c.bf16 %v1602, %v1599
          %v1691 = vpack.c.bf16 %v1610, %v1607
          %v1692 = vpack.c.bf16 %v1618, %v1615
          %v1693 = vpack.c.bf16 %v1626, %v1623
          %v1694 = vpack.c.bf16 %v1634, %v1631
          %v1695 = vpack.c.bf16 %v1642, %v1639
          %v1696 = vpack.c.bf16 %v1650, %v1647
          %v1697 = vpack.c.bf16 %v1658, %v1655
          %v1698 = vpack.c.bf16 %v1666, %v1663
          %v1699 = vpack.c.bf16 %v1674, %v1671
          %v1700 = vpack.c.bf16 %v1682, %v1679
          %v1717 = vunpack.c.l.b16 %v1685
          %v1718 = vunpack.c.h.b16 %v1685
          %v1719 = vunpack.c.l.b16 %v1686
          %v1720 = vunpack.c.h.b16 %v1686
          %v1721 = vunpack.c.l.b16 %v1687
          %v1722 = vunpack.c.h.b16 %v1687
          %v1723 = vunpack.c.l.b16 %v1688
          %v1724 = vunpack.c.h.b16 %v1688
          %v1725 = vunpack.c.l.b16 %v1689
          %v1726 = vunpack.c.h.b16 %v1689
          %v1727 = vunpack.c.l.b16 %v1690
          %v1728 = vunpack.c.h.b16 %v1690
          %v1729 = vunpack.c.l.b16 %v1691
          %v1730 = vunpack.c.h.b16 %v1691
          %v1731 = vunpack.c.l.b16 %v1692
          %v1732 = vunpack.c.h.b16 %v1692
          %v1733 = vunpack.c.l.b16 %v1693
          %v1734 = vunpack.c.h.b16 %v1693
          %v1735 = vunpack.c.l.b16 %v1694
          %v1736 = vunpack.c.h.b16 %v1694
          %v1737 = vunpack.c.l.b16 %v1695
          %v1738 = vunpack.c.h.b16 %v1695
          %v1739 = vunpack.c.l.b16 %v1696
          %v1740 = vunpack.c.h.b16 %v1696
          %v1741 = vunpack.c.l.b16 %v1697
          %v1742 = vunpack.c.h.b16 %v1697
          %v1743 = vunpack.c.l.b16 %v1698
          %v1744 = vunpack.c.h.b16 %v1698
          %v1745 = vunpack.c.l.b16 %v1699
          %v1746 = vunpack.c.h.b16 %v1699
          %v1747 = vunpack.c.l.b16 %v1700
          %v1748 = vunpack.c.h.b16 %v1700
          %v1749 = vpack.c.b16 %v1717, %v1717
          %v1750 = vpack.c.b16 %v1718, %v1718
          %v1751 = vpack.c.b16 %v1719, %v1719
          %v1752 = vpack.c.b16 %v1720, %v1720
          %v1753 = vpack.c.b16 %v1721, %v1721
          %v1754 = vpack.c.b16 %v1722, %v1722
          %v1755 = vpack.c.b16 %v1723, %v1723
          %v1756 = vpack.c.b16 %v1724, %v1724
          %v1757 = vpack.c.b16 %v1725, %v1725
          %v1758 = vpack.c.b16 %v1726, %v1726
          %v1759 = vpack.c.b16 %v1727, %v1727
          %v1760 = vpack.c.b16 %v1728, %v1728
          %v1761 = vpack.c.b16 %v1729, %v1729
          %v1762 = vpack.c.b16 %v1730, %v1730
          %v1763 = vpack.c.b16 %v1731, %v1731
          %v1764 = vpack.c.b16 %v1732, %v1732
          %v1765 = vpack.c.b16 %v1733, %v1733
          %v1766 = vpack.c.b16 %v1734, %v1734
          %v1767 = vpack.c.b16 %v1735, %v1735
          %v1768 = vpack.c.b16 %v1736, %v1736
          %v1769 = vpack.c.b16 %v1737, %v1737
          %v1770 = vpack.c.b16 %v1738, %v1738
          %v1771 = vpack.c.b16 %v1739, %v1739
          %v1772 = vpack.c.b16 %v1740, %v1740
          %v1773 = vpack.c.b16 %v1741, %v1741
          %v1774 = vpack.c.b16 %v1742, %v1742
          %v1775 = vpack.c.b16 %v1743, %v1743
          %v1776 = vpack.c.b16 %v1744, %v1744
          %v1777 = vpack.c.b16 %v1745, %v1745
          %v1778 = vpack.c.b16 %v1746, %v1746
          %v1779 = vpack.c.b16 %v1747, %v1747
          %v1780 = vpack.c.b16 %v1748, %v1748
          %1813 = vst [vmem:[%s236] sm:$0xf] %v1749
          %1814 = vst [vmem:[%s236 + $0x4] sm:$0xf] %v1750
          %1815 = vst [vmem:[%s236 + $0x8] sm:$0xf] %v1751
          %1816 = vst [vmem:[%s236 + $0xc] sm:$0xf] %v1752
          %1817 = vst [vmem:[%s236 + $0x10] sm:$0xf] %v1753
          %1818 = vst [vmem:[%s236 + $0x14] sm:$0xf] %v1754
          %1819 = vst [vmem:[%s236 + $0x18] sm:$0xf] %v1755
          %1820 = vst [vmem:[%s236 + $0x1c] sm:$0xf] %v1756
          %1821 = vst [vmem:[%s236 + $0x20] sm:$0xf] %v1757
          %1822 = vst [vmem:[%s236 + $0x24] sm:$0xf] %v1758
          %1823 = vst [vmem:[%s236 + $0x28] sm:$0xf] %v1759
          %1824 = vst [vmem:[%s236 + $0x2c] sm:$0xf] %v1760
          %1825 = vst [vmem:[%s236 + $0x30] sm:$0xf] %v1761
          %1826 = vst [vmem:[%s236 + $0x34] sm:$0xf] %v1762
          %1827 = vst [vmem:[%s236 + $0x38] sm:$0xf] %v1763
          %1828 = vst [vmem:[%s236 + $0x3c] sm:$0xf] %v1764
          %1829 = vst [vmem:[%s236 + $0x40] sm:$0xf] %v1765
          %1830 = vst [vmem:[%s236 + $0x44] sm:$0xf] %v1766
          %1831 = vst [vmem:[%s236 + $0x48] sm:$0xf] %v1767
          %1832 = vst [vmem:[%s236 + $0x4c] sm:$0xf] %v1768
          %1833 = vst [vmem:[%s236 + $0x50] sm:$0xf] %v1769
          %1834 = vst [vmem:[%s236 + $0x54] sm:$0xf] %v1770
          %1835 = vst [vmem:[%s236 + $0x58] sm:$0xf] %v1771
          %1836 = vst [vmem:[%s236 + $0x5c] sm:$0xf] %v1772
          %1837 = vst [vmem:[%s236 + $0x60] sm:$0xf] %v1773
          %1838 = vst [vmem:[%s236 + $0x64] sm:$0xf] %v1774
          %1839 = vst [vmem:[%s236 + $0x68] sm:$0xf] %v1775
          %1840 = vst [vmem:[%s236 + $0x6c] sm:$0xf] %v1776
          %1841 = vst [vmem:[%s236 + $0x70] sm:$0xf] %v1777
          %1842 = vst [vmem:[%s236 + $0x74] sm:$0xf] %v1778
          %1843 = vst [vmem:[%s236 + $0x78] sm:$0xf] %v1779
          %1844 = vst [vmem:[%s236 + $0x7c] sm:$0xf] %v1780
        $region48: #{vs_forward.4} parent=35 // pred_fallthru
          _
        %s1845 = smul.u32 32, %s22
        %p1846 = scmp.lt.s32.totalorder %s1845, 63
        %s1847 = scalar_select %p1846, %s1845, 63
        %s1848 = smul.addr %s1847, 4
        %s1849 = scalar_lea.vmem %s4, %s1848
        // Predicated region
        $region49: #{vs_forward.4} parent=35 // pred_check
          %p1850 = pneg %p139
        $region50: #{vs_forward.4} parent=35 // pred_check_branch
          %1852 = sbr.rel (%p1850) target = $region52
        $region51: #{vs_forward.4} parent=35 // pred_region
          %s1853 = smul.u32 32, %s22
        $region52: #{vs_forward.4} parent=35 // pred_fallthru
          _
      $region36: #{vs_forward.4} parent=5 // pred_fallthru
        _
      %p1854 = scmp.le.s32.totalorder 2, %s13
      // Predicated region
      $region53: #{vs_forward.4} parent=5 // pred_check
        %p1855 = pneg %p1854
      $region54: #{vs_forward.4} parent=5 // pred_check_branch
        %1857 = sbr.rel (%p1855) target = $region56
      $region55: #{vs_forward.4} parent=5 // pred_region
        %s1858 = ssub.s32 %s13, 2
        // Predicated region
        $region57: #{vs_forward.4} parent=55 // pred_check
          %p1859 = pneg %p145
        $region58: #{vs_forward.4} parent=55 // pred_check_branch
          %1861 = sbr.rel (%p1859) target = $region60
        $region59: #{vs_forward.4} parent=55 // pred_region
          %s1862 = smul.u32 32, %s24
          %p1863 = scmp.lt.s32.totalorder %s1862, 63
          %s1864 = scalar_select %p1863, %s1862, 63
          %s1865 = smul.addr %s1864, 4
          %s1866 = scalar_lea.vmem %s4, %s1865
        $region60: #{vs_forward.4} parent=55 // pred_fallthru
          _
      $region56: #{vs_forward.4} parent=5 // pred_fallthru
        _
    $region6: #{vs_forward.4} parent=1 // loop_footer
      %s17 = sadd.s32 1, %s13
    $region7: #{vs_forward.4} parent=1 // loop_footer_branch
      %12 = sbr.rel target = $region3
    $region8: #{vs_forward.4} parent=1 // loop_exit
      _
    %1867 = vsyncpa [#allocation4], 1
    %s1868 = scalar_lea.sflag [#allocation4], 1
    %1869 = vsyncpa %s1868, 1

</llo_original>
